<compile_context>
chip_gen: v7x
topology: tpu7x:2x2x1
jax: 0.10.0
libtpu: 0.0.40
codegen_flags: <defaults>
</compile_context>

<pallas_src>
import jax
import jax.numpy as jnp
from jax.experimental import pallas as pl
from jax.experimental.pallas import tpu as pltpu

K0 = 1.0
CANON_DM_PRT_ITER = 10  # kept for parity with the torch module (unused by surrogate)

_CP = pltpu.CompilerParams(dimension_semantics=("parallel",))


def _pick_tb(nmol, cap=16):
    """Molecules per grid block.  Must satisfy the sublane constraint for the
    2-D lane-dense BlockSpecs (TB % 8 == 0 or TB == nmol); prefer >= 2 blocks
    when nmol is large so both v7x TensorCores get work.  cap=16 keeps the
    double-buffered working set well inside v7x's 64 MiB VMEM."""
    if nmol <= 8:
        return nmol
    best = None
    for t in range(8, min(cap, nmol // 2) + 1, 8):
        if nmol % t == 0:
            best = t
    return best if best is not None else nmol


# ---------------------------------------------------------------------------
# Kernel 1: XL-BOMD electronic (shadow) energy + dDS = K0*(D - P)
#   elec_energy_xl(D,P,F,Hcore):  Eelec = sum( D*Hcore + 0.5*(2D-P)*(F-Hcore) )
# Lane-dense on flattened (TB, N*N) views; per-molecule reduction on the lane axis.
# ---------------------------------------------------------------------------
def _eelec_dds_kernel(d_ref, p_ref, f_ref, h_ref, e_ref, dds_ref):
    D = d_ref[...]
    P = p_ref[...]
    F = f_ref[...]
    H = h_ref[...]
    e_ref[...] = jnp.sum(D * H + 0.5 * (2.0 * D - P) * (F - H),
                         axis=-1, keepdims=True)
    dds_ref[...] = K0 * (D - P)


def eelec_and_dds(D, P, F, Hcore, tb):
    nmol, N, _ = D.shape
    NN = N * N
    flat = lambda x: x.reshape(nmol, NN)
    vec_spec = pl.BlockSpec((tb, NN), lambda b: (b, 0))
    scal_spec = pl.BlockSpec((tb, 1), lambda b: (b, 0))
    e, dds = pl.pallas_call(
        _eelec_dds_kernel,
        grid=(nmol // tb,),
        in_specs=[vec_spec] * 4,
        out_specs=(scal_spec, vec_spec),
        out_shape=(jax.ShapeDtypeStruct((nmol, 1), D.dtype),
                   jax.ShapeDtypeStruct((nmol, NN), D.dtype)),
        compiler_params=_CP,
    )(flat(D), flat(P), flat(F), flat(Hcore))
    return e[:, 0], dds


# ---------------------------------------------------------------------------
# Kernel 2: modified Gram-Schmidt step (trace inner product) + Fro normalization
#   v = dW;  for j<k: v -= sum(v^T ⊙ V_j) V_j;  v /= ||v||_F
# sum(v^T ⊙ V_j) == sum(v ⊙ V_j^T): pre-transposed V_j^T are passed as separate
# refs, so no in-kernel XLU transposes and no stack builds; rsqrt goes to the EUP.
# ---------------------------------------------------------------------------
def _make_gs_kernel(k):
    def kernel(*refs):
        dw_ref = refs[0]
        v_refs = refs[1:1 + k]
        vt_refs = refs[1 + k:1 + 2 * k]
        out_ref = refs[1 + 2 * k]
        v = dw_ref[...]
        for j in range(k):                                 # static, k <= max_rank-1
            proj = jnp.sum(v * vt_refs[j][...], axis=-1, keepdims=True)
            v = v - proj * v_refs[j][...]
        nrm2 = jnp.sum(v * v, axis=-1, keepdims=True)      # Krylov-breakdown clamp
        out_ref[...] = v * jax.lax.rsqrt(jnp.maximum(nrm2, 1e-30))
    return kernel


def gram_schmidt_step(dW_flat, Vprev, VTprev, tb):
    k = len(Vprev)
    nmol, NN = dW_flat.shape
    vec_spec = pl.BlockSpec((tb, NN), lambda b: (b, 0))
    return pl.pallas_call(
        _make_gs_kernel(k),
        grid=(nmol // tb,),
        in_specs=[vec_spec] * (1 + 2 * k),
        out_specs=vec_spec,
        out_shape=jax.ShapeDtypeStruct((nmol, NN), dW_flat.dtype),
        compiler_params=_CP,
    )(dW_flat, *Vprev, *VTprev)


# ---------------------------------------------------------------------------
# Kernel 3 (fused per rank iteration, R = k+1 <= max_rank), incremental Gram:
#   new row:   O[R-1,J] = sum(W_{R-1}^T ⊙ W_J) = sum(wkT ⊙ W_J)
#   new rhs:   c[R-1]   = sum(W_{R-1}^T ⊙ dDS) = sum(wkT ⊙ dDS)
#   (old O/c entries carried in tiny per-molecule arrays, never recomputed)
#   coef   = O^{-1} c             (tiny in-kernel Gauss-Jordan solve)
#   Error  = ||sum_I coef_I W_I - dDS||_F / ||dDS||_F
#   dP2dt2 = -sum_I coef_I V_I
# Single pass over the W/V histories; no (R,R,N,N) intermediate, no W^T reads,
# no IdentRes HBM round-trip.
# ---------------------------------------------------------------------------
def _solve_spd(O, c, R):
    """Gauss-Jordan solve of the per-molecule RxR trace-Gram system.
    O: list-of-lists of (TB,1) arrays, c: list of (TB,1) arrays."""
    A = [[O[i][j] for j in range(R)] for i in range(R)]
    x = list(c)
    for p in range(R):
        piv = 1.0 / A[p][p]
        for j in range(p + 1, R):
            A[p][j] = A[p][j] * piv
        x[p] = x[p] * piv
        for i in range(R):
            if i == p:
                continue
            f = A[i][p]
            for j in range(p + 1, R):
                A[i][j] = A[i][j] - f * A[p][j]
            x[i] = x[i] - f * x[p]
    return x


def _make_rank_kernel(R, maxR):
    def kernel(*refs):
        wkT_ref, dds_ref, o_prev_ref, c_prev_ref = refs[0:4]
        w_refs = refs[4:4 + R]
        v_refs = refs[4 + R:4 + 2 * R]
        err_ref, dp2_ref, o_new_ref, c_new_ref = refs[4 + 2 * R:4 + 2 * R + 4]

        wkT = wkT_ref[...]                                  # (TB, NN)
        dds = dds_ref[...]
        W = [w_refs[i][...] for i in range(R)]

        # Only the NEW Gram row / rhs entry need full (TB, NN) reductions.
        new_row = [jnp.sum(wkT * W[j], axis=-1, keepdims=True) for j in range(R)]
        c_last = jnp.sum(wkT * dds, axis=-1, keepdims=True)

        # Carry forward previously computed entries, append new row / column.
        o_new_ref[...] = o_prev_ref[...]
        c_new_ref[...] = c_prev_ref[...]
        for j in range(R):
            base_r = (R - 1) * maxR + j
            base_c = j * maxR + (R - 1)
            o_new_ref[:, base_r:base_r + 1] = new_row[j]
            o_new_ref[:, base_c:base_c + 1] = new_row[j]
        c_new_ref[:, R - 1:R] = c_last

        # Assemble the R x R system from carried scalars + the new row.
        O = [[None] * R for _ in range(R)]
        for i in range(R - 1):
            for j in range(R - 1):
                idx = i * maxR + j
                O[i][j] = o_prev_ref[:, idx:idx + 1]
        for j in range(R):
            O[R - 1][j] = new_row[j]
            O[j][R - 1] = new_row[j]
        c = [c_prev_ref[:, i:i + 1] for i in range(R - 1)] + [c_last]
        coef = _solve_spd(O, c, R)                          # R x (TB,1)

        ident = coef[0] * W[0]
        dp2 = coef[0] * v_refs[0][...]
        for i in range(1, R):
            ident = ident + coef[i] * W[i]
            dp2 = dp2 + coef[i] * v_refs[i][...]
        resid = ident - dds
        num = jnp.sum(resid * resid, axis=-1, keepdims=True)
        den = jnp.sum(dds * dds, axis=-1, keepdims=True)
        err_ref[...] = jnp.sqrt(num) * jax.lax.rsqrt(den)
        dp2_ref[...] = -dp2
    return kernel


def rank_update(wkT, dDS_flat, O_carry, c_carry, Wl, Vl, max_rank, tb):
    R = len(Wl)
    nmol, NN = dDS_flat.shape
    dtype = dDS_flat.dtype
    vec_spec = pl.BlockSpec((tb, NN), lambda b: (b, 0))
    scal_spec = pl.BlockSpec((tb, 1), lambda b: (b, 0))
    osq_spec = pl.BlockSpec((tb, max_rank * max_rank), lambda b: (b, 0))
    cv_spec = pl.BlockSpec((tb, max_rank), lambda b: (b, 0))
    err, dp2, O_new, c_new = pl.pallas_call(
        _make_rank_kernel(R, max_rank),
        grid=(nmol // tb,),
        in_specs=[vec_spec, vec_spec, osq_spec, cv_spec] + [vec_spec] * (2 * R),
        out_specs=(scal_spec, vec_spec, osq_spec, cv_spec),
        out_shape=(jax.ShapeDtypeStruct((nmol, 1), dtype),
                   jax.ShapeDtypeStruct((nmol, NN), dtype),
                   jax.ShapeDtypeStruct((nmol, max_rank * max_rank), dtype),
                   jax.ShapeDtypeStruct((nmol, max_rank), dtype)),
        compiler_params=_CP,
    )(wkT, dDS_flat, O_carry, c_carry, *Wl, *Vl)
    return err[:, 0], dp2, O_new, c_new


# ---------------------------------------------------------------------------
# Driver replicating the `max_rank` branch of EnergyXL.forward.
# The rank loop is unrolled at trace time; the reference's early-exit
# (while max(Error) > err_threshold) is kept ON DEVICE via lax.cond, so there is
# no device->host sync between iterations.
# ---------------------------------------------------------------------------
def energy_xl_forward(D, P, F, Hcore, response_fn, max_rank=3,
                      err_threshold=1e-9, tb=None):
    nmol, N, _ = D.shape
    NN = N * N
    dtype = D.dtype
    if tb is None:
        tb = _pick_tb(nmol)

    Eelec, dDS_flat = eelec_and_dds(D, P, F, Hcore, tb)

    def t_flat(x_flat):   # XLA glue: transpose of a flattened (nmol, N*N) matrix
        return jnp.swapaxes(x_flat.reshape(nmol, N, N), 1, 2).reshape(nmol, NN)

    Vlist, VTlist, Wlist = [], [], []
    Error = jnp.full((nmol,), 10.0, dtype)
    dP2dt2_flat = jnp.zeros((nmol, NN), dtype)
    O_carry = jnp.zeros((nmol, max_rank * max_rank), dtype)
    c_carry = jnp.zeros((nmol, max_rank), dtype)
    dW = dDS_flat

    for k in range(max_rank):
        prevV, prevVT, prevW = list(Vlist), list(VTlist), list(Wlist)

        def _active(carry, prevV=prevV, prevVT=prevVT, prevW=prevW):
            dW_c, _, _, O_c, c_c = carry
            vk = gram_schmidt_step(dW_c, prevV, prevVT, tb)
            vkT = t_flat(vk)
            # TODO(synk): real path is FO1 = G(nmol, molsize, d_D, M, ...) followed
            # by PO1 = Canon_DM_PRT(FO1, Temp, ..., CANON_DM_PRT_ITER, ...); those
            # are PYSEQM library internals not given in the module source.
            PO1 = response_fn(vk.reshape(nmol, N, N)).reshape(nmol, NN)
            wk = K0 * (PO1 - vk)
            wkT = t_flat(wk)
            err, dp2, O_n, c_n = rank_update(
                wkT, dDS_flat, O_c, c_c, prevW + [wk], prevV + [vk],
                max_rank, tb)
            return vk, vkT, wk, wk, err, dp2, O_n, c_n

        def _skip(carry):
            dW_c, err_c, dp2_c, O_c, c_c = carry
            z = jnp.zeros((nmol, NN), dtype)
            return z, z, z, dW_c, err_c, dp2_c, O_c, c_c

        vk, vkT, wk, dW, Error, dP2dt2_flat, O_carry, c_carry = jax.lax.cond(
            jnp.max(Error) > err_threshold, _active, _skip,
            (dW, Error, dP2dt2_flat, O_carry, c_carry))

        Vlist.append(vk)
        VTlist.append(vkT)
        Wlist.append(wk)

    return Eelec, dP2dt2_flat.reshape(nmol, N, N), Error


# ---------------------------------------------------------------------------
# Pure-JAX reference mirroring the torch loop (used only for validation).
# ---------------------------------------------------------------------------
def _reference_forward(D, P, F, Hcore, response_fn, max_rank, err_threshold):
    hp = jax.lax.Precision.HIGHEST
    nmol, N, _ = D.shape
    Eelec = jnp.sum(D * Hcore + 0.5 * (2.0 * D - P) * (F - Hcore), axis=(1, 2))
    dDS = K0 * (D - P)
    V = jnp.zeros((nmol, max_rank, N, N), D.dtype)
    W = jnp.zeros_like(V)
    dW = dDS
    k = -1
    Error = jnp.full((nmol,), 10.0, D.dtype)
    coef = None
    Rank_m = 0
    while k < max_rank - 1 and float(jnp.max(Error)) > err_threshold:
        k += 1
        vk = dW
        for j in range(k):
            proj = jnp.sum(jnp.swapaxes(vk, 1, 2) * V[:, j], axis=(1, 2))
            vk = vk - proj[:, None, None] * V[:, j]
        vk = vk / jnp.sqrt(jnp.sum(vk * vk, axis=(1, 2)))[:, None, None]
        V = V.at[:, k].set(vk)
        PO1 = response_fn(vk)
        W = W.at[:, k].set(K0 * (PO1 - vk))
        dW = W[:, k]
        Rank_m = k + 1
        Wk = W[:, :Rank_m]
        O = jnp.einsum("bIji,bJij->bIJ", Wk, Wk, precision=hp)
        c = jnp.einsum("bJji,bij->bJ", Wk, dDS, precision=hp)
        MM = jnp.linalg.inv(O)
        coef = jnp.einsum("bIJ,bJ->bI", MM, c, precision=hp)
        IdentRes = jnp.einsum("bI,bIij->bij", coef, Wk, precision=hp)
        Error = (jnp.sqrt(jnp.sum((IdentRes - dDS) ** 2, axis=(1, 2)))
                 / jnp.sqrt(jnp.sum(dDS ** 2, axis=(1, 2))))
    dP2dt2 = -jnp.einsum("bI,bIij->bij", coef, V[:, :Rank_m], precision=hp)
    return Eelec, dP2dt2, Error


if __name__ == "__main__":
    key = jax.random.PRNGKey(0)
    nmol, molsize = 2, 8
    N = 4 * molsize
    dtype = jnp.float32
    k1, k2, k3, k4, k5 = jax.random.split(key, 5)

    # M: per atom-pair 4x4 AO blocks, as produced by hcore(); Hcore assembly is
    # the same reshape/transpose/reshape glue as in the torch forward.
    M = 0.1 * jax.random.normal(k1, (nmol * molsize * molsize, 4, 4), dtype)
    Hcore = M.reshape(nmol, molsize, molsize, 4, 4)
    Hcore = jnp.swapaxes(Hcore, 2, 3).reshape(nmol, N, N)
    Hcore = 0.5 * (Hcore + jnp.swapaxes(Hcore, 1, 2))

    def sym(kk, scale):
        a = scale * jax.random.normal(kk, (nmol, N, N), dtype)
        return 0.5 * (a + jnp.swapaxes(a, 1, 2))

    P = sym(k2, 0.2)            # dynamics field tensor (XL-BOMD auxiliary density)
    D = P + sym(k3, 0.05)       # TODO(synk): real D comes from Fermi_Q(F, T_el, ...)
    F = Hcore + sym(k4, 0.1)    # TODO(synk): real F comes from fock(...)
    S = sym(k5, 0.3)

    def response_fn(d_D):
        # TODO(synk): surrogate symmetric linear response standing in for
        # Canon_DM_PRT(G(d_D), ...) so the Krylov kernels can be exercised.
        return 0.3 * d_D + 0.1 * jnp.einsum(
            "bij,bjk,bkl->bil", S, d_D, S, precision=jax.lax.Precision.HIGHEST)

    fwd = jax.jit(lambda D, P, F, Hcore: energy_xl_forward(
        D, P, F, Hcore, response_fn, max_rank=3, err_threshold=1e-9))
    Eelec, dP2dt2, Error = fwd(D, P, F, Hcore)
    jax.block_until_ready((Eelec, dP2dt2, Error))

    Eelec_r, dP2_r, Err_r = _reference_forward(
        D, P, F, Hcore, response_fn, 3, 1e-9)

    assert Eelec.shape == (nmol,)
    assert dP2dt2.shape == (nmol, N, N)
    assert Error.shape == (nmol,)
    assert bool(jnp.all(jnp.isfinite(Eelec)))
    assert bool(jnp.all(jnp.isfinite(dP2dt2)))
    assert bool(jnp.all(jnp.isfinite(Error)))
    assert bool(jnp.allclose(Eelec, Eelec_r, rtol=5e-3, atol=1e-4))
    assert bool(jnp.allclose(Error, Err_r, rtol=5e-3, atol=5e-4))
    assert bool(jnp.allclose(dP2dt2, dP2_r, rtol=5e-3, atol=5e-4))
    print("KERNEL_OK")
</pallas_src>

<mosaic_0001>
module attributes {stable_mosaic.version = 11 : i64} {
  func.func @_eelec_dds_kernel(%arg0: i32, %arg1: memref<2x1024xf32, #tpu.memory_space<vmem>>, %arg2: memref<2x1024xf32, #tpu.memory_space<vmem>>, %arg3: memref<2x1024xf32, #tpu.memory_space<vmem>>, %arg4: memref<2x1024xf32, #tpu.memory_space<vmem>>, %arg5: memref<2x1xf32, #tpu.memory_space<vmem>>, %arg6: memref<2x1024xf32, #tpu.memory_space<vmem>>) attributes {dimension_semantics = [#tpu.dimension_semantics<parallel>], iteration_bounds = array<i64: 1>, scalar_prefetch = 0 : i64, scratch_operands = 0 : i64, tpu.core_type = #tpu.core_type<tc>, window_params = [{transform_indices = @transform_0, window_bounds = array<i64: 2, 1024>}, {transform_indices = @transform_1, window_bounds = array<i64: 2, 1024>}, {transform_indices = @transform_2, window_bounds = array<i64: 2, 1024>}, {transform_indices = @transform_3, window_bounds = array<i64: 2, 1024>}, {transform_indices = @transform_4, window_bounds = array<i64: 2, 1>}, {transform_indices = @transform_5, window_bounds = array<i64: 2, 1024>}]} {
    %c0 = arith.constant 0 : index
    %c0_0 = arith.constant 0 : index
    %0 = vector.load %arg1[%c0, %c0_0] : memref<2x1024xf32, #tpu.memory_space<vmem>>, vector<2x1024xf32>
    %c0_1 = arith.constant 0 : index
    %c0_2 = arith.constant 0 : index
    %1 = vector.load %arg2[%c0_1, %c0_2] : memref<2x1024xf32, #tpu.memory_space<vmem>>, vector<2x1024xf32>
    %c0_3 = arith.constant 0 : index
    %c0_4 = arith.constant 0 : index
    %2 = vector.load %arg3[%c0_3, %c0_4] : memref<2x1024xf32, #tpu.memory_space<vmem>>, vector<2x1024xf32>
    %c0_5 = arith.constant 0 : index
    %c0_6 = arith.constant 0 : index
    %3 = vector.load %arg4[%c0_5, %c0_6] : memref<2x1024xf32, #tpu.memory_space<vmem>>, vector<2x1024xf32>
    %4 = arith.mulf %0, %3 : vector<2x1024xf32>
    %cst = arith.constant 2.000000e+00 : f32
    %5 = vector.broadcast %cst : f32 to vector<2x1024xf32>
    %6 = arith.mulf %5, %0 : vector<2x1024xf32>
    %7 = arith.subf %6, %1 : vector<2x1024xf32>
    %cst_7 = arith.constant 5.000000e-01 : f32
    %8 = vector.broadcast %cst_7 : f32 to vector<2x1024xf32>
    %9 = arith.mulf %8, %7 : vector<2x1024xf32>
    %10 = arith.subf %2, %3 : vector<2x1024xf32>
    %11 = arith.mulf %9, %10 : vector<2x1024xf32>
    %12 = arith.addf %4, %11 : vector<2x1024xf32>
    %cst_8 = arith.constant dense<0.000000e+00> : vector<2xf32>
    %13 = vector.multi_reduction <add>, %12, %cst_8 [1] : vector<2x1024xf32> to vector<2xf32>
    %14 = vector.shape_cast %13 : vector<2xf32> to vector<2x1xf32>
    %c0_9 = arith.constant 0 : index
    %c0_10 = arith.constant 0 : index
    %15 = vector.load %arg5[%c0_9, %c0_10] : memref<2x1xf32, #tpu.memory_space<vmem>>, vector<2x1xf32>
    tpu.vector_store %arg5[%c0_9, %c0_10], %14 {strides = array<i32>} : memref<2x1xf32, #tpu.memory_space<vmem>>, vector<2x1xf32>,
    %16 = arith.subf %0, %1 : vector<2x1024xf32>
    %cst_11 = arith.constant 1.000000e+00 : f32
    %17 = vector.broadcast %cst_11 : f32 to vector<2x1024xf32>
    %18 = arith.mulf %17, %16 : vector<2x1024xf32>
    %c0_12 = arith.constant 0 : index
    %c0_13 = arith.constant 0 : index
    %19 = vector.load %arg6[%c0_12, %c0_13] : memref<2x1024xf32, #tpu.memory_space<vmem>>, vector<2x1024xf32>
    tpu.vector_store %arg6[%c0_12, %c0_13], %18 {strides = array<i32>} : memref<2x1024xf32, #tpu.memory_space<vmem>>, vector<2x1024xf32>,
    return
  }
  func.func @transform_0(%arg0: i32) -> (i32, i32) {
    %c0_i32 = arith.constant 0 : i32
    %c0_i32_0 = arith.constant 0 : i32
    return %arg0, %c0_i32 : i32, i32
  }
  func.func @transform_1(%arg0: i32) -> (i32, i32) {
    %c0_i32 = arith.constant 0 : i32
    %c0_i32_0 = arith.constant 0 : i32
    return %arg0, %c0_i32 : i32, i32
  }
  func.func @transform_2(%arg0: i32) -> (i32, i32) {
    %c0_i32 = arith.constant 0 : i32
    %c0_i32_0 = arith.constant 0 : i32
    return %arg0, %c0_i32 : i32, i32
  }
  func.func @transform_3(%arg0: i32) -> (i32, i32) {
    %c0_i32 = arith.constant 0 : i32
    %c0_i32_0 = arith.constant 0 : i32
    return %arg0, %c0_i32 : i32, i32
  }
  func.func @transform_4(%arg0: i32) -> (i32, i32) {
    %c0_i32 = arith.constant 0 : i32
    %c0_i32_0 = arith.constant 0 : i32
    return %arg0, %c0_i32 : i32, i32
  }
  func.func @transform_5(%arg0: i32) -> (i32, i32) {
    %c0_i32 = arith.constant 0 : i32
    %c0_i32_0 = arith.constant 0 : i32
    return %arg0, %c0_i32 : i32, i32
  }
}

module attributes {stable_mosaic.version = 11 : i64} {
  func.func @kernel(%arg0: i32, %arg1: memref<2x1024xf32, #tpu.memory_space<vmem>>, %arg2: memref<2x1024xf32, #tpu.memory_space<vmem>>) attributes {dimension_semantics = [#tpu.dimension_semantics<parallel>], iteration_bounds = array<i64: 1>, scalar_prefetch = 0 : i64, scratch_operands = 0 : i64, tpu.core_type = #tpu.core_type<tc>, window_params = [{transform_indices = @transform_0, window_bounds = array<i64: 2, 1024>}, {transform_indices = @transform_1, window_bounds = array<i64: 2, 1024>}]} {
    %c0 = arith.constant 0 : index
    %c0_0 = arith.constant 0 : index
    %0 = vector.load %arg1[%c0, %c0_0] : memref<2x1024xf32, #tpu.memory_space<vmem>>, vector<2x1024xf32>
    %1 = arith.mulf %0, %0 : vector<2x1024xf32>
    %cst = arith.constant dense<0.000000e+00> : vector<2xf32>
    %2 = vector.multi_reduction <add>, %1, %cst [1] : vector<2x1024xf32> to vector<2xf32>
    %3 = vector.shape_cast %2 : vector<2xf32> to vector<2x1xf32>
    %cst_1 = arith.constant 1.000000e-30 : f32
    %4 = vector.broadcast %cst_1 : f32 to vector<2x1xf32>
    %5 = arith.maximumf %3, %4 : vector<2x1xf32>
    %6 = math.rsqrt %5 : vector<2x1xf32>
    %7 = vector.broadcast %6 : vector<2x1xf32> to vector<2x1024xf32>
    %8 = arith.mulf %0, %7 : vector<2x1024xf32>
    %c0_2 = arith.constant 0 : index
    %c0_3 = arith.constant 0 : index
    %9 = vector.load %arg2[%c0_2, %c0_3] : memref<2x1024xf32, #tpu.memory_space<vmem>>, vector<2x1024xf32>
    tpu.vector_store %arg2[%c0_2, %c0_3], %8 {strides = array<i32>} : memref<2x1024xf32, #tpu.memory_space<vmem>>, vector<2x1024xf32>,
    return
  }
  func.func @transform_0(%arg0: i32) -> (i32, i32) {
    %c0_i32 = arith.constant 0 : i32
    %c0_i32_0 = arith.constant 0 : i32
    return %arg0, %c0_i32 : i32, i32
  }
  func.func @transform_1(%arg0: i32) -> (i32, i32) {
    %c0_i32 = arith.constant 0 : i32
    %c0_i32_0 = arith.constant 0 : i32
    return %arg0, %c0_i32 : i32, i32
  }
}

module attributes {stable_mosaic.version = 11 : i64} {
  func.func @kernel(%arg0: i32, %arg1: memref<2x1024xf32, #tpu.memory_space<vmem>>, %arg2: memref<2x1024xf32, #tpu.memory_space<vmem>>, %arg3: memref<2x9xf32, #tpu.memory_space<vmem>>, %arg4: memref<2x3xf32, #tpu.memory_space<vmem>>, %arg5: memref<2x1024xf32, #tpu.memory_space<vmem>>, %arg6: memref<2x1024xf32, #tpu.memory_space<vmem>>, %arg7: memref<2x1xf32, #tpu.memory_space<vmem>>, %arg8: memref<2x1024xf32, #tpu.memory_space<vmem>>, %arg9: memref<2x9xf32, #tpu.memory_space<vmem>>, %arg10: memref<2x3xf32, #tpu.memory_space<vmem>>) attributes {dimension_semantics = [#tpu.dimension_semantics<parallel>], iteration_bounds = array<i64: 1>, scalar_prefetch = 0 : i64, scratch_operands = 0 : i64, tpu.core_type = #tpu.core_type<tc>, window_params = [{transform_indices = @transform_0, window_bounds = array<i64: 2, 1024>}, {transform_indices = @transform_1, window_bounds = array<i64: 2, 1024>}, {transform_indices = @transform_2, window_bounds = array<i64: 2, 9>}, {transform_indices = @transform_3, window_bounds = array<i64: 2, 3>}, {transform_indices = @transform_4, window_bounds = array<i64: 2, 1024>}, {transform_indices = @transform_5, window_bounds = array<i64: 2, 1024>}, {transform_indices = @transform_6, window_bounds = array<i64: 2, 1>}, {transform_indices = @transform_7, window_bounds = array<i64: 2, 1024>}, {transform_indices = @transform_8, window_bounds = array<i64: 2, 9>}, {transform_indices = @transform_9, window_bounds = array<i64: 2, 3>}]} {
    %c0 = arith.constant 0 : index
    %c0_0 = arith.constant 0 : index
    %0 = vector.load %arg1[%c0, %c0_0] : memref<2x1024xf32, #tpu.memory_space<vmem>>, vector<2x1024xf32>
    %c0_1 = arith.constant 0 : index
    %c0_2 = arith.constant 0 : index
    %1 = vector.load %arg2[%c0_1, %c0_2] : memref<2x1024xf32, #tpu.memory_space<vmem>>, vector<2x1024xf32>
    %c0_3 = arith.constant 0 : index
    %c0_4 = arith.constant 0 : index
    %2 = vector.load %arg5[%c0_3, %c0_4] : memref<2x1024xf32, #tpu.memory_space<vmem>>, vector<2x1024xf32>
    %3 = arith.mulf %0, %2 : vector<2x1024xf32>
    %cst = arith.constant dense<0.000000e+00> : vector<2xf32>
    %4 = vector.multi_reduction <add>, %3, %cst [1] : vector<2x1024xf32> to vector<2xf32>
    %5 = vector.shape_cast %4 : vector<2xf32> to vector<2x1xf32>
    %6 = arith.mulf %0, %1 : vector<2x1024xf32>
    %cst_5 = arith.constant dense<0.000000e+00> : vector<2xf32>
    %7 = vector.multi_reduction <add>, %6, %cst_5 [1] : vector<2x1024xf32> to vector<2xf32>
    %8 = vector.shape_cast %7 : vector<2xf32> to vector<2x1xf32>
    %c0_6 = arith.constant 0 : index
    %c0_7 = arith.constant 0 : index
    %9 = vector.load %arg3[%c0_6, %c0_7] : memref<2x9xf32, #tpu.memory_space<vmem>>, vector<2x9xf32>
    %c0_8 = arith.constant 0 : index
    %c0_9 = arith.constant 0 : index
    %10 = vector.load %arg9[%c0_8, %c0_9] : memref<2x9xf32, #tpu.memory_space<vmem>>, vector<2x9xf32>
    tpu.vector_store %arg9[%c0_8, %c0_9], %9 {strides = array<i32>} : memref<2x9xf32, #tpu.memory_space<vmem>>, vector<2x9xf32>,
    %c0_10 = arith.constant 0 : index
    %c0_11 = arith.constant 0 : index
    %11 = vector.load %arg4[%c0_10, %c0_11] : memref<2x3xf32, #tpu.memory_space<vmem>>, vector<2x3xf32>
    %c0_12 = arith.constant 0 : index
    %c0_13 = arith.constant 0 : index
    %12 = vector.load %arg10[%c0_12, %c0_13] : memref<2x3xf32, #tpu.memory_space<vmem>>, vector<2x3xf32>
    tpu.vector_store %arg10[%c0_12, %c0_13], %11 {strides = array<i32>} : memref<2x3xf32, #tpu.memory_space<vmem>>, vector<2x3xf32>,
    %c0_14 = arith.constant 0 : index
    %c0_15 = arith.constant 0 : index
    %13 = vector.load %arg9[%c0_14, %c0_15] : memref<2x9xf32, #tpu.memory_space<vmem>>, vector<2x1xf32>
    tpu.vector_store %arg9[%c0_14, %c0_15], %5 {strides = array<i32>} : memref<2x9xf32, #tpu.memory_space<vmem>>, vector<2x1xf32>,
    %c0_16 = arith.constant 0 : index
    %c0_17 = arith.constant 0 : index
    %14 = vector.load %arg9[%c0_16, %c0_17] : memref<2x9xf32, #tpu.memory_space<vmem>>, vector<2x1xf32>
    tpu.vector_store %arg9[%c0_16, %c0_17], %5 {strides = array<i32>} : memref<2x9xf32, #tpu.memory_space<vmem>>, vector<2x1xf32>,
    %c0_18 = arith.constant 0 : index
    %c0_19 = arith.constant 0 : index
    %15 = vector.load %arg10[%c0_18, %c0_19] : memref<2x3xf32, #tpu.memory_space<vmem>>, vector<2x1xf32>
    tpu.vector_store %arg10[%c0_18, %c0_19], %8 {strides = array<i32>} : memref<2x3xf32, #tpu.memory_space<vmem>>, vector<2x1xf32>,
    %cst_20 = arith.constant 1.000000e+00 : f32
    %16 = vector.broadcast %cst_20 : f32 to vector<2x1xf32>
    %17 = arith.divf %16, %5 : vector<2x1xf32>
    %18 = arith.mulf %8, %17 : vector<2x1xf32>
    %19 = vector.broadcast %18 : vector<2x1xf32> to vector<2x1024xf32>
    %20 = arith.mulf %19, %2 : vector<2x1024xf32>
    %c0_21 = arith.constant 0 : index
    %c0_22 = arith.constant 0 : index
    %21 = vector.load %arg6[%c0_21, %c0_22] : memref<2x1024xf32, #tpu.memory_space<vmem>>, vector<2x1024xf32>
    %22 = vector.broadcast %18 : vector<2x1xf32> to vector<2x1024xf32>
    %23 = arith.mulf %22, %21 : vector<2x1024xf32>
    %24 = arith.subf %20, %1 : vector<2x1024xf32>
    %25 = arith.mulf %24, %24 : vector<2x1024xf32>
    %cst_23 = arith.constant dense<0.000000e+00> : vector<2xf32>
    %26 = vector.multi_reduction <add>, %25, %cst_23 [1] : vector<2x1024xf32> to vector<2xf32>
    %27 = vector.shape_cast %26 : vector<2xf32> to vector<2x1xf32>
    %28 = arith.mulf %1, %1 : vector<2x1024xf32>
    %cst_24 = arith.constant dense<0.000000e+00> : vector<2xf32>
    %29 = vector.multi_reduction <add>, %28, %cst_24 [1] : vector<2x1024xf32> to vector<2xf32>
    %30 = vector.shape_cast %29 : vector<2xf32> to vector<2x1xf32>
    %31 = math.sqrt %27 : vector<2x1xf32>
    %32 = math.rsqrt %30 : vector<2x1xf32>
    %33 = arith.mulf %31, %32 : vector<2x1xf32>
    %c0_25 = arith.constant 0 : index
    %c0_26 = arith.constant 0 : index
    %34 = vector.load %arg7[%c0_25, %c0_26] : memref<2x1xf32, #tpu.memory_space<vmem>>, vector<2x1xf32>
    tpu.vector_store %arg7[%c0_25, %c0_26], %33 {strides = array<i32>} : memref<2x1xf32, #tpu.memory_space<vmem>>, vector<2x1xf32>,
    %cst_27 = arith.constant 0.000000e+00 : f32
    %35 = vector.broadcast %cst_27 : f32 to vector<2x1024xf32>
    %36 = arith.subf %35, %23 : vector<2x1024xf32>
    %c0_28 = arith.constant 0 : index
    %c0_29 = arith.constant 0 : index
    %37 = vector.load %arg8[%c0_28, %c0_29] : memref<2x1024xf32, #tpu.memory_space<vmem>>, vector<2x1024xf32>
    tpu.vector_store %arg8[%c0_28, %c0_29], %36 {strides = array<i32>} : memref<2x1024xf32, #tpu.memory_space<vmem>>, vector<2x1024xf32>,
    return
  }
  func.func @transform_0(%arg0: i32) -> (i32, i32) {
    %c0_i32 = arith.constant 0 : i32
    %c0_i32_0 = arith.constant 0 : i32
    return %arg0, %c0_i32 : i32, i32
  }
  func.func @transform_1(%arg0: i32) -> (i32, i32) {
    %c0_i32 = arith.constant 0 : i32
    %c0_i32_0 = arith.constant 0 : i32
    return %arg0, %c0_i32 : i32, i32
  }
  func.func @transform_2(%arg0: i32) -> (i32, i32) {
    %c0_i32 = arith.constant 0 : i32
    %c0_i32_0 = arith.constant 0 : i32
    return %arg0, %c0_i32 : i32, i32
  }
  func.func @transform_3(%arg0: i32) -> (i32, i32) {
    %c0_i32 = arith.constant 0 : i32
    %c0_i32_0 = arith.constant 0 : i32
    return %arg0, %c0_i32 : i32, i32
  }
  func.func @transform_4(%arg0: i32) -> (i32, i32) {
    %c0_i32 = arith.constant 0 : i32
    %c0_i32_0 = arith.constant 0 : i32
    return %arg0, %c0_i32 : i32, i32
  }
  func.func @transform_5(%arg0: i32) -> (i32, i32) {
    %c0_i32 = arith.constant 0 : i32
    %c0_i32_0 = arith.constant 0 : i32
    return %arg0, %c0_i32 : i32, i32
  }
  func.func @transform_6(%arg0: i32) -> (i32, i32) {
    %c0_i32 = arith.constant 0 : i32
    %c0_i32_0 = arith.constant 0 : i32
    return %arg0, %c0_i32 : i32, i32
  }
  func.func @transform_7(%arg0: i32) -> (i32, i32) {
    %c0_i32 = arith.constant 0 : i32
    %c0_i32_0 = arith.constant 0 : i32
    return %arg0, %c0_i32 : i32, i32
  }
  func.func @transform_8(%arg0: i32) -> (i32, i32) {
    %c0_i32 = arith.constant 0 : i32
    %c0_i32_0 = arith.constant 0 : i32
    return %arg0, %c0_i32 : i32, i32
  }
  func.func @transform_9(%arg0: i32) -> (i32, i32) {
    %c0_i32 = arith.constant 0 : i32
    %c0_i32_0 = arith.constant 0 : i32
    return %arg0, %c0_i32 : i32, i32
  }
}

module attributes {stable_mosaic.version = 11 : i64} {
  func.func @kernel(%arg0: i32, %arg1: memref<2x1024xf32, #tpu.memory_space<vmem>>, %arg2: memref<2x1024xf32, #tpu.memory_space<vmem>>, %arg3: memref<2x1024xf32, #tpu.memory_space<vmem>>, %arg4: memref<2x1024xf32, #tpu.memory_space<vmem>>) attributes {dimension_semantics = [#tpu.dimension_semantics<parallel>], iteration_bounds = array<i64: 1>, scalar_prefetch = 0 : i64, scratch_operands = 0 : i64, tpu.core_type = #tpu.core_type<tc>, window_params = [{transform_indices = @transform_0, window_bounds = array<i64: 2, 1024>}, {transform_indices = @transform_1, window_bounds = array<i64: 2, 1024>}, {transform_indices = @transform_2, window_bounds = array<i64: 2, 1024>}, {transform_indices = @transform_3, window_bounds = array<i64: 2, 1024>}]} {
    %c0 = arith.constant 0 : index
    %c0_0 = arith.constant 0 : index
    %0 = vector.load %arg1[%c0, %c0_0] : memref<2x1024xf32, #tpu.memory_space<vmem>>, vector<2x1024xf32>
    %c0_1 = arith.constant 0 : index
    %c0_2 = arith.constant 0 : index
    %1 = vector.load %arg3[%c0_1, %c0_2] : memref<2x1024xf32, #tpu.memory_space<vmem>>, vector<2x1024xf32>
    %2 = arith.mulf %0, %1 : vector<2x1024xf32>
    %cst = arith.constant dense<0.000000e+00> : vector<2xf32>
    %3 = vector.multi_reduction <add>, %2, %cst [1] : vector<2x1024xf32> to vector<2xf32>
    %4 = vector.shape_cast %3 : vector<2xf32> to vector<2x1xf32>
    %c0_3 = arith.constant 0 : index
    %c0_4 = arith.constant 0 : index
    %5 = vector.load %arg2[%c0_3, %c0_4] : memref<2x1024xf32, #tpu.memory_space<vmem>>, vector<2x1024xf32>
    %6 = vector.broadcast %4 : vector<2x1xf32> to vector<2x1024xf32>
    %7 = arith.mulf %6, %5 : vector<2x1024xf32>
    %8 = arith.subf %0, %7 : vector<2x1024xf32>
    %9 = arith.mulf %8, %8 : vector<2x1024xf32>
    %cst_5 = arith.constant dense<0.000000e+00> : vector<2xf32>
    %10 = vector.multi_reduction <add>, %9, %cst_5 [1] : vector<2x1024xf32> to vector<2xf32>
    %11 = vector.shape_cast %10 : vector<2xf32> to vector<2x1xf32>
    %cst_6 = arith.constant 1.000000e-30 : f32
    %12 = vector.broadcast %cst_6 : f32 to vector<2x1xf32>
    %13 = arith.maximumf %11, %12 : vector<2x1xf32>
    %14 = math.rsqrt %13 : vector<2x1xf32>
    %15 = vector.broadcast %14 : vector<2x1xf32> to vector<2x1024xf32>
    %16 = arith.mulf %8, %15 : vector<2x1024xf32>
    %c0_7 = arith.constant 0 : index
    %c0_8 = arith.constant 0 : index
    %17 = vector.load %arg4[%c0_7, %c0_8] : memref<2x1024xf32, #tpu.memory_space<vmem>>, vector<2x1024xf32>
    tpu.vector_store %arg4[%c0_7, %c0_8], %16 {strides = array<i32>} : memref<2x1024xf32, #tpu.memory_space<vmem>>, vector<2x1024xf32>,
    return
  }
  func.func @transform_0(%arg0: i32) -> (i32, i32) {
    %c0_i32 = arith.constant 0 : i32
    %c0_i32_0 = arith.constant 0 : i32
    return %arg0, %c0_i32 : i32, i32
  }
  func.func @transform_1(%arg0: i32) -> (i32, i32) {
    %c0_i32 = arith.constant 0 : i32
    %c0_i32_0 = arith.constant 0 : i32
    return %arg0, %c0_i32 : i32, i32
  }
  func.func @transform_2(%arg0: i32) -> (i32, i32) {
    %c0_i32 = arith.constant 0 : i32
    %c0_i32_0 = arith.constant 0 : i32
    return %arg0, %c0_i32 : i32, i32
  }
  func.func @transform_3(%arg0: i32) -> (i32, i32) {
    %c0_i32 = arith.constant 0 : i32
    %c0_i32_0 = arith.constant 0 : i32
    return %arg0, %c0_i32 : i32, i32
  }
}

module attributes {stable_mosaic.version = 11 : i64} {
  func.func @kernel(%arg0: i32, %arg1: memref<2x1024xf32, #tpu.memory_space<vmem>>, %arg2: memref<2x1024xf32, #tpu.memory_space<vmem>>, %arg3: memref<2x9xf32, #tpu.memory_space<vmem>>, %arg4: memref<2x3xf32, #tpu.memory_space<vmem>>, %arg5: memref<2x1024xf32, #tpu.memory_space<vmem>>, %arg6: memref<2x1024xf32, #tpu.memory_space<vmem>>, %arg7: memref<2x1024xf32, #tpu.memory_space<vmem>>, %arg8: memref<2x1024xf32, #tpu.memory_space<vmem>>, %arg9: memref<2x1xf32, #tpu.memory_space<vmem>>, %arg10: memref<2x1024xf32, #tpu.memory_space<vmem>>, %arg11: memref<2x9xf32, #tpu.memory_space<vmem>>, %arg12: memref<2x3xf32, #tpu.memory_space<vmem>>) attributes {dimension_semantics = [#tpu.dimension_semantics<parallel>], iteration_bounds = array<i64: 1>, scalar_prefetch = 0 : i64, scratch_operands = 0 : i64, tpu.core_type = #tpu.core_type<tc>, window_params = [{transform_indices = @transform_0, window_bounds = array<i64: 2, 1024>}, {transform_indices = @transform_1, window_bounds = array<i64: 2, 1024>}, {transform_indices = @transform_2, window_bounds = array<i64: 2, 9>}, {transform_indices = @transform_3, window_bounds = array<i64: 2, 3>}, {transform_indices = @transform_4, window_bounds = array<i64: 2, 1024>}, {transform_indices = @transform_5, window_bounds = array<i64: 2, 1024>}, {transform_indices = @transform_6, window_bounds = array<i64: 2, 1024>}, {transform_indices = @transform_7, window_bounds = array<i64: 2, 1024>}, {transform_indices = @transform_8, window_bounds = array<i64: 2, 1>}, {transform_indices = @transform_9, window_bounds = array<i64: 2, 1024>}, {transform_indices = @transform_10, window_bounds = array<i64: 2, 9>}, {transform_indices = @transform_11, window_bounds = array<i64: 2, 3>}]} {
    %c0 = arith.constant 0 : index
    %c0_0 = arith.constant 0 : index
    %0 = vector.load %arg1[%c0, %c0_0] : memref<2x1024xf32, #tpu.memory_space<vmem>>, vector<2x1024xf32>
    %c0_1 = arith.constant 0 : index
    %c0_2 = arith.constant 0 : index
    %1 = vector.load %arg2[%c0_1, %c0_2] : memref<2x1024xf32, #tpu.memory_space<vmem>>, vector<2x1024xf32>
    %c0_3 = arith.constant 0 : index
    %c0_4 = arith.constant 0 : index
    %2 = vector.load %arg5[%c0_3, %c0_4] : memref<2x1024xf32, #tpu.memory_space<vmem>>, vector<2x1024xf32>
    %c0_5 = arith.constant 0 : index
    %c0_6 = arith.constant 0 : index
    %3 = vector.load %arg6[%c0_5, %c0_6] : memref<2x1024xf32, #tpu.memory_space<vmem>>, vector<2x1024xf32>
    %4 = arith.mulf %0, %2 : vector<2x1024xf32>
    %cst = arith.constant dense<0.000000e+00> : vector<2xf32>
    %5 = vector.multi_reduction <add>, %4, %cst [1] : vector<2x1024xf32> to vector<2xf32>
    %6 = vector.shape_cast %5 : vector<2xf32> to vector<2x1xf32>
    %7 = arith.mulf %0, %3 : vector<2x1024xf32>
    %cst_7 = arith.constant dense<0.000000e+00> : vector<2xf32>
    %8 = vector.multi_reduction <add>, %7, %cst_7 [1] : vector<2x1024xf32> to vector<2xf32>
    %9 = vector.shape_cast %8 : vector<2xf32> to vector<2x1xf32>
    %10 = arith.mulf %0, %1 : vector<2x1024xf32>
    %cst_8 = arith.constant dense<0.000000e+00> : vector<2xf32>
    %11 = vector.multi_reduction <add>, %10, %cst_8 [1] : vector<2x1024xf32> to vector<2xf32>
    %12 = vector.shape_cast %11 : vector<2xf32> to vector<2x1xf32>
    %c0_9 = arith.constant 0 : index
    %c0_10 = arith.constant 0 : index
    %13 = vector.load %arg3[%c0_9, %c0_10] : memref<2x9xf32, #tpu.memory_space<vmem>>, vector<2x9xf32>
    %c0_11 = arith.constant 0 : index
    %c0_12 = arith.constant 0 : index
    %14 = vector.load %arg11[%c0_11, %c0_12] : memref<2x9xf32, #tpu.memory_space<vmem>>, vector<2x9xf32>
    tpu.vector_store %arg11[%c0_11, %c0_12], %13 {strides = array<i32>} : memref<2x9xf32, #tpu.memory_space<vmem>>, vector<2x9xf32>,
    %c0_13 = arith.constant 0 : index
    %c0_14 = arith.constant 0 : index
    %15 = vector.load %arg4[%c0_13, %c0_14] : memref<2x3xf32, #tpu.memory_space<vmem>>, vector<2x3xf32>
    %c0_15 = arith.constant 0 : index
    %c0_16 = arith.constant 0 : index
    %16 = vector.load %arg12[%c0_15, %c0_16] : memref<2x3xf32, #tpu.memory_space<vmem>>, vector<2x3xf32>
    tpu.vector_store %arg12[%c0_15, %c0_16], %15 {strides = array<i32>} : memref<2x3xf32, #tpu.memory_space<vmem>>, vector<2x3xf32>,
    %c0_17 = arith.constant 0 : index
    %c3 = arith.constant 3 : index
    %17 = vector.load %arg11[%c0_17, %c3] : memref<2x9xf32, #tpu.memory_space<vmem>>, vector<2x1xf32>
    tpu.vector_store %arg11[%c0_17, %c3], %6 {strides = array<i32>} : memref<2x9xf32, #tpu.memory_space<vmem>>, vector<2x1xf32>,
    %c0_18 = arith.constant 0 : index
    %c1 = arith.constant 1 : index
    %18 = vector.load %arg11[%c0_18, %c1] : memref<2x9xf32, #tpu.memory_space<vmem>>, vector<2x1xf32>
    tpu.vector_store %arg11[%c0_18, %c1], %6 {strides = array<i32>} : memref<2x9xf32, #tpu.memory_space<vmem>>, vector<2x1xf32>,
    %c0_19 = arith.constant 0 : index
    %c4 = arith.constant 4 : index
    %19 = vector.load %arg11[%c0_19, %c4] : memref<2x9xf32, #tpu.memory_space<vmem>>, vector<2x1xf32>
    tpu.vector_store %arg11[%c0_19, %c4], %9 {strides = array<i32>} : memref<2x9xf32, #tpu.memory_space<vmem>>, vector<2x1xf32>,
    %c0_20 = arith.constant 0 : index
    %c4_21 = arith.constant 4 : index
    %20 = vector.load %arg11[%c0_20, %c4_21] : memref<2x9xf32, #tpu.memory_space<vmem>>, vector<2x1xf32>
    tpu.vector_store %arg11[%c0_20, %c4_21], %9 {strides = array<i32>} : memref<2x9xf32, #tpu.memory_space<vmem>>, vector<2x1xf32>,
    %c0_22 = arith.constant 0 : index
    %c1_23 = arith.constant 1 : index
    %21 = vector.load %arg12[%c0_22, %c1_23] : memref<2x3xf32, #tpu.memory_space<vmem>>, vector<2x1xf32>
    tpu.vector_store %arg12[%c0_22, %c1_23], %12 {strides = array<i32>} : memref<2x3xf32, #tpu.memory_space<vmem>>, vector<2x1xf32>,
    %c0_24 = arith.constant 0 : index
    %c0_25 = arith.constant 0 : index
    %22 = vector.load %arg3[%c0_24, %c0_25] : memref<2x9xf32, #tpu.memory_space<vmem>>, vector<2x1xf32>
    %c0_26 = arith.constant 0 : index
    %c0_27 = arith.constant 0 : index
    %23 = vector.load %arg4[%c0_26, %c0_27] : memref<2x3xf32, #tpu.memory_space<vmem>>, vector<2x1xf32>
    %cst_28 = arith.constant 1.000000e+00 : f32
    %24 = vector.broadcast %cst_28 : f32 to vector<2x1xf32>
    %25 = arith.divf %24, %22 : vector<2x1xf32>
    %26 = arith.mulf %6, %25 : vector<2x1xf32>
    %27 = arith.mulf %23, %25 : vector<2x1xf32>
    %28 = arith.mulf %6, %26 : vector<2x1xf32>
    %29 = arith.subf %9, %28 : vector<2x1xf32>
    %30 = arith.mulf %6, %27 : vector<2x1xf32>
    %31 = arith.subf %12, %30 : vector<2x1xf32>
    %cst_29 = arith.constant 1.000000e+00 : f32
    %32 = vector.broadcast %cst_29 : f32 to vector<2x1xf32>
    %33 = arith.divf %32, %29 : vector<2x1xf32>
    %34 = arith.mulf %31, %33 : vector<2x1xf32>
    %35 = arith.mulf %26, %34 : vector<2x1xf32>
    %36 = arith.subf %27, %35 : vector<2x1xf32>
    %37 = vector.broadcast %36 : vector<2x1xf32> to vector<2x1024xf32>
    %38 = arith.mulf %37, %2 : vector<2x1024xf32>
    %c0_30 = arith.constant 0 : index
    %c0_31 = arith.constant 0 : index
    %39 = vector.load %arg7[%c0_30, %c0_31] : memref<2x1024xf32, #tpu.memory_space<vmem>>, vector<2x1024xf32>
    %40 = vector.broadcast %36 : vector<2x1xf32> to vector<2x1024xf32>
    %41 = arith.mulf %40, %39 : vector<2x1024xf32>
    %42 = vector.broadcast %34 : vector<2x1xf32> to vector<2x1024xf32>
    %43 = arith.mulf %42, %3 : vector<2x1024xf32>
    %44 = arith.addf %38, %43 : vector<2x1024xf32>
    %c0_32 = arith.constant 0 : index
    %c0_33 = arith.constant 0 : index
    %45 = vector.load %arg8[%c0_32, %c0_33] : memref<2x1024xf32, #tpu.memory_space<vmem>>, vector<2x1024xf32>
    %46 = vector.broadcast %34 : vector<2x1xf32> to vector<2x1024xf32>
    %47 = arith.mulf %46, %45 : vector<2x1024xf32>
    %48 = arith.addf %41, %47 : vector<2x1024xf32>
    %49 = arith.subf %44, %1 : vector<2x1024xf32>
    %50 = arith.mulf %49, %49 : vector<2x1024xf32>
    %cst_34 = arith.constant dense<0.000000e+00> : vector<2xf32>
    %51 = vector.multi_reduction <add>, %50, %cst_34 [1] : vector<2x1024xf32> to vector<2xf32>
    %52 = vector.shape_cast %51 : vector<2xf32> to vector<2x1xf32>
    %53 = arith.mulf %1, %1 : vector<2x1024xf32>
    %cst_35 = arith.constant dense<0.000000e+00> : vector<2xf32>
    %54 = vector.multi_reduction <add>, %53, %cst_35 [1] : vector<2x1024xf32> to vector<2xf32>
    %55 = vector.shape_cast %54 : vector<2xf32> to vector<2x1xf32>
    %56 = math.sqrt %52 : vector<2x1xf32>
    %57 = math.rsqrt %55 : vector<2x1xf32>
    %58 = arith.mulf %56, %57 : vector<2x1xf32>
    %c0_36 = arith.constant 0 : index
    %c0_37 = arith.constant 0 : index
    %59 = vector.load %arg9[%c0_36, %c0_37] : memref<2x1xf32, #tpu.memory_space<vmem>>, vector<2x1xf32>
    tpu.vector_store %arg9[%c0_36, %c0_37], %58 {strides = array<i32>} : memref<2x1xf32, #tpu.memory_space<vmem>>, vector<2x1xf32>,
    %cst_38 = arith.constant 0.000000e+00 : f32
    %60 = vector.broadcast %cst_38 : f32 to vector<2x1024xf32>
    %61 = arith.subf %60, %48 : vector<2x1024xf32>
    %c0_39 = arith.constant 0 : index
    %c0_40 = arith.constant 0 : index
    %62 = vector.load %arg10[%c0_39, %c0_40] : memref<2x1024xf32, #tpu.memory_space<vmem>>, vector<2x1024xf32>
    tpu.vector_store %arg10[%c0_39, %c0_40], %61 {strides = array<i32>} : memref<2x1024xf32, #tpu.memory_space<vmem>>, vector<2x1024xf32>,
    return
  }
  func.func @transform_0(%arg0: i32) -> (i32, i32) {
    %c0_i32 = arith.constant 0 : i32
    %c0_i32_0 = arith.constant 0 : i32
    return %arg0, %c0_i32 : i32, i32
  }
  func.func @transform_1(%arg0: i32) -> (i32, i32) {
    %c0_i32 = arith.constant 0 : i32
    %c0_i32_0 = arith.constant 0 : i32
    return %arg0, %c0_i32 : i32, i32
  }
  func.func @transform_2(%arg0: i32) -> (i32, i32) {
    %c0_i32 = arith.constant 0 : i32
    %c0_i32_0 = arith.constant 0 : i32
    return %arg0, %c0_i32 : i32, i32
  }
  func.func @transform_3(%arg0: i32) -> (i32, i32) {
    %c0_i32 = arith.constant 0 : i32
    %c0_i32_0 = arith.constant 0 : i32
    return %arg0, %c0_i32 : i32, i32
  }
  func.func @transform_4(%arg0: i32) -> (i32, i32) {
    %c0_i32 = arith.constant 0 : i32
    %c0_i32_0 = arith.constant 0 : i32
    return %arg0, %c0_i32 : i32, i32
  }
  func.func @transform_5(%arg0: i32) -> (i32, i32) {
    %c0_i32 = arith.constant 0 : i32
    %c0_i32_0 = arith.constant 0 : i32
    return %arg0, %c0_i32 : i32, i32
  }
  func.func @transform_6(%arg0: i32) -> (i32, i32) {
    %c0_i32 = arith.constant 0 : i32
    %c0_i32_0 = arith.constant 0 : i32
    return %arg0, %c0_i32 : i32, i32
  }
  func.func @transform_7(%arg0: i32) -> (i32, i32) {
    %c0_i32 = arith.constant 0 : i32
    %c0_i32_0 = arith.constant 0 : i32
    return %arg0, %c0_i32 : i32, i32
  }
  func.func @transform_8(%arg0: i32) -> (i32, i32) {
    %c0_i32 = arith.constant 0 : i32
    %c0_i32_0 = arith.constant 0 : i32
    return %arg0, %c0_i32 : i32, i32
  }
  func.func @transform_9(%arg0: i32) -> (i32, i32) {
    %c0_i32 = arith.constant 0 : i32
    %c0_i32_0 = arith.constant 0 : i32
    return %arg0, %c0_i32 : i32, i32
  }
  func.func @transform_10(%arg0: i32) -> (i32, i32) {
    %c0_i32 = arith.constant 0 : i32
    %c0_i32_0 = arith.constant 0 : i32
    return %arg0, %c0_i32 : i32, i32
  }
  func.func @transform_11(%arg0: i32) -> (i32, i32) {
    %c0_i32 = arith.constant 0 : i32
    %c0_i32_0 = arith.constant 0 : i32
    return %arg0, %c0_i32 : i32, i32
  }
}

module attributes {stable_mosaic.version = 11 : i64} {
  func.func @kernel(%arg0: i32, %arg1: memref<2x1024xf32, #tpu.memory_space<vmem>>, %arg2: memref<2x1024xf32, #tpu.memory_space<vmem>>, %arg3: memref<2x1024xf32, #tpu.memory_space<vmem>>, %arg4: memref<2x1024xf32, #tpu.memory_space<vmem>>, %arg5: memref<2x1024xf32, #tpu.memory_space<vmem>>, %arg6: memref<2x1024xf32, #tpu.memory_space<vmem>>) attributes {dimension_semantics = [#tpu.dimension_semantics<parallel>], iteration_bounds = array<i64: 1>, scalar_prefetch = 0 : i64, scratch_operands = 0 : i64, tpu.core_type = #tpu.core_type<tc>, window_params = [{transform_indices = @transform_0, window_bounds = array<i64: 2, 1024>}, {transform_indices = @transform_1, window_bounds = array<i64: 2, 1024>}, {transform_indices = @transform_2, window_bounds = array<i64: 2, 1024>}, {transform_indices = @transform_3, window_bounds = array<i64: 2, 1024>}, {transform_indices = @transform_4, window_bounds = array<i64: 2, 1024>}, {transform_indices = @transform_5, window_bounds = array<i64: 2, 1024>}]} {
    %c0 = arith.constant 0 : index
    %c0_0 = arith.constant 0 : index
    %0 = vector.load %arg1[%c0, %c0_0] : memref<2x1024xf32, #tpu.memory_space<vmem>>, vector<2x1024xf32>
    %c0_1 = arith.constant 0 : index
    %c0_2 = arith.constant 0 : index
    %1 = vector.load %arg4[%c0_1, %c0_2] : memref<2x1024xf32, #tpu.memory_space<vmem>>, vector<2x1024xf32>
    %2 = arith.mulf %0, %1 : vector<2x1024xf32>
    %cst = arith.constant dense<0.000000e+00> : vector<2xf32>
    %3 = vector.multi_reduction <add>, %2, %cst [1] : vector<2x1024xf32> to vector<2xf32>
    %4 = vector.shape_cast %3 : vector<2xf32> to vector<2x1xf32>
    %c0_3 = arith.constant 0 : index
    %c0_4 = arith.constant 0 : index
    %5 = vector.load %arg2[%c0_3, %c0_4] : memref<2x1024xf32, #tpu.memory_space<vmem>>, vector<2x1024xf32>
    %6 = vector.broadcast %4 : vector<2x1xf32> to vector<2x1024xf32>
    %7 = arith.mulf %6, %5 : vector<2x1024xf32>
    %8 = arith.subf %0, %7 : vector<2x1024xf32>
    %c0_5 = arith.constant 0 : index
    %c0_6 = arith.constant 0 : index
    %9 = vector.load %arg5[%c0_5, %c0_6] : memref<2x1024xf32, #tpu.memory_space<vmem>>, vector<2x1024xf32>
    %10 = arith.mulf %8, %9 : vector<2x1024xf32>
    %cst_7 = arith.constant dense<0.000000e+00> : vector<2xf32>
    %11 = vector.multi_reduction <add>, %10, %cst_7 [1] : vector<2x1024xf32> to vector<2xf32>
    %12 = vector.shape_cast %11 : vector<2xf32> to vector<2x1xf32>
    %c0_8 = arith.constant 0 : index
    %c0_9 = arith.constant 0 : index
    %13 = vector.load %arg3[%c0_8, %c0_9] : memref<2x1024xf32, #tpu.memory_space<vmem>>, vector<2x1024xf32>
    %14 = vector.broadcast %12 : vector<2x1xf32> to vector<2x1024xf32>
    %15 = arith.mulf %14, %13 : vector<2x1024xf32>
    %16 = arith.subf %8, %15 : vector<2x1024xf32>
    %17 = arith.mulf %16, %16 : vector<2x1024xf32>
    %cst_10 = arith.constant dense<0.000000e+00> : vector<2xf32>
    %18 = vector.multi_reduction <add>, %17, %cst_10 [1] : vector<2x1024xf32> to vector<2xf32>
    %19 = vector.shape_cast %18 : vector<2xf32> to vector<2x1xf32>
    %cst_11 = arith.constant 1.000000e-30 : f32
    %20 = vector.broadcast %cst_11 : f32 to vector<2x1xf32>
    %21 = arith.maximumf %19, %20 : vector<2x1xf32>
    %22 = math.rsqrt %21 : vector<2x1xf32>
    %23 = vector.broadcast %22 : vector<2x1xf32> to vector<2x1024xf32>
    %24 = arith.mulf %16, %23 : vector<2x1024xf32>
    %c0_12 = arith.constant 0 : index
    %c0_13 = arith.constant 0 : index
    %25 = vector.load %arg6[%c0_12, %c0_13] : memref<2x1024xf32, #tpu.memory_space<vmem>>, vector<2x1024xf32>
    tpu.vector_store %arg6[%c0_12, %c0_13], %24 {strides = array<i32>} : memref<2x1024xf32, #tpu.memory_space<vmem>>, vector<2x1024xf32>,
    return
  }
  func.func @transform_0(%arg0: i32) -> (i32, i32) {
    %c0_i32 = arith.constant 0 : i32
    %c0_i32_0 = arith.constant 0 : i32
    return %arg0, %c0_i32 : i32, i32
  }
  func.func @transform_1(%arg0: i32) -> (i32, i32) {
    %c0_i32 = arith.constant 0 : i32
    %c0_i32_0 = arith.constant 0 : i32
    return %arg0, %c0_i32 : i32, i32
  }
  func.func @transform_2(%arg0: i32) -> (i32, i32) {
    %c0_i32 = arith.constant 0 : i32
    %c0_i32_0 = arith.constant 0 : i32
    return %arg0, %c0_i32 : i32, i32
  }
  func.func @transform_3(%arg0: i32) -> (i32, i32) {
    %c0_i32 = arith.constant 0 : i32
    %c0_i32_0 = arith.constant 0 : i32
    return %arg0, %c0_i32 : i32, i32
  }
  func.func @transform_4(%arg0: i32) -> (i32, i32) {
    %c0_i32 = arith.constant 0 : i32
    %c0_i32_0 = arith.constant 0 : i32
    return %arg0, %c0_i32 : i32, i32
  }
  func.func @transform_5(%arg0: i32) -> (i32, i32) {
    %c0_i32 = arith.constant 0 : i32
    %c0_i32_0 = arith.constant 0 : i32
    return %arg0, %c0_i32 : i32, i32
  }
}

module attributes {stable_mosaic.version = 11 : i64} {
  func.func @kernel(%arg0: i32, %arg1: memref<2x1024xf32, #tpu.memory_space<vmem>>, %arg2: memref<2x1024xf32, #tpu.memory_space<vmem>>, %arg3: memref<2x9xf32, #tpu.memory_space<vmem>>, %arg4: memref<2x3xf32, #tpu.memory_space<vmem>>, %arg5: memref<2x1024xf32, #tpu.memory_space<vmem>>, %arg6: memref<2x1024xf32, #tpu.memory_space<vmem>>, %arg7: memref<2x1024xf32, #tpu.memory_space<vmem>>, %arg8: memref<2x1024xf32, #tpu.memory_space<vmem>>, %arg9: memref<2x1024xf32, #tpu.memory_space<vmem>>, %arg10: memref<2x1024xf32, #tpu.memory_space<vmem>>, %arg11: memref<2x1xf32, #tpu.memory_space<vmem>>, %arg12: memref<2x1024xf32, #tpu.memory_space<vmem>>, %arg13: memref<2x9xf32, #tpu.memory_space<vmem>>, %arg14: memref<2x3xf32, #tpu.memory_space<vmem>>) attributes {dimension_semantics = [#tpu.dimension_semantics<parallel>], iteration_bounds = array<i64: 1>, scalar_prefetch = 0 : i64, scratch_operands = 0 : i64, tpu.core_type = #tpu.core_type<tc>, window_params = [{transform_indices = @transform_0, window_bounds = array<i64: 2, 1024>}, {transform_indices = @transform_1, window_bounds = array<i64: 2, 1024>}, {transform_indices = @transform_2, window_bounds = array<i64: 2, 9>}, {transform_indices = @transform_3, window_bounds = array<i64: 2, 3>}, {transform_indices = @transform_4, window_bounds = array<i64: 2, 1024>}, {transform_indices = @transform_5, window_bounds = array<i64: 2, 1024>}, {transform_indices = @transform_6, window_bounds = array<i64: 2, 1024>}, {transform_indices = @transform_7, window_bounds = array<i64: 2, 1024>}, {transform_indices = @transform_8, window_bounds = array<i64: 2, 1024>}, {transform_indices = @transform_9, window_bounds = array<i64: 2, 1024>}, {transform_indices = @transform_10, window_bounds = array<i64: 2, 1>}, {transform_indices = @transform_11, window_bounds = array<i64: 2, 1024>}, {transform_indices = @transform_12, window_bounds = array<i64: 2, 9>}, {transform_indices = @transform_13, window_bounds = array<i64: 2, 3>}]} {
    %c0 = arith.constant 0 : index
    %c0_0 = arith.constant 0 : index
    %0 = vector.load %arg1[%c0, %c0_0] : memref<2x1024xf32, #tpu.memory_space<vmem>>, vector<2x1024xf32>
    %c0_1 = arith.constant 0 : index
    %c0_2 = arith.constant 0 : index
    %1 = vector.load %arg2[%c0_1, %c0_2] : memref<2x1024xf32, #tpu.memory_space<vmem>>, vector<2x1024xf32>
    %c0_3 = arith.constant 0 : index
    %c0_4 = arith.constant 0 : index
    %2 = vector.load %arg5[%c0_3, %c0_4] : memref<2x1024xf32, #tpu.memory_space<vmem>>, vector<2x1024xf32>
    %c0_5 = arith.constant 0 : index
    %c0_6 = arith.constant 0 : index
    %3 = vector.load %arg6[%c0_5, %c0_6] : memref<2x1024xf32, #tpu.memory_space<vmem>>, vector<2x1024xf32>
    %c0_7 = arith.constant 0 : index
    %c0_8 = arith.constant 0 : index
    %4 = vector.load %arg7[%c0_7, %c0_8] : memref<2x1024xf32, #tpu.memory_space<vmem>>, vector<2x1024xf32>
    %5 = arith.mulf %0, %2 : vector<2x1024xf32>
    %cst = arith.constant dense<0.000000e+00> : vector<2xf32>
    %6 = vector.multi_reduction <add>, %5, %cst [1] : vector<2x1024xf32> to vector<2xf32>
    %7 = vector.shape_cast %6 : vector<2xf32> to vector<2x1xf32>
    %8 = arith.mulf %0, %3 : vector<2x1024xf32>
    %cst_9 = arith.constant dense<0.000000e+00> : vector<2xf32>
    %9 = vector.multi_reduction <add>, %8, %cst_9 [1] : vector<2x1024xf32> to vector<2xf32>
    %10 = vector.shape_cast %9 : vector<2xf32> to vector<2x1xf32>
    %11 = arith.mulf %0, %4 : vector<2x1024xf32>
    %cst_10 = arith.constant dense<0.000000e+00> : vector<2xf32>
    %12 = vector.multi_reduction <add>, %11, %cst_10 [1] : vector<2x1024xf32> to vector<2xf32>
    %13 = vector.shape_cast %12 : vector<2xf32> to vector<2x1xf32>
    %14 = arith.mulf %0, %1 : vector<2x1024xf32>
    %cst_11 = arith.constant dense<0.000000e+00> : vector<2xf32>
    %15 = vector.multi_reduction <add>, %14, %cst_11 [1] : vector<2x1024xf32> to vector<2xf32>
    %16 = vector.shape_cast %15 : vector<2xf32> to vector<2x1xf32>
    %c0_12 = arith.constant 0 : index
    %c0_13 = arith.constant 0 : index
    %17 = vector.load %arg3[%c0_12, %c0_13] : memref<2x9xf32, #tpu.memory_space<vmem>>, vector<2x9xf32>
    %c0_14 = arith.constant 0 : index
    %c0_15 = arith.constant 0 : index
    %18 = vector.load %arg13[%c0_14, %c0_15] : memref<2x9xf32, #tpu.memory_space<vmem>>, vector<2x9xf32>
    tpu.vector_store %arg13[%c0_14, %c0_15], %17 {strides = array<i32>} : memref<2x9xf32, #tpu.memory_space<vmem>>, vector<2x9xf32>,
    %c0_16 = arith.constant 0 : index
    %c0_17 = arith.constant 0 : index
    %19 = vector.load %arg4[%c0_16, %c0_17] : memref<2x3xf32, #tpu.memory_space<vmem>>, vector<2x3xf32>
    %c0_18 = arith.constant 0 : index
    %c0_19 = arith.constant 0 : index
    %20 = vector.load %arg14[%c0_18, %c0_19] : memref<2x3xf32, #tpu.memory_space<vmem>>, vector<2x3xf32>
    tpu.vector_store %arg14[%c0_18, %c0_19], %19 {strides = array<i32>} : memref<2x3xf32, #tpu.memory_space<vmem>>, vector<2x3xf32>,
    %c0_20 = arith.constant 0 : index
    %c6 = arith.constant 6 : index
    %21 = vector.load %arg13[%c0_20, %c6] : memref<2x9xf32, #tpu.memory_space<vmem>>, vector<2x1xf32>
    tpu.vector_store %arg13[%c0_20, %c6], %7 {strides = array<i32>} : memref<2x9xf32, #tpu.memory_space<vmem>>, vector<2x1xf32>,
    %c0_21 = arith.constant 0 : index
    %c2 = arith.constant 2 : index
    %22 = vector.load %arg13[%c0_21, %c2] : memref<2x9xf32, #tpu.memory_space<vmem>>, vector<2x1xf32>
    tpu.vector_store %arg13[%c0_21, %c2], %7 {strides = array<i32>} : memref<2x9xf32, #tpu.memory_space<vmem>>, vector<2x1xf32>,
    %c0_22 = arith.constant 0 : index
    %c7 = arith.constant 7 : index
    %23 = vector.load %arg13[%c0_22, %c7] : memref<2x9xf32, #tpu.memory_space<vmem>>, vector<2x1xf32>
    tpu.vector_store %arg13[%c0_22, %c7], %10 {strides = array<i32>} : memref<2x9xf32, #tpu.memory_space<vmem>>, vector<2x1xf32>,
    %c0_23 = arith.constant 0 : index
    %c5 = arith.constant 5 : index
    %24 = vector.load %arg13[%c0_23, %c5] : memref<2x9xf32, #tpu.memory_space<vmem>>, vector<2x1xf32>
    tpu.vector_store %arg13[%c0_23, %c5], %10 {strides = array<i32>} : memref<2x9xf32, #tpu.memory_space<vmem>>, vector<2x1xf32>,
    %c0_24 = arith.constant 0 : index
    %c8 = arith.constant 8 : index
    %25 = vector.load %arg13[%c0_24, %c8] : memref<2x9xf32, #tpu.memory_space<vmem>>, vector<2x1xf32>
    tpu.vector_store %arg13[%c0_24, %c8], %13 {strides = array<i32>} : memref<2x9xf32, #tpu.memory_space<vmem>>, vector<2x1xf32>,
    %c0_25 = arith.constant 0 : index
    %c8_26 = arith.constant 8 : index
    %26 = vector.load %arg13[%c0_25, %c8_26] : memref<2x9xf32, #tpu.memory_space<vmem>>, vector<2x1xf32>
    tpu.vector_store %arg13[%c0_25, %c8_26], %13 {strides = array<i32>} : memref<2x9xf32, #tpu.memory_space<vmem>>, vector<2x1xf32>,
    %c0_27 = arith.constant 0 : index
    %c2_28 = arith.constant 2 : index
    %27 = vector.load %arg14[%c0_27, %c2_28] : memref<2x3xf32, #tpu.memory_space<vmem>>, vector<2x1xf32>
    tpu.vector_store %arg14[%c0_27, %c2_28], %16 {strides = array<i32>} : memref<2x3xf32, #tpu.memory_space<vmem>>, vector<2x1xf32>,
    %c0_29 = arith.constant 0 : index
    %c0_30 = arith.constant 0 : index
    %28 = vector.load %arg3[%c0_29, %c0_30] : memref<2x9xf32, #tpu.memory_space<vmem>>, vector<2x1xf32>
    %c0_31 = arith.constant 0 : index
    %c1 = arith.constant 1 : index
    %29 = vector.load %arg3[%c0_31, %c1] : memref<2x9xf32, #tpu.memory_space<vmem>>, vector<2x1xf32>
    %c0_32 = arith.constant 0 : index
    %c3 = arith.constant 3 : index
    %30 = vector.load %arg3[%c0_32, %c3] : memref<2x9xf32, #tpu.memory_space<vmem>>, vector<2x1xf32>
    %c0_33 = arith.constant 0 : index
    %c4 = arith.constant 4 : index
    %31 = vector.load %arg3[%c0_33, %c4] : memref<2x9xf32, #tpu.memory_space<vmem>>, vector<2x1xf32>
    %c0_34 = arith.constant 0 : index
    %c0_35 = arith.constant 0 : index
    %32 = vector.load %arg4[%c0_34, %c0_35] : memref<2x3xf32, #tpu.memory_space<vmem>>, vector<2x1xf32>
    %c0_36 = arith.constant 0 : index
    %c1_37 = arith.constant 1 : index
    %33 = vector.load %arg4[%c0_36, %c1_37] : memref<2x3xf32, #tpu.memory_space<vmem>>, vector<2x1xf32>
    %cst_38 = arith.constant 1.000000e+00 : f32
    %34 = vector.broadcast %cst_38 : f32 to vector<2x1xf32>
    %35 = arith.divf %34, %28 : vector<2x1xf32>
    %36 = arith.mulf %29, %35 : vector<2x1xf32>
    %37 = arith.mulf %7, %35 : vector<2x1xf32>
    %38 = arith.mulf %32, %35 : vector<2x1xf32>
    %39 = arith.mulf %30, %36 : vector<2x1xf32>
    %40 = arith.subf %31, %39 : vector<2x1xf32>
    %41 = arith.mulf %30, %37 : vector<2x1xf32>
    %42 = arith.subf %10, %41 : vector<2x1xf32>
    %43 = arith.mulf %30, %38 : vector<2x1xf32>
    %44 = arith.subf %33, %43 : vector<2x1xf32>
    %45 = arith.mulf %7, %36 : vector<2x1xf32>
    %46 = arith.subf %10, %45 : vector<2x1xf32>
    %47 = arith.mulf %7, %37 : vector<2x1xf32>
    %48 = arith.subf %13, %47 : vector<2x1xf32>
    %49 = arith.mulf %7, %38 : vector<2x1xf32>
    %50 = arith.subf %16, %49 : vector<2x1xf32>
    %cst_39 = arith.constant 1.000000e+00 : f32
    %51 = vector.broadcast %cst_39 : f32 to vector<2x1xf32>
    %52 = arith.divf %51, %40 : vector<2x1xf32>
    %53 = arith.mulf %42, %52 : vector<2x1xf32>
    %54 = arith.mulf %44, %52 : vector<2x1xf32>
    %55 = arith.mulf %36, %53 : vector<2x1xf32>
    %56 = arith.subf %37, %55 : vector<2x1xf32>
    %57 = arith.mulf %36, %54 : vector<2x1xf32>
    %58 = arith.subf %38, %57 : vector<2x1xf32>
    %59 = arith.mulf %46, %53 : vector<2x1xf32>
    %60 = arith.subf %48, %59 : vector<2x1xf32>
    %61 = arith.mulf %46, %54 : vector<2x1xf32>
    %62 = arith.subf %50, %61 : vector<2x1xf32>
    %cst_40 = arith.constant 1.000000e+00 : f32
    %63 = vector.broadcast %cst_40 : f32 to vector<2x1xf32>
    %64 = arith.divf %63, %60 : vector<2x1xf32>
    %65 = arith.mulf %62, %64 : vector<2x1xf32>
    %66 = arith.mulf %56, %65 : vector<2x1xf32>
    %67 = arith.subf %58, %66 : vector<2x1xf32>
    %68 = arith.mulf %53, %65 : vector<2x1xf32>
    %69 = arith.subf %54, %68 : vector<2x1xf32>
    %70 = vector.broadcast %67 : vector<2x1xf32> to vector<2x1024xf32>
    %71 = arith.mulf %70, %2 : vector<2x1024xf32>
    %c0_41 = arith.constant 0 : index
    %c0_42 = arith.constant 0 : index
    %72 = vector.load %arg8[%c0_41, %c0_42] : memref<2x1024xf32, #tpu.memory_space<vmem>>, vector<2x1024xf32>
    %73 = vector.broadcast %67 : vector<2x1xf32> to vector<2x1024xf32>
    %74 = arith.mulf %73, %72 : vector<2x1024xf32>
    %75 = vector.broadcast %69 : vector<2x1xf32> to vector<2x1024xf32>
    %76 = arith.mulf %75, %3 : vector<2x1024xf32>
    %77 = arith.addf %71, %76 : vector<2x1024xf32>
    %c0_43 = arith.constant 0 : index
    %c0_44 = arith.constant 0 : index
    %78 = vector.load %arg9[%c0_43, %c0_44] : memref<2x1024xf32, #tpu.memory_space<vmem>>, vector<2x1024xf32>
    %79 = vector.broadcast %69 : vector<2x1xf32> to vector<2x1024xf32>
    %80 = arith.mulf %79, %78 : vector<2x1024xf32>
    %81 = arith.addf %74, %80 : vector<2x1024xf32>
    %82 = vector.broadcast %65 : vector<2x1xf32> to vector<2x1024xf32>
    %83 = arith.mulf %82, %4 : vector<2x1024xf32>
    %84 = arith.addf %77, %83 : vector<2x1024xf32>
    %c0_45 = arith.constant 0 : index
    %c0_46 = arith.constant 0 : index
    %85 = vector.load %arg10[%c0_45, %c0_46] : memref<2x1024xf32, #tpu.memory_space<vmem>>, vector<2x1024xf32>
    %86 = vector.broadcast %65 : vector<2x1xf32> to vector<2x1024xf32>
    %87 = arith.mulf %86, %85 : vector<2x1024xf32>
    %88 = arith.addf %81, %87 : vector<2x1024xf32>
    %89 = arith.subf %84, %1 : vector<2x1024xf32>
    %90 = arith.mulf %89, %89 : vector<2x1024xf32>
    %cst_47 = arith.constant dense<0.000000e+00> : vector<2xf32>
    %91 = vector.multi_reduction <add>, %90, %cst_47 [1] : vector<2x1024xf32> to vector<2xf32>
    %92 = vector.shape_cast %91 : vector<2xf32> to vector<2x1xf32>
    %93 = arith.mulf %1, %1 : vector<2x1024xf32>
    %cst_48 = arith.constant dense<0.000000e+00> : vector<2xf32>
    %94 = vector.multi_reduction <add>, %93, %cst_48 [1] : vector<2x1024xf32> to vector<2xf32>
    %95 = vector.shape_cast %94 : vector<2xf32> to vector<2x1xf32>
    %96 = math.sqrt %92 : vector<2x1xf32>
    %97 = math.rsqrt %95 : vector<2x1xf32>
    %98 = arith.mulf %96, %97 : vector<2x1xf32>
    %c0_49 = arith.constant 0 : index
    %c0_50 = arith.constant 0 : index
    %99 = vector.load %arg11[%c0_49, %c0_50] : memref<2x1xf32, #tpu.memory_space<vmem>>, vector<2x1xf32>
    tpu.vector_store %arg11[%c0_49, %c0_50], %98 {strides = array<i32>} : memref<2x1xf32, #tpu.memory_space<vmem>>, vector<2x1xf32>,
    %cst_51 = arith.constant 0.000000e+00 : f32
    %100 = vector.broadcast %cst_51 : f32 to vector<2x1024xf32>
    %101 = arith.subf %100, %88 : vector<2x1024xf32>
    %c0_52 = arith.constant 0 : index
    %c0_53 = arith.constant 0 : index
    %102 = vector.load %arg12[%c0_52, %c0_53] : memref<2x1024xf32, #tpu.memory_space<vmem>>, vector<2x1024xf32>
    tpu.vector_store %arg12[%c0_52, %c0_53], %101 {strides = array<i32>} : memref<2x1024xf32, #tpu.memory_space<vmem>>, vector<2x1024xf32>,
    return
  }
  func.func @transform_0(%arg0: i32) -> (i32, i32) {
    %c0_i32 = arith.constant 0 : i32
    %c0_i32_0 = arith.constant 0 : i32
    return %arg0, %c0_i32 : i32, i32
  }
  func.func @transform_1(%arg0: i32) -> (i32, i32) {
    %c0_i32 = arith.constant 0 : i32
    %c0_i32_0 = arith.constant 0 : i32
    return %arg0, %c0_i32 : i32, i32
  }
  func.func @transform_2(%arg0: i32) -> (i32, i32) {
    %c0_i32 = arith.constant 0 : i32
    %c0_i32_0 = arith.constant 0 : i32
    return %arg0, %c0_i32 : i32, i32
  }
  func.func @transform_3(%arg0: i32) -> (i32, i32) {
    %c0_i32 = arith.constant 0 : i32
    %c0_i32_0 = arith.constant 0 : i32
    return %arg0, %c0_i32 : i32, i32
  }
  func.func @transform_4(%arg0: i32) -> (i32, i32) {
    %c0_i32 = arith.constant 0 : i32
    %c0_i32_0 = arith.constant 0 : i32
    return %arg0, %c0_i32 : i32, i32
  }
  func.func @transform_5(%arg0: i32) -> (i32, i32) {
    %c0_i32 = arith.constant 0 : i32
    %c0_i32_0 = arith.constant 0 : i32
    return %arg0, %c0_i32 : i32, i32
  }
  func.func @transform_6(%arg0: i32) -> (i32, i32) {
    %c0_i32 = arith.constant 0 : i32
    %c0_i32_0 = arith.constant 0 : i32
    return %arg0, %c0_i32 : i32, i32
  }
  func.func @transform_7(%arg0: i32) -> (i32, i32) {
    %c0_i32 = arith.constant 0 : i32
    %c0_i32_0 = arith.constant 0 : i32
    return %arg0, %c0_i32 : i32, i32
  }
  func.func @transform_8(%arg0: i32) -> (i32, i32) {
    %c0_i32 = arith.constant 0 : i32
    %c0_i32_0 = arith.constant 0 : i32
    return %arg0, %c0_i32 : i32, i32
  }
  func.func @transform_9(%arg0: i32) -> (i32, i32) {
    %c0_i32 = arith.constant 0 : i32
    %c0_i32_0 = arith.constant 0 : i32
    return %arg0, %c0_i32 : i32, i32
  }
  func.func @transform_10(%arg0: i32) -> (i32, i32) {
    %c0_i32 = arith.constant 0 : i32
    %c0_i32_0 = arith.constant 0 : i32
    return %arg0, %c0_i32 : i32, i32
  }
  func.func @transform_11(%arg0: i32) -> (i32, i32) {
    %c0_i32 = arith.constant 0 : i32
    %c0_i32_0 = arith.constant 0 : i32
    return %arg0, %c0_i32 : i32, i32
  }
  func.func @transform_12(%arg0: i32) -> (i32, i32) {
    %c0_i32 = arith.constant 0 : i32
    %c0_i32_0 = arith.constant 0 : i32
    return %arg0, %c0_i32 : i32, i32
  }
  func.func @transform_13(%arg0: i32) -> (i32, i32) {
    %c0_i32 = arith.constant 0 : i32
    %c0_i32_0 = arith.constant 0 : i32
    return %arg0, %c0_i32 : i32, i32
  }
}

</mosaic_0001>

<llo_original>
// kernel: sub.0
$region0: #{sub.0}
  #allocation0 [shape = 's32[1]{0}', space=sflag, size = 0x4, scoped, tag = 'scoped memory for sub.0']
  %s0 = inlined_call_operand.vmem [shape: f32[2,1024], index: 0, kind: input, shape index: {}]
  %s1 = inlined_call_operand.vmem [shape: f32[2,1024], index: 1, kind: input, shape index: {}]
  %s2 = inlined_call_operand.vmem [shape: f32[2,1024], index: 2, kind: output, shape index: {}]
  %v3 = vld [vmem:[%s0] sm:$0x3]
  %v4 = vld [vmem:[%s1] sm:$0x3]
  %5 = xla_tuple %v3, %v4
  %6 = xla_tuple %5
  %v7 = vsub.f32 %v3, %v4
  %8 = xla_tuple %v7
  %9 = vst [vmem:[%s2] sm:$0x3] %v7
  %s10 = scalar_lea.vmem %s0, 2
  %v11 = vld [vmem:[%s10] sm:$0x3]
  %s12 = scalar_lea.vmem %s1, 2
  %v13 = vld [vmem:[%s12] sm:$0x3]
  %14 = xla_tuple %v11, %v13
  %15 = xla_tuple %14
  %v16 = vsub.f32 %v11, %v13
  %17 = xla_tuple %v16
  %s18 = scalar_lea.vmem %s2, 2
  %19 = vst [vmem:[%s18] sm:$0x3] %v16
  %s20 = scalar_lea.vmem %s0, 4
  %v21 = vld [vmem:[%s20] sm:$0x3]
  %s22 = scalar_lea.vmem %s1, 4
  %v23 = vld [vmem:[%s22] sm:$0x3]
  %24 = xla_tuple %v21, %v23
  %25 = xla_tuple %24
  %v26 = vsub.f32 %v21, %v23
  %27 = xla_tuple %v26
  %s28 = scalar_lea.vmem %s2, 4
  %29 = vst [vmem:[%s28] sm:$0x3] %v26
  %s30 = scalar_lea.vmem %s0, 6
  %v31 = vld [vmem:[%s30] sm:$0x3]
  %s32 = scalar_lea.vmem %s1, 6
  %v33 = vld [vmem:[%s32] sm:$0x3]
  %34 = xla_tuple %v31, %v33
  %35 = xla_tuple %34
  %v36 = vsub.f32 %v31, %v33
  %37 = xla_tuple %v36
  %s38 = scalar_lea.vmem %s2, 6
  %39 = vst [vmem:[%s38] sm:$0x3] %v36
  %s40 = scalar_lea.vmem %s0, 8
  %v41 = vld [vmem:[%s40] sm:$0x3]
  %s42 = scalar_lea.vmem %s1, 8
  %v43 = vld [vmem:[%s42] sm:$0x3]
  %44 = xla_tuple %v41, %v43
  %45 = xla_tuple %44
  %v46 = vsub.f32 %v41, %v43
  %47 = xla_tuple %v46
  %s48 = scalar_lea.vmem %s2, 8
  %49 = vst [vmem:[%s48] sm:$0x3] %v46
  %s50 = scalar_lea.vmem %s0, 10
  %v51 = vld [vmem:[%s50] sm:$0x3]
  %s52 = scalar_lea.vmem %s1, 10
  %v53 = vld [vmem:[%s52] sm:$0x3]
  %54 = xla_tuple %v51, %v53
  %55 = xla_tuple %54
  %v56 = vsub.f32 %v51, %v53
  %57 = xla_tuple %v56
  %s58 = scalar_lea.vmem %s2, 10
  %59 = vst [vmem:[%s58] sm:$0x3] %v56
  %s60 = scalar_lea.vmem %s0, 12
  %v61 = vld [vmem:[%s60] sm:$0x3]
  %s62 = scalar_lea.vmem %s1, 12
  %v63 = vld [vmem:[%s62] sm:$0x3]
  %64 = xla_tuple %v61, %v63
  %65 = xla_tuple %64
  %v66 = vsub.f32 %v61, %v63
  %67 = xla_tuple %v66
  %s68 = scalar_lea.vmem %s2, 12
  %69 = vst [vmem:[%s68] sm:$0x3] %v66
  %s70 = scalar_lea.vmem %s0, 14
  %v71 = vld [vmem:[%s70] sm:$0x3]
  %s72 = scalar_lea.vmem %s1, 14
  %v73 = vld [vmem:[%s72] sm:$0x3]
  %74 = xla_tuple %v71, %v73
  %75 = xla_tuple %74
  %v76 = vsub.f32 %v71, %v73
  %77 = xla_tuple %v76
  %s78 = scalar_lea.vmem %s2, 14
  %79 = vst [vmem:[%s78] sm:$0x3] %v76

// kernel: _lambda_.1
$region0: #{_lambda_.1}
  #allocation0 [shape = 'u32[]', space=smem, size = 0x4, offset = 0x4, fixed_abs, tag = 'smem constant byte address 0x4 - core index']
  #allocation1 [shape = 'u32[144,128]{1,0:T(1,128)}', space=vmem, size = 0x12000, scoped, tag = 'internal scratch']
  %s0 = inlined_call_operand.vmem [shape: f32[2,1024], index: 0, kind: input, shape index: {}]
  %s1 = inlined_call_operand.vmem [shape: f32[2,1024], index: 1, kind: input, shape index: {}]
  %s2 = inlined_call_operand.vmem [shape: f32[2,1024], index: 2, kind: input, shape index: {}]
  %s3 = inlined_call_operand.vmem [shape: f32[2,1024], index: 3, kind: input, shape index: {}]
  %s4 = inlined_call_operand.vmem [shape: f32[2,1], index: 4, kind: output, shape index: {0}]
  %s5 = inlined_call_operand.vmem [shape: f32[2,1024], index: 5, kind: output, shape index: {1}]
  %6 = xla_tuple %s4, %s5
  %s7 = sld [smem:[#allocation0]]
  $region34: #{_lambda_.1} parent=0
    _
  %s9 = ssub.s32 1, %s7
  %s10 = scalar_select 0, %s9, %s7
  // Predicated region
  $region2: #{_lambda_.1} parent=0 // pred_check
    _
  $region3: #{_lambda_.1} parent=0 // pred_check_branch
    %12 = sbr.rel (0) target = $region5
  $region4: #{_lambda_.1} parent=0 // pred_region
    _
  $region5: #{_lambda_.1} parent=0 // pred_fallthru
    _
  // Predicated region
  $region6: #{_lambda_.1} parent=0 // pred_check
    _
  $region7: #{_lambda_.1} parent=0 // pred_check_branch
    %14 = sbr.rel (0) target = $region9
  $region8: #{_lambda_.1} parent=0 // pred_region
    _
  $region9: #{_lambda_.1} parent=0 // pred_fallthru
    _
  // Predicated region
  $region10: #{_lambda_.1} parent=0 // pred_check
    _
  $region11: #{_lambda_.1} parent=0 // pred_check_branch
    %16 = sbr.rel (0) target = $region13
  $region12: #{_lambda_.1} parent=0 // pred_region
    _
  $region13: #{_lambda_.1} parent=0 // pred_fallthru
    _
  // Predicated region
  $region14: #{_lambda_.1} parent=0 // pred_check
    _
  $region15: #{_lambda_.1} parent=0 // pred_check_branch
    %18 = sbr.rel (0) target = $region17
  $region16: #{_lambda_.1} parent=0 // pred_region
    _
  $region17: #{_lambda_.1} parent=0 // pred_fallthru
    _
  %v19 = vld [vmem:[%s0] sm:$0xff]
  %v20 = vld [vmem:[%s0 + $0x8] sm:$0xff]
  %v21 = vld [vmem:[%s1] sm:$0xff]
  %v22 = vld [vmem:[%s1 + $0x8] sm:$0xff]
  %v23 = vld [vmem:[%s2] sm:$0xff]
  %v24 = vld [vmem:[%s2 + $0x8] sm:$0xff]
  %v25 = vld [vmem:[%s3] sm:$0xff]
  %v26 = vld [vmem:[%s3 + $0x8] sm:$0xff]
  %v27 = vmul.f32 %v19, %v25
  %v28 = vmul.f32 %v20, %v26
  %v29 = vmul.f32 %v19, 2.0
  %v30 = vmul.f32 %v20, 2.0
  %v31 = vsub.f32 %v29, %v21
  %v32 = vsub.f32 %v30, %v22
  %v33 = vmul.f32 %v31, 0.5
  %v34 = vmul.f32 %v32, 0.5
  %v35 = vsub.f32 %v23, %v25
  %v36 = vsub.f32 %v24, %v26
  %v37 = vmul.f32 %v33, %v35
  %v38 = vmul.f32 %v34, %v36
  %v39 = vadd.f32 %v27, %v37
  %v40 = vadd.f32 %v28, %v38
  %v43 = vcombine.high %v39, %v39
  %v45 = vunpack.c.l.s4 1983009808
  %v46 = vunpack.c.0.s8 %v45
  %v47 = vlaneseq
  %v48 = vshrl.u32 %v47, 7
  %v49 = vsub.s32 %v46, %v48
  %v50 = vrot.slane %v39, %v49
  %v52 = vunpack.c.l.s4 1983009808
  %v53 = vunpack.c.0.s8 %v52
  %v54 = vlaneseq
  %v55 = vshrl.u32 %v54, 7
  %v56 = vsub.s32 %v53, %v55
  %v57 = vrot.slane %v43, %v56
  %v58 = vcombine.high %v50, %v50
  %v59 = vcombine.high %v57, %v57
  %v60 = vcombine.high %v40, %v40
  %v62 = vunpack.c.l.s4 1983009808
  %v63 = vunpack.c.0.s8 %v62
  %v64 = vlaneseq
  %v65 = vshrl.u32 %v64, 7
  %v66 = vsub.s32 %v63, %v65
  %v67 = vrot.slane %v40, %v66
  %v69 = vunpack.c.l.s4 1983009808
  %v70 = vunpack.c.0.s8 %v69
  %v71 = vlaneseq
  %v72 = vshrl.u32 %v71, 7
  %v73 = vsub.s32 %v70, %v72
  %v74 = vrot.slane %v60, %v73
  %v75 = vcombine.high %v67, %v67
  %v76 = vcombine.high %v74, %v74
  %vm85 = vcmask 1041408
  %v86 = vsel %vm85, %v50, 0.0
  %v87 = vsel %vm85, %v58, 0.0
  %v88 = vadd.f32 %v86, %v87
  %v89 = vsel %vm85, %v57, 0.0
  %v90 = vadd.f32 %v88, %v89
  %v91 = vsel %vm85, %v59, 0.0
  %v92 = vadd.f32 %v90, %v91
  %v93 = vsel %vm85, %v67, 0.0
  %v94 = vadd.f32 %v92, %v93
  %v95 = vsel %vm85, %v75, 0.0
  %v96 = vadd.f32 %v94, %v95
  %v97 = vsel %vm85, %v74, 0.0
  %v98 = vadd.f32 %v96, %v97
  %v99 = vsel %vm85, %v76, 0.0
  %v100 = vadd.f32 %v98, %v99
  %101 = vadd.xlane.f32.xlu0 %v100
  %v102 = vpop.xlane.xlu0 %101
  %vm103 = vcmask 1024
  %104 = vst.msk [vmem:[%s4] sm:$0x3] %vm103, %v102
  %v105 = vsub.f32 %v19, %v21
  %v106 = vsub.f32 %v20, %v22
  %107 = vst [vmem:[%s5] sm:$0xff] %v105
  %108 = vst [vmem:[%s5 + $0x8] sm:$0xff] %v106
  // Predicated region
  $region18: #{_lambda_.1} parent=0 // pred_check
    _
  $region19: #{_lambda_.1} parent=0 // pred_check_branch
    %110 = sbr.rel (0) target = $region21
  $region20: #{_lambda_.1} parent=0 // pred_region
    _
  $region21: #{_lambda_.1} parent=0 // pred_fallthru
    _
  // Predicated region
  $region22: #{_lambda_.1} parent=0 // pred_check
    _
  $region23: #{_lambda_.1} parent=0 // pred_check_branch
    %112 = sbr.rel (0) target = $region25
  $region24: #{_lambda_.1} parent=0 // pred_region
    _
  $region25: #{_lambda_.1} parent=0 // pred_fallthru
    _
  // Predicated region
  $region26: #{_lambda_.1} parent=0 // pred_check
    _
  $region27: #{_lambda_.1} parent=0 // pred_check_branch
    %114 = sbr.rel (0) target = $region29
  $region28: #{_lambda_.1} parent=0 // pred_region
    _
  $region29: #{_lambda_.1} parent=0 // pred_fallthru
    _
  // Predicated region
  $region30: #{_lambda_.1} parent=0 // pred_check
    _
  $region31: #{_lambda_.1} parent=0 // pred_check_branch
    %116 = sbr.rel (0) target = $region33
  $region32: #{_lambda_.1} parent=0 // pred_region
    _
  $region33: #{_lambda_.1} parent=0 // pred_fallthru
    _

// kernel: branch_1_fun.12
$region0: #{branch_1_fun.12}
  #allocation0 [shape = 'u32[]', space=smem, size = 0x4, offset = 0x4, fixed_abs, tag = 'smem constant byte address 0x4 - core index']
  #allocation1 [shape = 'u32[144,128]{1,0:T(1,128)}', space=vmem, size = 0x12000, scoped, tag = 'internal scratch']
  %s0 = inlined_call_operand.vmem [shape: f32[2,1024], index: 0, kind: input, shape index: {}]
  %s1 = inlined_call_operand.vmem [shape: f32[2,1024], index: 1, kind: output, shape index: {}]
  %s2 = sld [smem:[#allocation0]]
  $region14: #{branch_1_fun.12} parent=0
    _
  %s4 = ssub.s32 1, %s2
  %s5 = scalar_select 0, %s4, %s2
  // Predicated region
  $region2: #{branch_1_fun.12} parent=0 // pred_check
    _
  $region3: #{branch_1_fun.12} parent=0 // pred_check_branch
    %7 = sbr.rel (0) target = $region5
  $region4: #{branch_1_fun.12} parent=0 // pred_region
    _
  $region5: #{branch_1_fun.12} parent=0 // pred_fallthru
    _
  %v8 = vld [vmem:[%s0] sm:$0xff]
  %v9 = vld [vmem:[%s0 + $0x8] sm:$0xff]
  %v10 = vmul.f32 %v8, %v8
  %v11 = vmul.f32 %v9, %v9
  %v14 = vcombine.high %v10, %v10
  %v16 = vunpack.c.l.s4 1983009808
  %v17 = vunpack.c.0.s8 %v16
  %v18 = vlaneseq
  %v19 = vshrl.u32 %v18, 7
  %v20 = vsub.s32 %v17, %v19
  %v21 = vrot.slane %v10, %v20
  %v23 = vunpack.c.l.s4 1983009808
  %v24 = vunpack.c.0.s8 %v23
  %v25 = vlaneseq
  %v26 = vshrl.u32 %v25, 7
  %v27 = vsub.s32 %v24, %v26
  %v28 = vrot.slane %v14, %v27
  %v29 = vcombine.high %v21, %v21
  %v30 = vcombine.high %v28, %v28
  %v31 = vcombine.high %v11, %v11
  %v33 = vunpack.c.l.s4 1983009808
  %v34 = vunpack.c.0.s8 %v33
  %v35 = vlaneseq
  %v36 = vshrl.u32 %v35, 7
  %v37 = vsub.s32 %v34, %v36
  %v38 = vrot.slane %v11, %v37
  %v40 = vunpack.c.l.s4 1983009808
  %v41 = vunpack.c.0.s8 %v40
  %v42 = vlaneseq
  %v43 = vshrl.u32 %v42, 7
  %v44 = vsub.s32 %v41, %v43
  %v45 = vrot.slane %v31, %v44
  %v46 = vcombine.high %v38, %v38
  %v47 = vcombine.high %v45, %v45
  %vm56 = vcmask 1041408
  %v57 = vsel %vm56, %v21, 0.0
  %v58 = vsel %vm56, %v29, 0.0
  %v59 = vadd.f32 %v57, %v58
  %v60 = vsel %vm56, %v28, 0.0
  %v61 = vadd.f32 %v59, %v60
  %v62 = vsel %vm56, %v30, 0.0
  %v63 = vadd.f32 %v61, %v62
  %v64 = vsel %vm56, %v38, 0.0
  %v65 = vadd.f32 %v63, %v64
  %v66 = vsel %vm56, %v46, 0.0
  %v67 = vadd.f32 %v65, %v66
  %v68 = vsel %vm56, %v45, 0.0
  %v69 = vadd.f32 %v67, %v68
  %v70 = vsel %vm56, %v47, 0.0
  %v71 = vadd.f32 %v69, %v70
  %72 = vadd.xlane.f32.xlu0 %v71
  %v73 = vpop.xlane.xlu0 %72
  %v74 = vmax.f32 %v73, 1e-30
  %v75 = vrsqrt.pop %v74
  %v78 = vunpack.c.l.s4 269488144
  %v79 = vunpack.c.0.s8 %v78
  %v80 = vlaneseq
  %v81 = vshrl.u32 %v80, 7
  %v82 = vsub.s32 %v79, %v81
  %v83 = vrot.slane %v75, %v82
  %v85 = vmul.f32 %v8, %v83
  %v86 = vmul.f32 %v9, %v83
  %87 = vst [vmem:[%s1] sm:$0xff] %v85
  %88 = vst [vmem:[%s1 + $0x8] sm:$0xff] %v86
  // Predicated region
  $region6: #{branch_1_fun.12} parent=0 // pred_check
    _
  $region7: #{branch_1_fun.12} parent=0 // pred_check_branch
    %90 = sbr.rel (0) target = $region9
  $region8: #{branch_1_fun.12} parent=0 // pred_region
    _
  $region9: #{branch_1_fun.12} parent=0 // pred_fallthru
    _
  // Predicated region
  $region10: #{branch_1_fun.12} parent=0 // pred_check
    _
  $region11: #{branch_1_fun.12} parent=0 // pred_check_branch
    %92 = sbr.rel (0) target = $region13
  $region12: #{branch_1_fun.12} parent=0 // pred_region
    _
  $region13: #{branch_1_fun.12} parent=0 // pred_fallthru
    _

// kernel: branch_1_fun.8
$region0: #{branch_1_fun.8}
  #allocation0 [shape = 'u32[]', space=smem, size = 0x4, offset = 0x4, fixed_abs, tag = 'smem constant byte address 0x4 - core index']
  #allocation1 [shape = 'u32[144,128]{1,0:T(1,128)}', space=vmem, size = 0x12000, scoped, tag = 'internal scratch']
  %s0 = inlined_call_operand.vmem [shape: f32[2,1024], index: 0, kind: input, shape index: {}]
  %s1 = inlined_call_operand.vmem [shape: f32[2,1024], index: 1, kind: input, shape index: {}]
  %s2 = inlined_call_operand.vmem [shape: f32[2,1024], index: 2, kind: input, shape index: {}]
  %s3 = inlined_call_operand.vmem [shape: f32[2,1024], index: 3, kind: output, shape index: {}]
  %s4 = sld [smem:[#allocation0]]
  $region22: #{branch_1_fun.8} parent=0
    _
  %s6 = ssub.s32 1, %s4
  %s7 = scalar_select 0, %s6, %s4
  // Predicated region
  $region2: #{branch_1_fun.8} parent=0 // pred_check
    _
  $region3: #{branch_1_fun.8} parent=0 // pred_check_branch
    %9 = sbr.rel (0) target = $region5
  $region4: #{branch_1_fun.8} parent=0 // pred_region
    _
  $region5: #{branch_1_fun.8} parent=0 // pred_fallthru
    _
  // Predicated region
  $region6: #{branch_1_fun.8} parent=0 // pred_check
    _
  $region7: #{branch_1_fun.8} parent=0 // pred_check_branch
    %11 = sbr.rel (0) target = $region9
  $region8: #{branch_1_fun.8} parent=0 // pred_region
    _
  $region9: #{branch_1_fun.8} parent=0 // pred_fallthru
    _
  // Predicated region
  $region10: #{branch_1_fun.8} parent=0 // pred_check
    _
  $region11: #{branch_1_fun.8} parent=0 // pred_check_branch
    %13 = sbr.rel (0) target = $region13
  $region12: #{branch_1_fun.8} parent=0 // pred_region
    _
  $region13: #{branch_1_fun.8} parent=0 // pred_fallthru
    _
  %v14 = vld [vmem:[%s0] sm:$0xff]
  %v15 = vld [vmem:[%s0 + $0x8] sm:$0xff]
  %v16 = vld [vmem:[%s2] sm:$0xff]
  %v17 = vld [vmem:[%s2 + $0x8] sm:$0xff]
  %v18 = vmul.f32 %v14, %v16
  %v19 = vmul.f32 %v15, %v17
  %v22 = vcombine.high %v18, %v18
  %v24 = vunpack.c.l.s4 1983009808
  %v25 = vunpack.c.0.s8 %v24
  %v26 = vlaneseq
  %v27 = vshrl.u32 %v26, 7
  %v28 = vsub.s32 %v25, %v27
  %v29 = vrot.slane %v18, %v28
  %v31 = vunpack.c.l.s4 1983009808
  %v32 = vunpack.c.0.s8 %v31
  %v33 = vlaneseq
  %v34 = vshrl.u32 %v33, 7
  %v35 = vsub.s32 %v32, %v34
  %v36 = vrot.slane %v22, %v35
  %v37 = vcombine.high %v29, %v29
  %v38 = vcombine.high %v36, %v36
  %v39 = vcombine.high %v19, %v19
  %v41 = vunpack.c.l.s4 1983009808
  %v42 = vunpack.c.0.s8 %v41
  %v43 = vlaneseq
  %v44 = vshrl.u32 %v43, 7
  %v45 = vsub.s32 %v42, %v44
  %v46 = vrot.slane %v19, %v45
  %v48 = vunpack.c.l.s4 1983009808
  %v49 = vunpack.c.0.s8 %v48
  %v50 = vlaneseq
  %v51 = vshrl.u32 %v50, 7
  %v52 = vsub.s32 %v49, %v51
  %v53 = vrot.slane %v39, %v52
  %v54 = vcombine.high %v46, %v46
  %v55 = vcombine.high %v53, %v53
  %vm64 = vcmask 1041408
  %v65 = vsel %vm64, %v29, 0.0
  %v66 = vsel %vm64, %v37, 0.0
  %v67 = vadd.f32 %v65, %v66
  %v68 = vsel %vm64, %v36, 0.0
  %v69 = vadd.f32 %v67, %v68
  %v70 = vsel %vm64, %v38, 0.0
  %v71 = vadd.f32 %v69, %v70
  %v72 = vsel %vm64, %v46, 0.0
  %v73 = vadd.f32 %v71, %v72
  %v74 = vsel %vm64, %v54, 0.0
  %v75 = vadd.f32 %v73, %v74
  %v76 = vsel %vm64, %v53, 0.0
  %v77 = vadd.f32 %v75, %v76
  %v78 = vsel %vm64, %v55, 0.0
  %v79 = vadd.f32 %v77, %v78
  %80 = vadd.xlane.f32.xlu0 %v79
  %v81 = vpop.xlane.xlu0 %80
  %v82 = vld [vmem:[%s1] sm:$0xff]
  %v83 = vld [vmem:[%s1 + $0x8] sm:$0xff]
  %v86 = vcombine.high %v82, %v82
  %v88 = vunpack.c.l.s4 1983009808
  %v89 = vunpack.c.0.s8 %v88
  %v90 = vlaneseq
  %v91 = vshrl.u32 %v90, 7
  %v92 = vsub.s32 %v89, %v91
  %v93 = vrot.slane %v82, %v92
  %v95 = vunpack.c.l.s4 1983009808
  %v96 = vunpack.c.0.s8 %v95
  %v97 = vlaneseq
  %v98 = vshrl.u32 %v97, 7
  %v99 = vsub.s32 %v96, %v98
  %v100 = vrot.slane %v86, %v99
  %v101 = vcombine.high %v93, %v93
  %v102 = vcombine.high %v100, %v100
  %v103 = vcombine.high %v83, %v83
  %v105 = vunpack.c.l.s4 1983009808
  %v106 = vunpack.c.0.s8 %v105
  %v107 = vlaneseq
  %v108 = vshrl.u32 %v107, 7
  %v109 = vsub.s32 %v106, %v108
  %v110 = vrot.slane %v83, %v109
  %v112 = vunpack.c.l.s4 1983009808
  %v113 = vunpack.c.0.s8 %v112
  %v114 = vlaneseq
  %v115 = vshrl.u32 %v114, 7
  %v116 = vsub.s32 %v113, %v115
  %v117 = vrot.slane %v103, %v116
  %v118 = vcombine.high %v110, %v110
  %v119 = vcombine.high %v117, %v117
  %v128 = vmul.f32 %v81, %v93
  %v129 = vmul.f32 %v81, %v101
  %v130 = vmul.f32 %v81, %v100
  %v131 = vmul.f32 %v81, %v102
  %v132 = vmul.f32 %v81, %v110
  %v133 = vmul.f32 %v81, %v118
  %v134 = vmul.f32 %v81, %v117
  %v135 = vmul.f32 %v81, %v119
  %v144 = vcombine.low %v128, %v129
  %v145 = vcombine.low %v130, %v131
  %v147 = vunpack.c.l.s4 1983009808
  %v148 = vunpack.c.0.s8 %v147
  %v149 = vlaneseq
  %v150 = vshrl.u32 %v149, 7
  %v151 = vsub.s32 %v148, %v150
  %v152 = vrot.slane %v144, %v151
  %v154 = vunpack.c.l.s4 1983009808
  %v155 = vunpack.c.0.s8 %v154
  %v156 = vlaneseq
  %v157 = vshrl.u32 %v156, 7
  %v158 = vsub.s32 %v155, %v157
  %v159 = vrot.slane %v145, %v158
  %v160 = vcombine.low %v152, %v159
  %v161 = vcombine.low %v132, %v133
  %v162 = vcombine.low %v134, %v135
  %v164 = vunpack.c.l.s4 1983009808
  %v165 = vunpack.c.0.s8 %v164
  %v166 = vlaneseq
  %v167 = vshrl.u32 %v166, 7
  %v168 = vsub.s32 %v165, %v167
  %v169 = vrot.slane %v161, %v168
  %v171 = vunpack.c.l.s4 1983009808
  %v172 = vunpack.c.0.s8 %v171
  %v173 = vlaneseq
  %v174 = vshrl.u32 %v173, 7
  %v175 = vsub.s32 %v172, %v174
  %v176 = vrot.slane %v162, %v175
  %v177 = vcombine.low %v169, %v176
  %v180 = vsub.f32 %v14, %v160
  %v181 = vsub.f32 %v15, %v177
  %v182 = vmul.f32 %v180, %v180
  %v183 = vmul.f32 %v181, %v181
  %v186 = vcombine.high %v182, %v182
  %v188 = vunpack.c.l.s4 1983009808
  %v189 = vunpack.c.0.s8 %v188
  %v190 = vlaneseq
  %v191 = vshrl.u32 %v190, 7
  %v192 = vsub.s32 %v189, %v191
  %v193 = vrot.slane %v182, %v192
  %v195 = vunpack.c.l.s4 1983009808
  %v196 = vunpack.c.0.s8 %v195
  %v197 = vlaneseq
  %v198 = vshrl.u32 %v197, 7
  %v199 = vsub.s32 %v196, %v198
  %v200 = vrot.slane %v186, %v199
  %v201 = vcombine.high %v193, %v193
  %v202 = vcombine.high %v200, %v200
  %v203 = vcombine.high %v183, %v183
  %v205 = vunpack.c.l.s4 1983009808
  %v206 = vunpack.c.0.s8 %v205
  %v207 = vlaneseq
  %v208 = vshrl.u32 %v207, 7
  %v209 = vsub.s32 %v206, %v208
  %v210 = vrot.slane %v183, %v209
  %v212 = vunpack.c.l.s4 1983009808
  %v213 = vunpack.c.0.s8 %v212
  %v214 = vlaneseq
  %v215 = vshrl.u32 %v214, 7
  %v216 = vsub.s32 %v213, %v215
  %v217 = vrot.slane %v203, %v216
  %v218 = vcombine.high %v210, %v210
  %v219 = vcombine.high %v217, %v217
  %v228 = vsel %vm64, %v193, 0.0
  %v229 = vsel %vm64, %v201, 0.0
  %v230 = vadd.f32 %v228, %v229
  %v231 = vsel %vm64, %v200, 0.0
  %v232 = vadd.f32 %v230, %v231
  %v233 = vsel %vm64, %v202, 0.0
  %v234 = vadd.f32 %v232, %v233
  %v235 = vsel %vm64, %v210, 0.0
  %v236 = vadd.f32 %v234, %v235
  %v237 = vsel %vm64, %v218, 0.0
  %v238 = vadd.f32 %v236, %v237
  %v239 = vsel %vm64, %v217, 0.0
  %v240 = vadd.f32 %v238, %v239
  %v241 = vsel %vm64, %v219, 0.0
  %v242 = vadd.f32 %v240, %v241
  %243 = vadd.xlane.f32.xlu0 %v242
  %v244 = vpop.xlane.xlu0 %243
  %v245 = vmax.f32 %v244, 1e-30
  %v246 = vrsqrt.pop %v245
  %v249 = vunpack.c.l.s4 269488144
  %v250 = vunpack.c.0.s8 %v249
  %v251 = vlaneseq
  %v252 = vshrl.u32 %v251, 7
  %v253 = vsub.s32 %v250, %v252
  %v254 = vrot.slane %v246, %v253
  %v256 = vmul.f32 %v180, %v254
  %v257 = vmul.f32 %v181, %v254
  %258 = vst [vmem:[%s3] sm:$0xff] %v256
  %259 = vst [vmem:[%s3 + $0x8] sm:$0xff] %v257
  // Predicated region
  $region14: #{branch_1_fun.8} parent=0 // pred_check
    _
  $region15: #{branch_1_fun.8} parent=0 // pred_check_branch
    %261 = sbr.rel (0) target = $region17
  $region16: #{branch_1_fun.8} parent=0 // pred_region
    _
  $region17: #{branch_1_fun.8} parent=0 // pred_fallthru
    _
  // Predicated region
  $region18: #{branch_1_fun.8} parent=0 // pred_check
    _
  $region19: #{branch_1_fun.8} parent=0 // pred_check_branch
    %263 = sbr.rel (0) target = $region21
  $region20: #{branch_1_fun.8} parent=0 // pred_region
    _
  $region21: #{branch_1_fun.8} parent=0 // pred_fallthru
    _

// kernel: branch_1_fun.13
$region0: #{branch_1_fun.13}
  #allocation0 [shape = 'u32[]', space=smem, size = 0x4, offset = 0x4, fixed_abs, tag = 'smem constant byte address 0x4 - core index']
  #allocation1 [shape = 'u32[144,128]{1,0:T(1,128)}', space=vmem, size = 0x12000, scoped, tag = 'internal scratch']
  %s0 = inlined_call_operand.vmem [shape: f32[2,1024], index: 0, kind: input, shape index: {}]
  %s1 = inlined_call_operand.vmem [shape: f32[2,1024], index: 1, kind: input, shape index: {}]
  %s2 = inlined_call_operand.vmem [shape: f32[2,9], index: 2, kind: input, shape index: {}]
  %s3 = inlined_call_operand.vmem [shape: f32[2,3], index: 3, kind: input, shape index: {}]
  %s4 = inlined_call_operand.vmem [shape: f32[2,1024], index: 4, kind: input, shape index: {}]
  %s5 = inlined_call_operand.vmem [shape: f32[2,1024], index: 5, kind: input, shape index: {}]
  %s6 = inlined_call_operand.vmem [shape: f32[2,1], index: 6, kind: output, shape index: {0}]
  %s7 = inlined_call_operand.hbm [shape: f32[2,1024], index: 7, kind: output, shape index: {1}]
  %s8 = inlined_call_operand.hbm [shape: f32[2,9], index: 8, kind: output, shape index: {2}]
  %s9 = inlined_call_operand.hbm [shape: f32[2,3], index: 9, kind: output, shape index: {3}]
  %10 = xla_tuple %s6, %s7, %s8, %s9
  %s11 = sld [smem:[#allocation0]]
  $region58: #{branch_1_fun.13} parent=0
    _
  %s13 = ssub.s32 1, %s11
  %s14 = scalar_select 0, %s13, %s11
  $region1: #{branch_1_fun.13} parent=0
    #allocation2 [shape = 'u8[8192]{0}', space=vmem, size = 0x2000, scoped, tag = 'output window, operand 1, single buffered']
    #allocation3 [shape = 's32[1]{0}', space=sflag, size = 0x4, scoped, tag = 'scoped memory for branch_1_fun.13']
    #allocation4 [shape = 'u8[1024]{0}', space=vmem, size = 0x400, scoped, tag = 'output window, operand 2, single buffered']
    #allocation5 [shape = 's32[1]{0}', space=sflag, size = 0x4, scoped, tag = 'scoped memory for branch_1_fun.13']
    #allocation6 [shape = 'u8[1024]{0}', space=vmem, size = 0x400, scoped, tag = 'output window, operand 3, single buffered']
    %15 = vsyncpa [#allocation3], 0
    %16 = vsyncpa [#allocation5], 0
    // Predicated region
    $region2: #{branch_1_fun.13} parent=1 // pred_check
      _
    $region3: #{branch_1_fun.13} parent=1 // pred_check_branch
      %18 = sbr.rel (0) target = $region5
    $region4: #{branch_1_fun.13} parent=1 // pred_region
      _
    $region5: #{branch_1_fun.13} parent=1 // pred_fallthru
      _
    // Predicated region
    $region6: #{branch_1_fun.13} parent=1 // pred_check
      _
    $region7: #{branch_1_fun.13} parent=1 // pred_check_branch
      %20 = sbr.rel (0) target = $region9
    $region8: #{branch_1_fun.13} parent=1 // pred_region
      _
    $region9: #{branch_1_fun.13} parent=1 // pred_fallthru
      _
    // Predicated region
    $region10: #{branch_1_fun.13} parent=1 // pred_check
      _
    $region11: #{branch_1_fun.13} parent=1 // pred_check_branch
      %22 = sbr.rel (0) target = $region13
    $region12: #{branch_1_fun.13} parent=1 // pred_region
      _
    $region13: #{branch_1_fun.13} parent=1 // pred_fallthru
      _
    // Predicated region
    $region14: #{branch_1_fun.13} parent=1 // pred_check
      _
    $region15: #{branch_1_fun.13} parent=1 // pred_check_branch
      %24 = sbr.rel (0) target = $region17
    $region16: #{branch_1_fun.13} parent=1 // pred_region
      _
    $region17: #{branch_1_fun.13} parent=1 // pred_fallthru
      _
    // Predicated region
    $region18: #{branch_1_fun.13} parent=1 // pred_check
      _
    $region19: #{branch_1_fun.13} parent=1 // pred_check_branch
      %26 = sbr.rel (0) target = $region21
    $region20: #{branch_1_fun.13} parent=1 // pred_region
      _
    $region21: #{branch_1_fun.13} parent=1 // pred_fallthru
      _
    // Predicated region
    $region22: #{branch_1_fun.13} parent=1 // pred_check
      _
    $region23: #{branch_1_fun.13} parent=1 // pred_check_branch
      %28 = sbr.rel (0) target = $region25
    $region24: #{branch_1_fun.13} parent=1 // pred_region
      _
    $region25: #{branch_1_fun.13} parent=1 // pred_fallthru
      _
    %v29 = vld [vmem:[%s0] sm:$0xff]
    %v30 = vld [vmem:[%s0 + $0x8] sm:$0xff]
    %v31 = vld [vmem:[%s1] sm:$0xff]
    %v32 = vld [vmem:[%s1 + $0x8] sm:$0xff]
    %v33 = vld [vmem:[%s4] sm:$0xff]
    %v34 = vld [vmem:[%s4 + $0x8] sm:$0xff]
    %v35 = vmul.f32 %v29, %v33
    %v36 = vmul.f32 %v30, %v34
    %v39 = vcombine.high %v35, %v35
    %v41 = vunpack.c.l.s4 1983009808
    %v42 = vunpack.c.0.s8 %v41
    %v43 = vlaneseq
    %v44 = vshrl.u32 %v43, 7
    %v45 = vsub.s32 %v42, %v44
    %v46 = vrot.slane %v35, %v45
    %v48 = vunpack.c.l.s4 1983009808
    %v49 = vunpack.c.0.s8 %v48
    %v50 = vlaneseq
    %v51 = vshrl.u32 %v50, 7
    %v52 = vsub.s32 %v49, %v51
    %v53 = vrot.slane %v39, %v52
    %v54 = vcombine.high %v46, %v46
    %v55 = vcombine.high %v53, %v53
    %v56 = vcombine.high %v36, %v36
    %v58 = vunpack.c.l.s4 1983009808
    %v59 = vunpack.c.0.s8 %v58
    %v60 = vlaneseq
    %v61 = vshrl.u32 %v60, 7
    %v62 = vsub.s32 %v59, %v61
    %v63 = vrot.slane %v36, %v62
    %v65 = vunpack.c.l.s4 1983009808
    %v66 = vunpack.c.0.s8 %v65
    %v67 = vlaneseq
    %v68 = vshrl.u32 %v67, 7
    %v69 = vsub.s32 %v66, %v68
    %v70 = vrot.slane %v56, %v69
    %v71 = vcombine.high %v63, %v63
    %v72 = vcombine.high %v70, %v70
    %vm81 = vcmask 1041408
    %v82 = vsel %vm81, %v46, 0.0
    %v83 = vsel %vm81, %v54, 0.0
    %v84 = vadd.f32 %v82, %v83
    %v85 = vsel %vm81, %v53, 0.0
    %v86 = vadd.f32 %v84, %v85
    %v87 = vsel %vm81, %v55, 0.0
    %v88 = vadd.f32 %v86, %v87
    %v89 = vsel %vm81, %v63, 0.0
    %v90 = vadd.f32 %v88, %v89
    %v91 = vsel %vm81, %v71, 0.0
    %v92 = vadd.f32 %v90, %v91
    %v93 = vsel %vm81, %v70, 0.0
    %v94 = vadd.f32 %v92, %v93
    %v95 = vsel %vm81, %v72, 0.0
    %v96 = vadd.f32 %v94, %v95
    %97 = vadd.xlane.f32.xlu0 %v96
    %v98 = vpop.xlane.xlu0 %97
    %v99 = vmul.f32 %v29, %v31
    %v100 = vmul.f32 %v30, %v32
    %v103 = vcombine.high %v99, %v99
    %v105 = vunpack.c.l.s4 1983009808
    %v106 = vunpack.c.0.s8 %v105
    %v107 = vlaneseq
    %v108 = vshrl.u32 %v107, 7
    %v109 = vsub.s32 %v106, %v108
    %v110 = vrot.slane %v99, %v109
    %v112 = vunpack.c.l.s4 1983009808
    %v113 = vunpack.c.0.s8 %v112
    %v114 = vlaneseq
    %v115 = vshrl.u32 %v114, 7
    %v116 = vsub.s32 %v113, %v115
    %v117 = vrot.slane %v103, %v116
    %v118 = vcombine.high %v110, %v110
    %v119 = vcombine.high %v117, %v117
    %v120 = vcombine.high %v100, %v100
    %v122 = vunpack.c.l.s4 1983009808
    %v123 = vunpack.c.0.s8 %v122
    %v124 = vlaneseq
    %v125 = vshrl.u32 %v124, 7
    %v126 = vsub.s32 %v123, %v125
    %v127 = vrot.slane %v100, %v126
    %v129 = vunpack.c.l.s4 1983009808
    %v130 = vunpack.c.0.s8 %v129
    %v131 = vlaneseq
    %v132 = vshrl.u32 %v131, 7
    %v133 = vsub.s32 %v130, %v132
    %v134 = vrot.slane %v120, %v133
    %v135 = vcombine.high %v127, %v127
    %v136 = vcombine.high %v134, %v134
    %v145 = vsel %vm81, %v110, 0.0
    %v146 = vsel %vm81, %v118, 0.0
    %v147 = vadd.f32 %v145, %v146
    %v148 = vsel %vm81, %v117, 0.0
    %v149 = vadd.f32 %v147, %v148
    %v150 = vsel %vm81, %v119, 0.0
    %v151 = vadd.f32 %v149, %v150
    %v152 = vsel %vm81, %v127, 0.0
    %v153 = vadd.f32 %v151, %v152
    %v154 = vsel %vm81, %v135, 0.0
    %v155 = vadd.f32 %v153, %v154
    %v156 = vsel %vm81, %v134, 0.0
    %v157 = vadd.f32 %v155, %v156
    %v158 = vsel %vm81, %v136, 0.0
    %v159 = vadd.f32 %v157, %v158
    %160 = vadd.xlane.f32.xlu0 %v159
    %v161 = vpop.xlane.xlu0 %160
    %v162 = vld [vmem:[%s2] sm:$0x3]
    %vm163 = vcmask 66560
    %164 = vst.msk [vmem:[#allocation4] sm:$0x3] %vm163, %v162
    %v165 = vld [vmem:[%s3] sm:$0x3]
    %vm166 = vcmask 17408
    %167 = vst.msk [vmem:[#allocation6] sm:$0x3] %vm166, %v165
    %vm168 = vcmask 1024
    %169 = vst.msk [vmem:[#allocation4] sm:$0x3] %vm168, %v98
    %170 = vst.msk [vmem:[#allocation4] sm:$0x3] %vm168, %v98
    %171 = vst.msk [vmem:[#allocation6] sm:$0x3] %vm168, %v161
    %v172 = vrcp.pop %v98
    %v173 = vmul.f32 1.0, %v172
    %v174 = vmul.f32 %v161, %v173
    %v177 = vcombine.high %v33, %v33
    %v179 = vunpack.c.l.s4 1983009808
    %v180 = vunpack.c.0.s8 %v179
    %v181 = vlaneseq
    %v182 = vshrl.u32 %v181, 7
    %v183 = vsub.s32 %v180, %v182
    %v184 = vrot.slane %v33, %v183
    %v186 = vunpack.c.l.s4 1983009808
    %v187 = vunpack.c.0.s8 %v186
    %v188 = vlaneseq
    %v189 = vshrl.u32 %v188, 7
    %v190 = vsub.s32 %v187, %v189
    %v191 = vrot.slane %v177, %v190
    %v192 = vcombine.high %v184, %v184
    %v193 = vcombine.high %v191, %v191
    %v194 = vcombine.high %v34, %v34
    %v196 = vunpack.c.l.s4 1983009808
    %v197 = vunpack.c.0.s8 %v196
    %v198 = vlaneseq
    %v199 = vshrl.u32 %v198, 7
    %v200 = vsub.s32 %v197, %v199
    %v201 = vrot.slane %v34, %v200
    %v203 = vunpack.c.l.s4 1983009808
    %v204 = vunpack.c.0.s8 %v203
    %v205 = vlaneseq
    %v206 = vshrl.u32 %v205, 7
    %v207 = vsub.s32 %v204, %v206
    %v208 = vrot.slane %v194, %v207
    %v209 = vcombine.high %v201, %v201
    %v210 = vcombine.high %v208, %v208
    %v219 = vmul.f32 %v174, %v184
    %v220 = vmul.f32 %v174, %v192
    %v221 = vmul.f32 %v174, %v191
    %v222 = vmul.f32 %v174, %v193
    %v223 = vmul.f32 %v174, %v201
    %v224 = vmul.f32 %v174, %v209
    %v225 = vmul.f32 %v174, %v208
    %v226 = vmul.f32 %v174, %v210
    %v227 = vld [vmem:[%s5] sm:$0xff]
    %v228 = vld [vmem:[%s5 + $0x8] sm:$0xff]
    %v231 = vcombine.high %v227, %v227
    %v233 = vunpack.c.l.s4 1983009808
    %v234 = vunpack.c.0.s8 %v233
    %v235 = vlaneseq
    %v236 = vshrl.u32 %v235, 7
    %v237 = vsub.s32 %v234, %v236
    %v238 = vrot.slane %v227, %v237
    %v240 = vunpack.c.l.s4 1983009808
    %v241 = vunpack.c.0.s8 %v240
    %v242 = vlaneseq
    %v243 = vshrl.u32 %v242, 7
    %v244 = vsub.s32 %v241, %v243
    %v245 = vrot.slane %v231, %v244
    %v246 = vcombine.high %v238, %v238
    %v247 = vcombine.high %v245, %v245
    %v248 = vcombine.high %v228, %v228
    %v250 = vunpack.c.l.s4 1983009808
    %v251 = vunpack.c.0.s8 %v250
    %v252 = vlaneseq
    %v253 = vshrl.u32 %v252, 7
    %v254 = vsub.s32 %v251, %v253
    %v255 = vrot.slane %v228, %v254
    %v257 = vunpack.c.l.s4 1983009808
    %v258 = vunpack.c.0.s8 %v257
    %v259 = vlaneseq
    %v260 = vshrl.u32 %v259, 7
    %v261 = vsub.s32 %v258, %v260
    %v262 = vrot.slane %v248, %v261
    %v263 = vcombine.high %v255, %v255
    %v264 = vcombine.high %v262, %v262
    %v273 = vmul.f32 %v174, %v238
    %v274 = vmul.f32 %v174, %v246
    %v275 = vmul.f32 %v174, %v245
    %v276 = vmul.f32 %v174, %v247
    %v277 = vmul.f32 %v174, %v255
    %v278 = vmul.f32 %v174, %v263
    %v279 = vmul.f32 %v174, %v262
    %v280 = vmul.f32 %v174, %v264
    %v283 = vcombine.high %v31, %v31
    %v285 = vunpack.c.l.s4 1983009808
    %v286 = vunpack.c.0.s8 %v285
    %v287 = vlaneseq
    %v288 = vshrl.u32 %v287, 7
    %v289 = vsub.s32 %v286, %v288
    %v290 = vrot.slane %v31, %v289
    %v292 = vunpack.c.l.s4 1983009808
    %v293 = vunpack.c.0.s8 %v292
    %v294 = vlaneseq
    %v295 = vshrl.u32 %v294, 7
    %v296 = vsub.s32 %v293, %v295
    %v297 = vrot.slane %v283, %v296
    %v298 = vcombine.high %v290, %v290
    %v299 = vcombine.high %v297, %v297
    %v300 = vcombine.high %v32, %v32
    %v302 = vunpack.c.l.s4 1983009808
    %v303 = vunpack.c.0.s8 %v302
    %v304 = vlaneseq
    %v305 = vshrl.u32 %v304, 7
    %v306 = vsub.s32 %v303, %v305
    %v307 = vrot.slane %v32, %v306
    %v309 = vunpack.c.l.s4 1983009808
    %v310 = vunpack.c.0.s8 %v309
    %v311 = vlaneseq
    %v312 = vshrl.u32 %v311, 7
    %v313 = vsub.s32 %v310, %v312
    %v314 = vrot.slane %v300, %v313
    %v315 = vcombine.high %v307, %v307
    %v316 = vcombine.high %v314, %v314
    %v325 = vsub.f32 %v219, %v290
    %v326 = vsub.f32 %v220, %v298
    %v327 = vsub.f32 %v221, %v297
    %v328 = vsub.f32 %v222, %v299
    %v329 = vsub.f32 %v223, %v307
    %v330 = vsub.f32 %v224, %v315
    %v331 = vsub.f32 %v225, %v314
    %v332 = vsub.f32 %v226, %v316
    %v333 = vmul.f32 %v325, %v325
    %v334 = vmul.f32 %v326, %v326
    %v335 = vmul.f32 %v327, %v327
    %v336 = vmul.f32 %v328, %v328
    %v337 = vmul.f32 %v329, %v329
    %v338 = vmul.f32 %v330, %v330
    %v339 = vmul.f32 %v331, %v331
    %v340 = vmul.f32 %v332, %v332
    %v341 = vsel %vm81, %v333, 0.0
    %v342 = vsel %vm81, %v334, 0.0
    %v343 = vadd.f32 %v341, %v342
    %v344 = vsel %vm81, %v335, 0.0
    %v345 = vadd.f32 %v343, %v344
    %v346 = vsel %vm81, %v336, 0.0
    %v347 = vadd.f32 %v345, %v346
    %v348 = vsel %vm81, %v337, 0.0
    %v349 = vadd.f32 %v347, %v348
    %v350 = vsel %vm81, %v338, 0.0
    %v351 = vadd.f32 %v349, %v350
    %v352 = vsel %vm81, %v339, 0.0
    %v353 = vadd.f32 %v351, %v352
    %v354 = vsel %vm81, %v340, 0.0
    %v355 = vadd.f32 %v353, %v354
    %356 = vadd.xlane.f32.xlu0 %v355
    %v357 = vpop.xlane.xlu0 %356
    %v358 = vmul.f32 %v31, %v31
    %v359 = vmul.f32 %v32, %v32
    %v362 = vcombine.high %v358, %v358
    %v364 = vunpack.c.l.s4 1983009808
    %v365 = vunpack.c.0.s8 %v364
    %v366 = vlaneseq
    %v367 = vshrl.u32 %v366, 7
    %v368 = vsub.s32 %v365, %v367
    %v369 = vrot.slane %v358, %v368
    %v371 = vunpack.c.l.s4 1983009808
    %v372 = vunpack.c.0.s8 %v371
    %v373 = vlaneseq
    %v374 = vshrl.u32 %v373, 7
    %v375 = vsub.s32 %v372, %v374
    %v376 = vrot.slane %v362, %v375
    %v377 = vcombine.high %v369, %v369
    %v378 = vcombine.high %v376, %v376
    %v379 = vcombine.high %v359, %v359
    %v381 = vunpack.c.l.s4 1983009808
    %v382 = vunpack.c.0.s8 %v381
    %v383 = vlaneseq
    %v384 = vshrl.u32 %v383, 7
    %v385 = vsub.s32 %v382, %v384
    %v386 = vrot.slane %v359, %v385
    %v388 = vunpack.c.l.s4 1983009808
    %v389 = vunpack.c.0.s8 %v388
    %v390 = vlaneseq
    %v391 = vshrl.u32 %v390, 7
    %v392 = vsub.s32 %v389, %v391
    %v393 = vrot.slane %v379, %v392
    %v394 = vcombine.high %v386, %v386
    %v395 = vcombine.high %v393, %v393
    %v404 = vsel %vm81, %v369, 0.0
    %v405 = vsel %vm81, %v377, 0.0
    %v406 = vadd.f32 %v404, %v405
    %v407 = vsel %vm81, %v376, 0.0
    %v408 = vadd.f32 %v406, %v407
    %v409 = vsel %vm81, %v378, 0.0
    %v410 = vadd.f32 %v408, %v409
    %v411 = vsel %vm81, %v386, 0.0
    %v412 = vadd.f32 %v410, %v411
    %v413 = vsel %vm81, %v394, 0.0
    %v414 = vadd.f32 %v412, %v413
    %v415 = vsel %vm81, %v393, 0.0
    %v416 = vadd.f32 %v414, %v415
    %v417 = vsel %vm81, %v395, 0.0
    %v418 = vadd.f32 %v416, %v417
    %419 = vadd.xlane.f32.xlu0 %v418
    %v420 = vpop.xlane.xlu0 %419
    %v421 = vrsqrt.pop %v357
    %v422 = vmul.f32 %v357, %v421
    %vm423 = vcmp.eq.f32.partialorder %v357, inf
    %v424 = vsel %vm423, %v357, %v422
    %vm425 = vcmp.eq.f32.partialorder %v357, 0.0
    %v426 = vand.u32 %v357, 2147483648
    %v427 = vsel %vm425, %v426, %v424
    %v428 = vrsqrt.pop %v420
    %v429 = vmul.f32 %v427, %v428
    %430 = vst.msk [vmem:[%s6] sm:$0x3] %vm168, %v429
    %v431 = vsub.f32 0.0, %v273
    %v432 = vsub.f32 0.0, %v274
    %v433 = vsub.f32 0.0, %v275
    %v434 = vsub.f32 0.0, %v276
    %v435 = vsub.f32 0.0, %v277
    %v436 = vsub.f32 0.0, %v278
    %v437 = vsub.f32 0.0, %v279
    %v438 = vsub.f32 0.0, %v280
    %v447 = vcombine.low %v431, %v432
    %v448 = vcombine.low %v433, %v434
    %v450 = vunpack.c.l.s4 1983009808
    %v451 = vunpack.c.0.s8 %v450
    %v452 = vlaneseq
    %v453 = vshrl.u32 %v452, 7
    %v454 = vsub.s32 %v451, %v453
    %v455 = vrot.slane %v447, %v454
    %v457 = vunpack.c.l.s4 1983009808
    %v458 = vunpack.c.0.s8 %v457
    %v459 = vlaneseq
    %v460 = vshrl.u32 %v459, 7
    %v461 = vsub.s32 %v458, %v460
    %v462 = vrot.slane %v448, %v461
    %v463 = vcombine.low %v455, %v462
    %v464 = vcombine.low %v435, %v436
    %v465 = vcombine.low %v437, %v438
    %v467 = vunpack.c.l.s4 1983009808
    %v468 = vunpack.c.0.s8 %v467
    %v469 = vlaneseq
    %v470 = vshrl.u32 %v469, 7
    %v471 = vsub.s32 %v468, %v470
    %v472 = vrot.slane %v464, %v471
    %v474 = vunpack.c.l.s4 1983009808
    %v475 = vunpack.c.0.s8 %v474
    %v476 = vlaneseq
    %v477 = vshrl.u32 %v476, 7
    %v478 = vsub.s32 %v475, %v477
    %v479 = vrot.slane %v465, %v478
    %v480 = vcombine.low %v472, %v479
    %483 = vst [vmem:[#allocation2] sm:$0xff] %v463
    %484 = vst [vmem:[#allocation2 + $0x8] sm:$0xff] %v480
    // Predicated region
    $region26: #{branch_1_fun.13} parent=1 // pred_check
      _
    $region27: #{branch_1_fun.13} parent=1 // pred_check_branch
      %486 = sbr.rel (0) target = $region29
    $region28: #{branch_1_fun.13} parent=1 // pred_region
      _
    $region29: #{branch_1_fun.13} parent=1 // pred_fallthru
      _
    // Predicated region
    $region30: #{branch_1_fun.13} parent=1 // pred_check
      _
    $region31: #{branch_1_fun.13} parent=1 // pred_check_branch
      %488 = sbr.rel (0) target = $region33
    $region32: #{branch_1_fun.13} parent=1 // pred_region
      %s490 = ssub.s32 256, 256
      %491 = vsyncadd [#allocation3], %s490
      %s493 = sshll.u32 [#allocation2], 4
      %s494 = int_to_ptr.vmem [resolvable:$true] %s493
      %496 = dma.vmem_to_hbm [thread:$0]  %s494, 256, %s7, [#allocation3]
    $region33: #{branch_1_fun.13} parent=1 // pred_fallthru
      _
    // Predicated region
    $region34: #{branch_1_fun.13} parent=1 // pred_check
      _
    $region35: #{branch_1_fun.13} parent=1 // pred_check_branch
      %498 = sbr.rel (0) target = $region37
    $region36: #{branch_1_fun.13} parent=1 // pred_region
      %s500 = ssub.s32 32, 32
      %501 = vsyncadd [#allocation5], %s500
      %s503 = sshll.u32 [#allocation4], 4
      %s504 = int_to_ptr.vmem [resolvable:$true] %s503
      %506 = dma.vmem_to_hbm [thread:$0]  %s504, 32, %s8, [#allocation5]
    $region37: #{branch_1_fun.13} parent=1 // pred_fallthru
      _
    // Predicated region
    $region38: #{branch_1_fun.13} parent=1 // pred_check
      _
    $region39: #{branch_1_fun.13} parent=1 // pred_check_branch
      %508 = sbr.rel (0) target = $region41
    $region40: #{branch_1_fun.13} parent=1 // pred_region
      %s510 = ssub.s32 32, 32
      %511 = vsyncadd [#allocation5], %s510
      %s513 = sshll.u32 [#allocation6], 4
      %s514 = int_to_ptr.vmem [resolvable:$true] %s513
      %516 = dma.vmem_to_hbm [thread:$0]  %s514, 32, %s9, [#allocation5]
    $region41: #{branch_1_fun.13} parent=1 // pred_fallthru
      _
    // Predicated region
    $region42: #{branch_1_fun.13} parent=1 // pred_check
      _
    $region43: #{branch_1_fun.13} parent=1 // pred_check_branch
      %518 = sbr.rel (0) target = $region45
    $region44: #{branch_1_fun.13} parent=1 // pred_region
      _
    $region45: #{branch_1_fun.13} parent=1 // pred_fallthru
      _
    // Predicated region
    $region46: #{branch_1_fun.13} parent=1 // pred_check
      _
    $region47: #{branch_1_fun.13} parent=1 // pred_check_branch
      %520 = sbr.rel (0) target = $region49
    $region48: #{branch_1_fun.13} parent=1 // pred_region
      %521 = dma.done [#allocation3], 256
    $region49: #{branch_1_fun.13} parent=1 // pred_fallthru
      _
    // Predicated region
    $region50: #{branch_1_fun.13} parent=1 // pred_check
      _
    $region51: #{branch_1_fun.13} parent=1 // pred_check_branch
      %523 = sbr.rel (0) target = $region53
    $region52: #{branch_1_fun.13} parent=1 // pred_region
      %524 = dma.done [#allocation5], 32
    $region53: #{branch_1_fun.13} parent=1 // pred_fallthru
      _
    // Predicated region
    $region54: #{branch_1_fun.13} parent=1 // pred_check
      _
    $region55: #{branch_1_fun.13} parent=1 // pred_check_branch
      %526 = sbr.rel (0) target = $region57
    $region56: #{branch_1_fun.13} parent=1 // pred_region
      %527 = dma.done [#allocation5], 32
    $region57: #{branch_1_fun.13} parent=1 // pred_fallthru
      _
    %528 = vsyncpa [#allocation3], 1
    %529 = vsyncpa [#allocation5], 1

// kernel: branch_1_fun.9
$region0: #{branch_1_fun.9}
  #allocation0 [shape = 'u32[]', space=smem, size = 0x4, offset = 0x4, fixed_abs, tag = 'smem constant byte address 0x4 - core index']
  #allocation1 [shape = 'u32[144,128]{1,0:T(1,128)}', space=vmem, size = 0x12000, scoped, tag = 'internal scratch']
  %s0 = inlined_call_operand.vmem [shape: f32[2,1024], index: 0, kind: input, shape index: {}]
  %s1 = inlined_call_operand.vmem [shape: f32[2,1024], index: 1, kind: input, shape index: {}]
  %s2 = inlined_call_operand.vmem [shape: f32[2,9], index: 2, kind: input, shape index: {}]
  %s3 = inlined_call_operand.vmem [shape: f32[2,3], index: 3, kind: input, shape index: {}]
  %s4 = inlined_call_operand.vmem [shape: f32[2,1024], index: 4, kind: input, shape index: {}]
  %s5 = inlined_call_operand.vmem [shape: f32[2,1024], index: 5, kind: input, shape index: {}]
  %s6 = inlined_call_operand.vmem [shape: f32[2,1024], index: 6, kind: input, shape index: {}]
  %s7 = inlined_call_operand.vmem [shape: f32[2,1024], index: 7, kind: input, shape index: {}]
  %s8 = inlined_call_operand.hbm [shape: f32[2,1], index: 8, kind: output, shape index: {0}]
  %s9 = inlined_call_operand.hbm [shape: f32[2,1024], index: 9, kind: output, shape index: {1}]
  %s10 = inlined_call_operand.hbm [shape: f32[2,9], index: 10, kind: output, shape index: {2}]
  %s11 = inlined_call_operand.hbm [shape: f32[2,3], index: 11, kind: output, shape index: {3}]
  %12 = xla_tuple %s8, %s9, %s10, %s11
  %s13 = sld [smem:[#allocation0]]
  $region66: #{branch_1_fun.9} parent=0
    _
  %s15 = ssub.s32 1, %s13
  %s16 = scalar_select 0, %s15, %s13
  $region1: #{branch_1_fun.9} parent=0
    #allocation2 [shape = 'u8[1024]{0}', space=vmem, size = 0x400, scoped, tag = 'output window, operand 0, single buffered']
    #allocation3 [shape = 's32[1]{0}', space=sflag, size = 0x4, scoped, tag = 'scoped memory for branch_1_fun.9']
    #allocation4 [shape = 'u8[8192]{0}', space=vmem, size = 0x2000, scoped, tag = 'output window, operand 1, single buffered']
    #allocation5 [shape = 's32[1]{0}', space=sflag, size = 0x4, scoped, tag = 'scoped memory for branch_1_fun.9']
    #allocation6 [shape = 'u8[1024]{0}', space=vmem, size = 0x400, scoped, tag = 'output window, operand 2, single buffered']
    #allocation7 [shape = 'u8[1024]{0}', space=vmem, size = 0x400, scoped, tag = 'output window, operand 3, single buffered']
    #allocation8 [shape = 's32[1]{0}', space=sflag, size = 0x4, scoped, tag = 'scoped memory for branch_1_fun.9']
    %17 = vsyncpa [#allocation3], 0
    %18 = vsyncpa [#allocation5], 0
    %19 = vsyncpa [#allocation8], 0
    // Predicated region
    $region2: #{branch_1_fun.9} parent=1 // pred_check
      _
    $region3: #{branch_1_fun.9} parent=1 // pred_check_branch
      %21 = sbr.rel (0) target = $region5
    $region4: #{branch_1_fun.9} parent=1 // pred_region
      _
    $region5: #{branch_1_fun.9} parent=1 // pred_fallthru
      _
    // Predicated region
    $region6: #{branch_1_fun.9} parent=1 // pred_check
      _
    $region7: #{branch_1_fun.9} parent=1 // pred_check_branch
      %23 = sbr.rel (0) target = $region9
    $region8: #{branch_1_fun.9} parent=1 // pred_region
      _
    $region9: #{branch_1_fun.9} parent=1 // pred_fallthru
      _
    // Predicated region
    $region10: #{branch_1_fun.9} parent=1 // pred_check
      _
    $region11: #{branch_1_fun.9} parent=1 // pred_check_branch
      %25 = sbr.rel (0) target = $region13
    $region12: #{branch_1_fun.9} parent=1 // pred_region
      _
    $region13: #{branch_1_fun.9} parent=1 // pred_fallthru
      _
    // Predicated region
    $region14: #{branch_1_fun.9} parent=1 // pred_check
      _
    $region15: #{branch_1_fun.9} parent=1 // pred_check_branch
      %27 = sbr.rel (0) target = $region17
    $region16: #{branch_1_fun.9} parent=1 // pred_region
      _
    $region17: #{branch_1_fun.9} parent=1 // pred_fallthru
      _
    // Predicated region
    $region18: #{branch_1_fun.9} parent=1 // pred_check
      _
    $region19: #{branch_1_fun.9} parent=1 // pred_check_branch
      %29 = sbr.rel (0) target = $region21
    $region20: #{branch_1_fun.9} parent=1 // pred_region
      _
    $region21: #{branch_1_fun.9} parent=1 // pred_fallthru
      _
    // Predicated region
    $region22: #{branch_1_fun.9} parent=1 // pred_check
      _
    $region23: #{branch_1_fun.9} parent=1 // pred_check_branch
      %31 = sbr.rel (0) target = $region25
    $region24: #{branch_1_fun.9} parent=1 // pred_region
      _
    $region25: #{branch_1_fun.9} parent=1 // pred_fallthru
      _
    // Predicated region
    $region26: #{branch_1_fun.9} parent=1 // pred_check
      _
    $region27: #{branch_1_fun.9} parent=1 // pred_check_branch
      %33 = sbr.rel (0) target = $region29
    $region28: #{branch_1_fun.9} parent=1 // pred_region
      _
    $region29: #{branch_1_fun.9} parent=1 // pred_fallthru
      _
    // Predicated region
    $region30: #{branch_1_fun.9} parent=1 // pred_check
      _
    $region31: #{branch_1_fun.9} parent=1 // pred_check_branch
      %35 = sbr.rel (0) target = $region33
    $region32: #{branch_1_fun.9} parent=1 // pred_region
      _
    $region33: #{branch_1_fun.9} parent=1 // pred_fallthru
      _
    %v36 = vld [vmem:[%s0] sm:$0xff]
    %v37 = vld [vmem:[%s0 + $0x8] sm:$0xff]
    %v38 = vld [vmem:[%s1] sm:$0xff]
    %v39 = vld [vmem:[%s1 + $0x8] sm:$0xff]
    %v40 = vld [vmem:[%s4] sm:$0xff]
    %v41 = vld [vmem:[%s4 + $0x8] sm:$0xff]
    %v42 = vld [vmem:[%s5] sm:$0xff]
    %v43 = vld [vmem:[%s5 + $0x8] sm:$0xff]
    %v44 = vmul.f32 %v36, %v40
    %v45 = vmul.f32 %v37, %v41
    %v48 = vcombine.high %v44, %v44
    %v50 = vunpack.c.l.s4 1983009808
    %v51 = vunpack.c.0.s8 %v50
    %v52 = vlaneseq
    %v53 = vshrl.u32 %v52, 7
    %v54 = vsub.s32 %v51, %v53
    %v55 = vrot.slane %v44, %v54
    %v57 = vunpack.c.l.s4 1983009808
    %v58 = vunpack.c.0.s8 %v57
    %v59 = vlaneseq
    %v60 = vshrl.u32 %v59, 7
    %v61 = vsub.s32 %v58, %v60
    %v62 = vrot.slane %v48, %v61
    %v63 = vcombine.high %v55, %v55
    %v64 = vcombine.high %v62, %v62
    %v65 = vcombine.high %v45, %v45
    %v67 = vunpack.c.l.s4 1983009808
    %v68 = vunpack.c.0.s8 %v67
    %v69 = vlaneseq
    %v70 = vshrl.u32 %v69, 7
    %v71 = vsub.s32 %v68, %v70
    %v72 = vrot.slane %v45, %v71
    %v74 = vunpack.c.l.s4 1983009808
    %v75 = vunpack.c.0.s8 %v74
    %v76 = vlaneseq
    %v77 = vshrl.u32 %v76, 7
    %v78 = vsub.s32 %v75, %v77
    %v79 = vrot.slane %v65, %v78
    %v80 = vcombine.high %v72, %v72
    %v81 = vcombine.high %v79, %v79
    %vm90 = vcmask 1041408
    %v91 = vsel %vm90, %v55, 0.0
    %v92 = vsel %vm90, %v63, 0.0
    %v93 = vadd.f32 %v91, %v92
    %v94 = vsel %vm90, %v62, 0.0
    %v95 = vadd.f32 %v93, %v94
    %v96 = vsel %vm90, %v64, 0.0
    %v97 = vadd.f32 %v95, %v96
    %v98 = vsel %vm90, %v72, 0.0
    %v99 = vadd.f32 %v97, %v98
    %v100 = vsel %vm90, %v80, 0.0
    %v101 = vadd.f32 %v99, %v100
    %v102 = vsel %vm90, %v79, 0.0
    %v103 = vadd.f32 %v101, %v102
    %v104 = vsel %vm90, %v81, 0.0
    %v105 = vadd.f32 %v103, %v104
    %106 = vadd.xlane.f32.xlu0 %v105
    %v107 = vpop.xlane.xlu0 %106
    %v108 = vmul.f32 %v36, %v42
    %v109 = vmul.f32 %v37, %v43
    %v112 = vcombine.high %v108, %v108
    %v114 = vunpack.c.l.s4 1983009808
    %v115 = vunpack.c.0.s8 %v114
    %v116 = vlaneseq
    %v117 = vshrl.u32 %v116, 7
    %v118 = vsub.s32 %v115, %v117
    %v119 = vrot.slane %v108, %v118
    %v121 = vunpack.c.l.s4 1983009808
    %v122 = vunpack.c.0.s8 %v121
    %v123 = vlaneseq
    %v124 = vshrl.u32 %v123, 7
    %v125 = vsub.s32 %v122, %v124
    %v126 = vrot.slane %v112, %v125
    %v127 = vcombine.high %v119, %v119
    %v128 = vcombine.high %v126, %v126
    %v129 = vcombine.high %v109, %v109
    %v131 = vunpack.c.l.s4 1983009808
    %v132 = vunpack.c.0.s8 %v131
    %v133 = vlaneseq
    %v134 = vshrl.u32 %v133, 7
    %v135 = vsub.s32 %v132, %v134
    %v136 = vrot.slane %v109, %v135
    %v138 = vunpack.c.l.s4 1983009808
    %v139 = vunpack.c.0.s8 %v138
    %v140 = vlaneseq
    %v141 = vshrl.u32 %v140, 7
    %v142 = vsub.s32 %v139, %v141
    %v143 = vrot.slane %v129, %v142
    %v144 = vcombine.high %v136, %v136
    %v145 = vcombine.high %v143, %v143
    %v154 = vsel %vm90, %v119, 0.0
    %v155 = vsel %vm90, %v127, 0.0
    %v156 = vadd.f32 %v154, %v155
    %v157 = vsel %vm90, %v126, 0.0
    %v158 = vadd.f32 %v156, %v157
    %v159 = vsel %vm90, %v128, 0.0
    %v160 = vadd.f32 %v158, %v159
    %v161 = vsel %vm90, %v136, 0.0
    %v162 = vadd.f32 %v160, %v161
    %v163 = vsel %vm90, %v144, 0.0
    %v164 = vadd.f32 %v162, %v163
    %v165 = vsel %vm90, %v143, 0.0
    %v166 = vadd.f32 %v164, %v165
    %v167 = vsel %vm90, %v145, 0.0
    %v168 = vadd.f32 %v166, %v167
    %169 = vadd.xlane.f32.xlu0 %v168
    %v170 = vpop.xlane.xlu0 %169
    %v171 = vmul.f32 %v36, %v38
    %v172 = vmul.f32 %v37, %v39
    %v175 = vcombine.high %v171, %v171
    %v177 = vunpack.c.l.s4 1983009808
    %v178 = vunpack.c.0.s8 %v177
    %v179 = vlaneseq
    %v180 = vshrl.u32 %v179, 7
    %v181 = vsub.s32 %v178, %v180
    %v182 = vrot.slane %v171, %v181
    %v184 = vunpack.c.l.s4 1983009808
    %v185 = vunpack.c.0.s8 %v184
    %v186 = vlaneseq
    %v187 = vshrl.u32 %v186, 7
    %v188 = vsub.s32 %v185, %v187
    %v189 = vrot.slane %v175, %v188
    %v190 = vcombine.high %v182, %v182
    %v191 = vcombine.high %v189, %v189
    %v192 = vcombine.high %v172, %v172
    %v194 = vunpack.c.l.s4 1983009808
    %v195 = vunpack.c.0.s8 %v194
    %v196 = vlaneseq
    %v197 = vshrl.u32 %v196, 7
    %v198 = vsub.s32 %v195, %v197
    %v199 = vrot.slane %v172, %v198
    %v201 = vunpack.c.l.s4 1983009808
    %v202 = vunpack.c.0.s8 %v201
    %v203 = vlaneseq
    %v204 = vshrl.u32 %v203, 7
    %v205 = vsub.s32 %v202, %v204
    %v206 = vrot.slane %v192, %v205
    %v207 = vcombine.high %v199, %v199
    %v208 = vcombine.high %v206, %v206
    %v217 = vsel %vm90, %v182, 0.0
    %v218 = vsel %vm90, %v190, 0.0
    %v219 = vadd.f32 %v217, %v218
    %v220 = vsel %vm90, %v189, 0.0
    %v221 = vadd.f32 %v219, %v220
    %v222 = vsel %vm90, %v191, 0.0
    %v223 = vadd.f32 %v221, %v222
    %v224 = vsel %vm90, %v199, 0.0
    %v225 = vadd.f32 %v223, %v224
    %v226 = vsel %vm90, %v207, 0.0
    %v227 = vadd.f32 %v225, %v226
    %v228 = vsel %vm90, %v206, 0.0
    %v229 = vadd.f32 %v227, %v228
    %v230 = vsel %vm90, %v208, 0.0
    %v231 = vadd.f32 %v229, %v230
    %232 = vadd.xlane.f32.xlu0 %v231
    %v233 = vpop.xlane.xlu0 %232
    %v234 = vld [vmem:[%s2] sm:$0x3]
    %vm235 = vcmask 66560
    %236 = vst.msk [vmem:[#allocation6] sm:$0x3] %vm235, %v234
    %v237 = vld [vmem:[%s3] sm:$0x3]
    %vm238 = vcmask 17408
    %239 = vst.msk [vmem:[#allocation7] sm:$0x3] %vm238, %v237
    %vm240 = vcmask 25624
    %241 = vst.msk [vmem:[#allocation6] sm:$0x3] %vm240, %v107
    %vm242 = vcmask 9224
    %243 = vst.msk [vmem:[#allocation6] sm:$0x3] %vm242, %v107
    %vm244 = vcmask 33824
    %245 = vst.msk [vmem:[#allocation6] sm:$0x3] %vm244, %v170
    %246 = vst.msk [vmem:[#allocation6] sm:$0x3] %vm244, %v170
    %247 = vst.msk [vmem:[#allocation7] sm:$0x3] %vm242, %v233
    %v248 = vld [vmem:[%s2] sm:$0x3]
    %v249 = vld [vmem:[%s3] sm:$0x3]
    %v250 = vrcp.pop %v248
    %v251 = vmul.f32 1.0, %v250
    %v252 = vmul.f32 %v107, %v251
    %v253 = vmul.f32 %v249, %v251
    %v254 = vmul.f32 %v107, %v252
    %v255 = vsub.f32 %v170, %v254
    %v256 = vmul.f32 %v107, %v253
    %v257 = vsub.f32 %v233, %v256
    %v258 = vrcp.pop %v255
    %v259 = vmul.f32 1.0, %v258
    %v260 = vmul.f32 %v257, %v259
    %v261 = vmul.f32 %v252, %v260
    %v262 = vsub.f32 %v253, %v261
    %264 = vset.pattern.permute.xlu0 0
    %265 = vperm.xlu0 %264, %v262
    %v266 = vpop.permute.xlu0 %265
    %v270 = vcombine.high %v40, %v40
    %v272 = vunpack.c.l.s4 1983009808
    %v273 = vunpack.c.0.s8 %v272
    %v274 = vlaneseq
    %v275 = vshrl.u32 %v274, 7
    %v276 = vsub.s32 %v273, %v275
    %v277 = vrot.slane %v40, %v276
    %v279 = vunpack.c.l.s4 1983009808
    %v280 = vunpack.c.0.s8 %v279
    %v281 = vlaneseq
    %v282 = vshrl.u32 %v281, 7
    %v283 = vsub.s32 %v280, %v282
    %v284 = vrot.slane %v270, %v283
    %v285 = vcombine.high %v277, %v277
    %v286 = vcombine.high %v284, %v284
    %v287 = vcombine.high %v41, %v41
    %v289 = vunpack.c.l.s4 1983009808
    %v290 = vunpack.c.0.s8 %v289
    %v291 = vlaneseq
    %v292 = vshrl.u32 %v291, 7
    %v293 = vsub.s32 %v290, %v292
    %v294 = vrot.slane %v41, %v293
    %v296 = vunpack.c.l.s4 1983009808
    %v297 = vunpack.c.0.s8 %v296
    %v298 = vlaneseq
    %v299 = vshrl.u32 %v298, 7
    %v300 = vsub.s32 %v297, %v299
    %v301 = vrot.slane %v287, %v300
    %v302 = vcombine.high %v294, %v294
    %v303 = vcombine.high %v301, %v301
    %v312 = vmul.f32 %v266, %v277
    %v313 = vmul.f32 %v266, %v285
    %v314 = vmul.f32 %v266, %v284
    %v315 = vmul.f32 %v266, %v286
    %v316 = vmul.f32 %v266, %v294
    %v317 = vmul.f32 %v266, %v302
    %v318 = vmul.f32 %v266, %v301
    %v319 = vmul.f32 %v266, %v303
    %v320 = vld [vmem:[%s6] sm:$0xff]
    %v321 = vld [vmem:[%s6 + $0x8] sm:$0xff]
    %v324 = vcombine.high %v320, %v320
    %v326 = vunpack.c.l.s4 1983009808
    %v327 = vunpack.c.0.s8 %v326
    %v328 = vlaneseq
    %v329 = vshrl.u32 %v328, 7
    %v330 = vsub.s32 %v327, %v329
    %v331 = vrot.slane %v320, %v330
    %v333 = vunpack.c.l.s4 1983009808
    %v334 = vunpack.c.0.s8 %v333
    %v335 = vlaneseq
    %v336 = vshrl.u32 %v335, 7
    %v337 = vsub.s32 %v334, %v336
    %v338 = vrot.slane %v324, %v337
    %v339 = vcombine.high %v331, %v331
    %v340 = vcombine.high %v338, %v338
    %v341 = vcombine.high %v321, %v321
    %v343 = vunpack.c.l.s4 1983009808
    %v344 = vunpack.c.0.s8 %v343
    %v345 = vlaneseq
    %v346 = vshrl.u32 %v345, 7
    %v347 = vsub.s32 %v344, %v346
    %v348 = vrot.slane %v321, %v347
    %v350 = vunpack.c.l.s4 1983009808
    %v351 = vunpack.c.0.s8 %v350
    %v352 = vlaneseq
    %v353 = vshrl.u32 %v352, 7
    %v354 = vsub.s32 %v351, %v353
    %v355 = vrot.slane %v341, %v354
    %v356 = vcombine.high %v348, %v348
    %v357 = vcombine.high %v355, %v355
    %v366 = vmul.f32 %v266, %v331
    %v367 = vmul.f32 %v266, %v339
    %v368 = vmul.f32 %v266, %v338
    %v369 = vmul.f32 %v266, %v340
    %v370 = vmul.f32 %v266, %v348
    %v371 = vmul.f32 %v266, %v356
    %v372 = vmul.f32 %v266, %v355
    %v373 = vmul.f32 %v266, %v357
    %375 = vset.pattern.permute.xlu0 0
    %376 = vperm.xlu0 %375, %v260
    %v377 = vpop.permute.xlu0 %376
    %v381 = vcombine.high %v42, %v42
    %v383 = vunpack.c.l.s4 1983009808
    %v384 = vunpack.c.0.s8 %v383
    %v385 = vlaneseq
    %v386 = vshrl.u32 %v385, 7
    %v387 = vsub.s32 %v384, %v386
    %v388 = vrot.slane %v42, %v387
    %v390 = vunpack.c.l.s4 1983009808
    %v391 = vunpack.c.0.s8 %v390
    %v392 = vlaneseq
    %v393 = vshrl.u32 %v392, 7
    %v394 = vsub.s32 %v391, %v393
    %v395 = vrot.slane %v381, %v394
    %v396 = vcombine.high %v388, %v388
    %v397 = vcombine.high %v395, %v395
    %v398 = vcombine.high %v43, %v43
    %v400 = vunpack.c.l.s4 1983009808
    %v401 = vunpack.c.0.s8 %v400
    %v402 = vlaneseq
    %v403 = vshrl.u32 %v402, 7
    %v404 = vsub.s32 %v401, %v403
    %v405 = vrot.slane %v43, %v404
    %v407 = vunpack.c.l.s4 1983009808
    %v408 = vunpack.c.0.s8 %v407
    %v409 = vlaneseq
    %v410 = vshrl.u32 %v409, 7
    %v411 = vsub.s32 %v408, %v410
    %v412 = vrot.slane %v398, %v411
    %v413 = vcombine.high %v405, %v405
    %v414 = vcombine.high %v412, %v412
    %v423 = vmul.f32 %v377, %v388
    %v424 = vmul.f32 %v377, %v396
    %v425 = vmul.f32 %v377, %v395
    %v426 = vmul.f32 %v377, %v397
    %v427 = vmul.f32 %v377, %v405
    %v428 = vmul.f32 %v377, %v413
    %v429 = vmul.f32 %v377, %v412
    %v430 = vmul.f32 %v377, %v414
    %v431 = vadd.f32 %v312, %v423
    %v432 = vadd.f32 %v313, %v424
    %v433 = vadd.f32 %v314, %v425
    %v434 = vadd.f32 %v315, %v426
    %v435 = vadd.f32 %v316, %v427
    %v436 = vadd.f32 %v317, %v428
    %v437 = vadd.f32 %v318, %v429
    %v438 = vadd.f32 %v319, %v430
    %v439 = vld [vmem:[%s7] sm:$0xff]
    %v440 = vld [vmem:[%s7 + $0x8] sm:$0xff]
    %v443 = vcombine.high %v439, %v439
    %v445 = vunpack.c.l.s4 1983009808
    %v446 = vunpack.c.0.s8 %v445
    %v447 = vlaneseq
    %v448 = vshrl.u32 %v447, 7
    %v449 = vsub.s32 %v446, %v448
    %v450 = vrot.slane %v439, %v449
    %v452 = vunpack.c.l.s4 1983009808
    %v453 = vunpack.c.0.s8 %v452
    %v454 = vlaneseq
    %v455 = vshrl.u32 %v454, 7
    %v456 = vsub.s32 %v453, %v455
    %v457 = vrot.slane %v443, %v456
    %v458 = vcombine.high %v450, %v450
    %v459 = vcombine.high %v457, %v457
    %v460 = vcombine.high %v440, %v440
    %v462 = vunpack.c.l.s4 1983009808
    %v463 = vunpack.c.0.s8 %v462
    %v464 = vlaneseq
    %v465 = vshrl.u32 %v464, 7
    %v466 = vsub.s32 %v463, %v465
    %v467 = vrot.slane %v440, %v466
    %v469 = vunpack.c.l.s4 1983009808
    %v470 = vunpack.c.0.s8 %v469
    %v471 = vlaneseq
    %v472 = vshrl.u32 %v471, 7
    %v473 = vsub.s32 %v470, %v472
    %v474 = vrot.slane %v460, %v473
    %v475 = vcombine.high %v467, %v467
    %v476 = vcombine.high %v474, %v474
    %v485 = vmul.f32 %v377, %v450
    %v486 = vmul.f32 %v377, %v458
    %v487 = vmul.f32 %v377, %v457
    %v488 = vmul.f32 %v377, %v459
    %v489 = vmul.f32 %v377, %v467
    %v490 = vmul.f32 %v377, %v475
    %v491 = vmul.f32 %v377, %v474
    %v492 = vmul.f32 %v377, %v476
    %v493 = vadd.f32 %v366, %v485
    %v494 = vadd.f32 %v367, %v486
    %v495 = vadd.f32 %v368, %v487
    %v496 = vadd.f32 %v369, %v488
    %v497 = vadd.f32 %v370, %v489
    %v498 = vadd.f32 %v371, %v490
    %v499 = vadd.f32 %v372, %v491
    %v500 = vadd.f32 %v373, %v492
    %v503 = vcombine.high %v38, %v38
    %v505 = vunpack.c.l.s4 1983009808
    %v506 = vunpack.c.0.s8 %v505
    %v507 = vlaneseq
    %v508 = vshrl.u32 %v507, 7
    %v509 = vsub.s32 %v506, %v508
    %v510 = vrot.slane %v38, %v509
    %v512 = vunpack.c.l.s4 1983009808
    %v513 = vunpack.c.0.s8 %v512
    %v514 = vlaneseq
    %v515 = vshrl.u32 %v514, 7
    %v516 = vsub.s32 %v513, %v515
    %v517 = vrot.slane %v503, %v516
    %v518 = vcombine.high %v510, %v510
    %v519 = vcombine.high %v517, %v517
    %v520 = vcombine.high %v39, %v39
    %v522 = vunpack.c.l.s4 1983009808
    %v523 = vunpack.c.0.s8 %v522
    %v524 = vlaneseq
    %v525 = vshrl.u32 %v524, 7
    %v526 = vsub.s32 %v523, %v525
    %v527 = vrot.slane %v39, %v526
    %v529 = vunpack.c.l.s4 1983009808
    %v530 = vunpack.c.0.s8 %v529
    %v531 = vlaneseq
    %v532 = vshrl.u32 %v531, 7
    %v533 = vsub.s32 %v530, %v532
    %v534 = vrot.slane %v520, %v533
    %v535 = vcombine.high %v527, %v527
    %v536 = vcombine.high %v534, %v534
    %v545 = vsub.f32 %v431, %v510
    %v546 = vsub.f32 %v432, %v518
    %v547 = vsub.f32 %v433, %v517
    %v548 = vsub.f32 %v434, %v519
    %v549 = vsub.f32 %v435, %v527
    %v550 = vsub.f32 %v436, %v535
    %v551 = vsub.f32 %v437, %v534
    %v552 = vsub.f32 %v438, %v536
    %v553 = vmul.f32 %v545, %v545
    %v554 = vmul.f32 %v546, %v546
    %v555 = vmul.f32 %v547, %v547
    %v556 = vmul.f32 %v548, %v548
    %v557 = vmul.f32 %v549, %v549
    %v558 = vmul.f32 %v550, %v550
    %v559 = vmul.f32 %v551, %v551
    %v560 = vmul.f32 %v552, %v552
    %v561 = vsel %vm90, %v553, 0.0
    %v562 = vsel %vm90, %v554, 0.0
    %v563 = vadd.f32 %v561, %v562
    %v564 = vsel %vm90, %v555, 0.0
    %v565 = vadd.f32 %v563, %v564
    %v566 = vsel %vm90, %v556, 0.0
    %v567 = vadd.f32 %v565, %v566
    %v568 = vsel %vm90, %v557, 0.0
    %v569 = vadd.f32 %v567, %v568
    %v570 = vsel %vm90, %v558, 0.0
    %v571 = vadd.f32 %v569, %v570
    %v572 = vsel %vm90, %v559, 0.0
    %v573 = vadd.f32 %v571, %v572
    %v574 = vsel %vm90, %v560, 0.0
    %v575 = vadd.f32 %v573, %v574
    %576 = vadd.xlane.f32.xlu0 %v575
    %v577 = vpop.xlane.xlu0 %576
    %v578 = vmul.f32 %v38, %v38
    %v579 = vmul.f32 %v39, %v39
    %v582 = vcombine.high %v578, %v578
    %v584 = vunpack.c.l.s4 1983009808
    %v585 = vunpack.c.0.s8 %v584
    %v586 = vlaneseq
    %v587 = vshrl.u32 %v586, 7
    %v588 = vsub.s32 %v585, %v587
    %v589 = vrot.slane %v578, %v588
    %v591 = vunpack.c.l.s4 1983009808
    %v592 = vunpack.c.0.s8 %v591
    %v593 = vlaneseq
    %v594 = vshrl.u32 %v593, 7
    %v595 = vsub.s32 %v592, %v594
    %v596 = vrot.slane %v582, %v595
    %v597 = vcombine.high %v589, %v589
    %v598 = vcombine.high %v596, %v596
    %v599 = vcombine.high %v579, %v579
    %v601 = vunpack.c.l.s4 1983009808
    %v602 = vunpack.c.0.s8 %v601
    %v603 = vlaneseq
    %v604 = vshrl.u32 %v603, 7
    %v605 = vsub.s32 %v602, %v604
    %v606 = vrot.slane %v579, %v605
    %v608 = vunpack.c.l.s4 1983009808
    %v609 = vunpack.c.0.s8 %v608
    %v610 = vlaneseq
    %v611 = vshrl.u32 %v610, 7
    %v612 = vsub.s32 %v609, %v611
    %v613 = vrot.slane %v599, %v612
    %v614 = vcombine.high %v606, %v606
    %v615 = vcombine.high %v613, %v613
    %v624 = vsel %vm90, %v589, 0.0
    %v625 = vsel %vm90, %v597, 0.0
    %v626 = vadd.f32 %v624, %v625
    %v627 = vsel %vm90, %v596, 0.0
    %v628 = vadd.f32 %v626, %v627
    %v629 = vsel %vm90, %v598, 0.0
    %v630 = vadd.f32 %v628, %v629
    %v631 = vsel %vm90, %v606, 0.0
    %v632 = vadd.f32 %v630, %v631
    %v633 = vsel %vm90, %v614, 0.0
    %v634 = vadd.f32 %v632, %v633
    %v635 = vsel %vm90, %v613, 0.0
    %v636 = vadd.f32 %v634, %v635
    %v637 = vsel %vm90, %v615, 0.0
    %v638 = vadd.f32 %v636, %v637
    %639 = vadd.xlane.f32.xlu0 %v638
    %v640 = vpop.xlane.xlu0 %639
    %v641 = vrsqrt.pop %v577
    %v642 = vmul.f32 %v577, %v641
    %vm643 = vcmp.eq.f32.partialorder %v577, inf
    %v644 = vsel %vm643, %v577, %v642
    %vm645 = vcmp.eq.f32.partialorder %v577, 0.0
    %v646 = vand.u32 %v577, 2147483648
    %v647 = vsel %vm645, %v646, %v644
    %v648 = vrsqrt.pop %v640
    %v649 = vmul.f32 %v647, %v648
    %vm650 = vcmask 1024
    %651 = vst.msk [vmem:[#allocation2] sm:$0x3] %vm650, %v649
    %v652 = vsub.f32 0.0, %v493
    %v653 = vsub.f32 0.0, %v494
    %v654 = vsub.f32 0.0, %v495
    %v655 = vsub.f32 0.0, %v496
    %v656 = vsub.f32 0.0, %v497
    %v657 = vsub.f32 0.0, %v498
    %v658 = vsub.f32 0.0, %v499
    %v659 = vsub.f32 0.0, %v500
    %v668 = vcombine.low %v652, %v653
    %v669 = vcombine.low %v654, %v655
    %v671 = vunpack.c.l.s4 1983009808
    %v672 = vunpack.c.0.s8 %v671
    %v673 = vlaneseq
    %v674 = vshrl.u32 %v673, 7
    %v675 = vsub.s32 %v672, %v674
    %v676 = vrot.slane %v668, %v675
    %v678 = vunpack.c.l.s4 1983009808
    %v679 = vunpack.c.0.s8 %v678
    %v680 = vlaneseq
    %v681 = vshrl.u32 %v680, 7
    %v682 = vsub.s32 %v679, %v681
    %v683 = vrot.slane %v669, %v682
    %v684 = vcombine.low %v676, %v683
    %v685 = vcombine.low %v656, %v657
    %v686 = vcombine.low %v658, %v659
    %v688 = vunpack.c.l.s4 1983009808
    %v689 = vunpack.c.0.s8 %v688
    %v690 = vlaneseq
    %v691 = vshrl.u32 %v690, 7
    %v692 = vsub.s32 %v689, %v691
    %v693 = vrot.slane %v685, %v692
    %v695 = vunpack.c.l.s4 1983009808
    %v696 = vunpack.c.0.s8 %v695
    %v697 = vlaneseq
    %v698 = vshrl.u32 %v697, 7
    %v699 = vsub.s32 %v696, %v698
    %v700 = vrot.slane %v686, %v699
    %v701 = vcombine.low %v693, %v700
    %704 = vst [vmem:[#allocation4] sm:$0xff] %v684
    %705 = vst [vmem:[#allocation4 + $0x8] sm:$0xff] %v701
    // Predicated region
    $region34: #{branch_1_fun.9} parent=1 // pred_check
      _
    $region35: #{branch_1_fun.9} parent=1 // pred_check_branch
      %707 = sbr.rel (0) target = $region37
    $region36: #{branch_1_fun.9} parent=1 // pred_region
      %s709 = ssub.s32 32, 32
      %710 = vsyncadd [#allocation3], %s709
      %s712 = sshll.u32 [#allocation2], 4
      %s713 = int_to_ptr.vmem [resolvable:$true] %s712
      %715 = dma.vmem_to_hbm [thread:$0]  %s713, 32, %s8, [#allocation3]
    $region37: #{branch_1_fun.9} parent=1 // pred_fallthru
      _
    // Predicated region
    $region38: #{branch_1_fun.9} parent=1 // pred_check
      _
    $region39: #{branch_1_fun.9} parent=1 // pred_check_branch
      %717 = sbr.rel (0) target = $region41
    $region40: #{branch_1_fun.9} parent=1 // pred_region
      %s719 = ssub.s32 256, 256
      %720 = vsyncadd [#allocation5], %s719
      %s722 = sshll.u32 [#allocation4], 4
      %s723 = int_to_ptr.vmem [resolvable:$true] %s722
      %725 = dma.vmem_to_hbm [thread:$0]  %s723, 256, %s9, [#allocation5]
    $region41: #{branch_1_fun.9} parent=1 // pred_fallthru
      _
    // Predicated region
    $region42: #{branch_1_fun.9} parent=1 // pred_check
      _
    $region43: #{branch_1_fun.9} parent=1 // pred_check_branch
      %727 = sbr.rel (0) target = $region45
    $region44: #{branch_1_fun.9} parent=1 // pred_region
      %s729 = ssub.s32 32, 32
      %730 = vsyncadd [#allocation5], %s729
      %s732 = sshll.u32 [#allocation6], 4
      %s733 = int_to_ptr.vmem [resolvable:$true] %s732
      %735 = dma.vmem_to_hbm [thread:$0]  %s733, 32, %s10, [#allocation5]
    $region45: #{branch_1_fun.9} parent=1 // pred_fallthru
      _
    // Predicated region
    $region46: #{branch_1_fun.9} parent=1 // pred_check
      _
    $region47: #{branch_1_fun.9} parent=1 // pred_check_branch
      %737 = sbr.rel (0) target = $region49
    $region48: #{branch_1_fun.9} parent=1 // pred_region
      %s739 = ssub.s32 32, 32
      %740 = vsyncadd [#allocation8], %s739
      %s742 = sshll.u32 [#allocation7], 4
      %s743 = int_to_ptr.vmem [resolvable:$true] %s742
      %745 = dma.vmem_to_hbm [thread:$0]  %s743, 32, %s11, [#allocation8]
    $region49: #{branch_1_fun.9} parent=1 // pred_fallthru
      _
    // Predicated region
    $region50: #{branch_1_fun.9} parent=1 // pred_check
      _
    $region51: #{branch_1_fun.9} parent=1 // pred_check_branch
      %747 = sbr.rel (0) target = $region53
    $region52: #{branch_1_fun.9} parent=1 // pred_region
      %748 = dma.done [#allocation3], 32
    $region53: #{branch_1_fun.9} parent=1 // pred_fallthru
      _
    // Predicated region
    $region54: #{branch_1_fun.9} parent=1 // pred_check
      _
    $region55: #{branch_1_fun.9} parent=1 // pred_check_branch
      %750 = sbr.rel (0) target = $region57
    $region56: #{branch_1_fun.9} parent=1 // pred_region
      %751 = dma.done [#allocation5], 256
    $region57: #{branch_1_fun.9} parent=1 // pred_fallthru
      _
    // Predicated region
    $region58: #{branch_1_fun.9} parent=1 // pred_check
      _
    $region59: #{branch_1_fun.9} parent=1 // pred_check_branch
      %753 = sbr.rel (0) target = $region61
    $region60: #{branch_1_fun.9} parent=1 // pred_region
      %754 = dma.done [#allocation5], 32
    $region61: #{branch_1_fun.9} parent=1 // pred_fallthru
      _
    // Predicated region
    $region62: #{branch_1_fun.9} parent=1 // pred_check
      _
    $region63: #{branch_1_fun.9} parent=1 // pred_check_branch
      %756 = sbr.rel (0) target = $region65
    $region64: #{branch_1_fun.9} parent=1 // pred_region
      %757 = dma.done [#allocation8], 32
    $region65: #{branch_1_fun.9} parent=1 // pred_fallthru
      _
    %758 = vsyncpa [#allocation3], 1
    %759 = vsyncpa [#allocation5], 1
    %760 = vsyncpa [#allocation8], 1

// kernel: branch_1_fun.10
$region0: #{branch_1_fun.10}
  #allocation0 [shape = 'u32[]', space=smem, size = 0x4, offset = 0x4, fixed_abs, tag = 'smem constant byte address 0x4 - core index']
  #allocation1 [shape = 'u32[144,128]{1,0:T(1,128)}', space=vmem, size = 0x12000, scoped, tag = 'internal scratch']
  %s0 = inlined_call_operand.hbm [shape: f32[2,1024], index: 0, kind: input, shape index: {}]
  %s1 = inlined_call_operand.vmem [shape: f32[2,1024], index: 1, kind: input, shape index: {}]
  %s2 = inlined_call_operand.vmem [shape: f32[2,1024], index: 2, kind: input, shape index: {}]
  %s3 = inlined_call_operand.vmem [shape: f32[2,1024], index: 3, kind: input, shape index: {}]
  %s4 = inlined_call_operand.hbm [shape: f32[2,1024], index: 4, kind: input, shape index: {}]
  %s5 = inlined_call_operand.vmem [shape: f32[2,1024], index: 5, kind: output, shape index: {}]
  %s6 = sld [smem:[#allocation0]]
  $region38: #{branch_1_fun.10} parent=0
    _
  %s8 = ssub.s32 1, %s6
  %s9 = scalar_select 0, %s8, %s6
  $region1: #{branch_1_fun.10} parent=0
    #allocation2 [shape = 'u8[8192]{0}', space=vmem, size = 0x2000, scoped, tag = 'input window, operand 0, single buffered']
    #allocation3 [shape = 's32[1]{0}', space=sflag, size = 0x4, scoped, tag = 'scoped memory for branch_1_fun.10']
    #allocation4 [shape = 'u8[8192]{0}', space=vmem, size = 0x2000, scoped, tag = 'input window, operand 4, single buffered']
    #allocation5 [shape = 's32[1]{0}', space=sflag, size = 0x4, scoped, tag = 'scoped memory for branch_1_fun.10']
    %10 = vsyncpa [#allocation3], 0
    %11 = vsyncpa [#allocation5], 0
    // Predicated region
    $region2: #{branch_1_fun.10} parent=1 // pred_check
      _
    $region3: #{branch_1_fun.10} parent=1 // pred_check_branch
      %13 = sbr.rel (0) target = $region5
    $region4: #{branch_1_fun.10} parent=1 // pred_region
      %s15 = ssub.s32 256, 256
      %16 = vsyncadd [#allocation3], %s15
      %s18 = sshll.u32 [#allocation2], 4
      %s19 = int_to_ptr.vmem [resolvable:$true] %s18
      %21 = dma.hbm_to_vmem [thread:$0]  %s0, 256, %s19, [#allocation3]
    $region5: #{branch_1_fun.10} parent=1 // pred_fallthru
      _
    // Predicated region
    $region6: #{branch_1_fun.10} parent=1 // pred_check
      _
    $region7: #{branch_1_fun.10} parent=1 // pred_check_branch
      %23 = sbr.rel (0) target = $region9
    $region8: #{branch_1_fun.10} parent=1 // pred_region
      _
    $region9: #{branch_1_fun.10} parent=1 // pred_fallthru
      _
    // Predicated region
    $region10: #{branch_1_fun.10} parent=1 // pred_check
      _
    $region11: #{branch_1_fun.10} parent=1 // pred_check_branch
      %25 = sbr.rel (0) target = $region13
    $region12: #{branch_1_fun.10} parent=1 // pred_region
      _
    $region13: #{branch_1_fun.10} parent=1 // pred_fallthru
      _
    // Predicated region
    $region14: #{branch_1_fun.10} parent=1 // pred_check
      _
    $region15: #{branch_1_fun.10} parent=1 // pred_check_branch
      %27 = sbr.rel (0) target = $region17
    $region16: #{branch_1_fun.10} parent=1 // pred_region
      _
    $region17: #{branch_1_fun.10} parent=1 // pred_fallthru
      _
    // Predicated region
    $region18: #{branch_1_fun.10} parent=1 // pred_check
      _
    $region19: #{branch_1_fun.10} parent=1 // pred_check_branch
      %29 = sbr.rel (0) target = $region21
    $region20: #{branch_1_fun.10} parent=1 // pred_region
      %s31 = ssub.s32 256, 256
      %32 = vsyncadd [#allocation5], %s31
      %s34 = sshll.u32 [#allocation4], 4
      %s35 = int_to_ptr.vmem [resolvable:$true] %s34
      %37 = dma.hbm_to_vmem [thread:$0]  %s4, 256, %s35, [#allocation5]
    $region21: #{branch_1_fun.10} parent=1 // pred_fallthru
      _
    // Predicated region
    $region22: #{branch_1_fun.10} parent=1 // pred_check
      _
    $region23: #{branch_1_fun.10} parent=1 // pred_check_branch
      %39 = sbr.rel (0) target = $region25
    $region24: #{branch_1_fun.10} parent=1 // pred_region
      %40 = dma.done [#allocation3], 256
    $region25: #{branch_1_fun.10} parent=1 // pred_fallthru
      _
    // Predicated region
    $region26: #{branch_1_fun.10} parent=1 // pred_check
      _
    $region27: #{branch_1_fun.10} parent=1 // pred_check_branch
      %42 = sbr.rel (0) target = $region29
    $region28: #{branch_1_fun.10} parent=1 // pred_region
      %43 = dma.done [#allocation5], 256
    $region29: #{branch_1_fun.10} parent=1 // pred_fallthru
      _
    %v44 = vld [vmem:[#allocation2] sm:$0xff]
    %v45 = vld [vmem:[#allocation2 + $0x8] sm:$0xff]
    %v46 = vld [vmem:[%s3] sm:$0xff]
    %v47 = vld [vmem:[%s3 + $0x8] sm:$0xff]
    %v48 = vmul.f32 %v44, %v46
    %v49 = vmul.f32 %v45, %v47
    %v52 = vcombine.high %v48, %v48
    %v54 = vunpack.c.l.s4 1983009808
    %v55 = vunpack.c.0.s8 %v54
    %v56 = vlaneseq
    %v57 = vshrl.u32 %v56, 7
    %v58 = vsub.s32 %v55, %v57
    %v59 = vrot.slane %v48, %v58
    %v61 = vunpack.c.l.s4 1983009808
    %v62 = vunpack.c.0.s8 %v61
    %v63 = vlaneseq
    %v64 = vshrl.u32 %v63, 7
    %v65 = vsub.s32 %v62, %v64
    %v66 = vrot.slane %v52, %v65
    %v67 = vcombine.high %v59, %v59
    %v68 = vcombine.high %v66, %v66
    %v69 = vcombine.high %v49, %v49
    %v71 = vunpack.c.l.s4 1983009808
    %v72 = vunpack.c.0.s8 %v71
    %v73 = vlaneseq
    %v74 = vshrl.u32 %v73, 7
    %v75 = vsub.s32 %v72, %v74
    %v76 = vrot.slane %v49, %v75
    %v78 = vunpack.c.l.s4 1983009808
    %v79 = vunpack.c.0.s8 %v78
    %v80 = vlaneseq
    %v81 = vshrl.u32 %v80, 7
    %v82 = vsub.s32 %v79, %v81
    %v83 = vrot.slane %v69, %v82
    %v84 = vcombine.high %v76, %v76
    %v85 = vcombine.high %v83, %v83
    %vm94 = vcmask 1041408
    %v95 = vsel %vm94, %v59, 0.0
    %v96 = vsel %vm94, %v67, 0.0
    %v97 = vadd.f32 %v95, %v96
    %v98 = vsel %vm94, %v66, 0.0
    %v99 = vadd.f32 %v97, %v98
    %v100 = vsel %vm94, %v68, 0.0
    %v101 = vadd.f32 %v99, %v100
    %v102 = vsel %vm94, %v76, 0.0
    %v103 = vadd.f32 %v101, %v102
    %v104 = vsel %vm94, %v84, 0.0
    %v105 = vadd.f32 %v103, %v104
    %v106 = vsel %vm94, %v83, 0.0
    %v107 = vadd.f32 %v105, %v106
    %v108 = vsel %vm94, %v85, 0.0
    %v109 = vadd.f32 %v107, %v108
    %110 = vadd.xlane.f32.xlu0 %v109
    %v111 = vpop.xlane.xlu0 %110
    %v112 = vld [vmem:[%s1] sm:$0xff]
    %v113 = vld [vmem:[%s1 + $0x8] sm:$0xff]
    %v116 = vcombine.high %v112, %v112
    %v118 = vunpack.c.l.s4 1983009808
    %v119 = vunpack.c.0.s8 %v118
    %v120 = vlaneseq
    %v121 = vshrl.u32 %v120, 7
    %v122 = vsub.s32 %v119, %v121
    %v123 = vrot.slane %v112, %v122
    %v125 = vunpack.c.l.s4 1983009808
    %v126 = vunpack.c.0.s8 %v125
    %v127 = vlaneseq
    %v128 = vshrl.u32 %v127, 7
    %v129 = vsub.s32 %v126, %v128
    %v130 = vrot.slane %v116, %v129
    %v131 = vcombine.high %v123, %v123
    %v132 = vcombine.high %v130, %v130
    %v133 = vcombine.high %v113, %v113
    %v135 = vunpack.c.l.s4 1983009808
    %v136 = vunpack.c.0.s8 %v135
    %v137 = vlaneseq
    %v138 = vshrl.u32 %v137, 7
    %v139 = vsub.s32 %v136, %v138
    %v140 = vrot.slane %v113, %v139
    %v142 = vunpack.c.l.s4 1983009808
    %v143 = vunpack.c.0.s8 %v142
    %v144 = vlaneseq
    %v145 = vshrl.u32 %v144, 7
    %v146 = vsub.s32 %v143, %v145
    %v147 = vrot.slane %v133, %v146
    %v148 = vcombine.high %v140, %v140
    %v149 = vcombine.high %v147, %v147
    %v158 = vmul.f32 %v111, %v123
    %v159 = vmul.f32 %v111, %v131
    %v160 = vmul.f32 %v111, %v130
    %v161 = vmul.f32 %v111, %v132
    %v162 = vmul.f32 %v111, %v140
    %v163 = vmul.f32 %v111, %v148
    %v164 = vmul.f32 %v111, %v147
    %v165 = vmul.f32 %v111, %v149
    %v174 = vcombine.low %v158, %v159
    %v175 = vcombine.low %v160, %v161
    %v177 = vunpack.c.l.s4 1983009808
    %v178 = vunpack.c.0.s8 %v177
    %v179 = vlaneseq
    %v180 = vshrl.u32 %v179, 7
    %v181 = vsub.s32 %v178, %v180
    %v182 = vrot.slane %v174, %v181
    %v184 = vunpack.c.l.s4 1983009808
    %v185 = vunpack.c.0.s8 %v184
    %v186 = vlaneseq
    %v187 = vshrl.u32 %v186, 7
    %v188 = vsub.s32 %v185, %v187
    %v189 = vrot.slane %v175, %v188
    %v190 = vcombine.low %v182, %v189
    %v191 = vcombine.low %v162, %v163
    %v192 = vcombine.low %v164, %v165
    %v194 = vunpack.c.l.s4 1983009808
    %v195 = vunpack.c.0.s8 %v194
    %v196 = vlaneseq
    %v197 = vshrl.u32 %v196, 7
    %v198 = vsub.s32 %v195, %v197
    %v199 = vrot.slane %v191, %v198
    %v201 = vunpack.c.l.s4 1983009808
    %v202 = vunpack.c.0.s8 %v201
    %v203 = vlaneseq
    %v204 = vshrl.u32 %v203, 7
    %v205 = vsub.s32 %v202, %v204
    %v206 = vrot.slane %v192, %v205
    %v207 = vcombine.low %v199, %v206
    %v210 = vsub.f32 %v44, %v190
    %v211 = vsub.f32 %v45, %v207
    %v212 = vld [vmem:[#allocation4] sm:$0xff]
    %v213 = vld [vmem:[#allocation4 + $0x8] sm:$0xff]
    %v214 = vmul.f32 %v210, %v212
    %v215 = vmul.f32 %v211, %v213
    %v218 = vcombine.high %v214, %v214
    %v220 = vunpack.c.l.s4 1983009808
    %v221 = vunpack.c.0.s8 %v220
    %v222 = vlaneseq
    %v223 = vshrl.u32 %v222, 7
    %v224 = vsub.s32 %v221, %v223
    %v225 = vrot.slane %v214, %v224
    %v227 = vunpack.c.l.s4 1983009808
    %v228 = vunpack.c.0.s8 %v227
    %v229 = vlaneseq
    %v230 = vshrl.u32 %v229, 7
    %v231 = vsub.s32 %v228, %v230
    %v232 = vrot.slane %v218, %v231
    %v233 = vcombine.high %v225, %v225
    %v234 = vcombine.high %v232, %v232
    %v235 = vcombine.high %v215, %v215
    %v237 = vunpack.c.l.s4 1983009808
    %v238 = vunpack.c.0.s8 %v237
    %v239 = vlaneseq
    %v240 = vshrl.u32 %v239, 7
    %v241 = vsub.s32 %v238, %v240
    %v242 = vrot.slane %v215, %v241
    %v244 = vunpack.c.l.s4 1983009808
    %v245 = vunpack.c.0.s8 %v244
    %v246 = vlaneseq
    %v247 = vshrl.u32 %v246, 7
    %v248 = vsub.s32 %v245, %v247
    %v249 = vrot.slane %v235, %v248
    %v250 = vcombine.high %v242, %v242
    %v251 = vcombine.high %v249, %v249
    %v260 = vsel %vm94, %v225, 0.0
    %v261 = vsel %vm94, %v233, 0.0
    %v262 = vadd.f32 %v260, %v261
    %v263 = vsel %vm94, %v232, 0.0
    %v264 = vadd.f32 %v262, %v263
    %v265 = vsel %vm94, %v234, 0.0
    %v266 = vadd.f32 %v264, %v265
    %v267 = vsel %vm94, %v242, 0.0
    %v268 = vadd.f32 %v266, %v267
    %v269 = vsel %vm94, %v250, 0.0
    %v270 = vadd.f32 %v268, %v269
    %v271 = vsel %vm94, %v249, 0.0
    %v272 = vadd.f32 %v270, %v271
    %v273 = vsel %vm94, %v251, 0.0
    %v274 = vadd.f32 %v272, %v273
    %275 = vadd.xlane.f32.xlu0 %v274
    %v276 = vpop.xlane.xlu0 %275
    %v277 = vld [vmem:[%s2] sm:$0xff]
    %v278 = vld [vmem:[%s2 + $0x8] sm:$0xff]
    %v281 = vcombine.high %v277, %v277
    %v283 = vunpack.c.l.s4 1983009808
    %v284 = vunpack.c.0.s8 %v283
    %v285 = vlaneseq
    %v286 = vshrl.u32 %v285, 7
    %v287 = vsub.s32 %v284, %v286
    %v288 = vrot.slane %v277, %v287
    %v290 = vunpack.c.l.s4 1983009808
    %v291 = vunpack.c.0.s8 %v290
    %v292 = vlaneseq
    %v293 = vshrl.u32 %v292, 7
    %v294 = vsub.s32 %v291, %v293
    %v295 = vrot.slane %v281, %v294
    %v296 = vcombine.high %v288, %v288
    %v297 = vcombine.high %v295, %v295
    %v298 = vcombine.high %v278, %v278
    %v300 = vunpack.c.l.s4 1983009808
    %v301 = vunpack.c.0.s8 %v300
    %v302 = vlaneseq
    %v303 = vshrl.u32 %v302, 7
    %v304 = vsub.s32 %v301, %v303
    %v305 = vrot.slane %v278, %v304
    %v307 = vunpack.c.l.s4 1983009808
    %v308 = vunpack.c.0.s8 %v307
    %v309 = vlaneseq
    %v310 = vshrl.u32 %v309, 7
    %v311 = vsub.s32 %v308, %v310
    %v312 = vrot.slane %v298, %v311
    %v313 = vcombine.high %v305, %v305
    %v314 = vcombine.high %v312, %v312
    %v323 = vmul.f32 %v276, %v288
    %v324 = vmul.f32 %v276, %v296
    %v325 = vmul.f32 %v276, %v295
    %v326 = vmul.f32 %v276, %v297
    %v327 = vmul.f32 %v276, %v305
    %v328 = vmul.f32 %v276, %v313
    %v329 = vmul.f32 %v276, %v312
    %v330 = vmul.f32 %v276, %v314
    %v339 = vcombine.low %v323, %v324
    %v340 = vcombine.low %v325, %v326
    %v342 = vunpack.c.l.s4 1983009808
    %v343 = vunpack.c.0.s8 %v342
    %v344 = vlaneseq
    %v345 = vshrl.u32 %v344, 7
    %v346 = vsub.s32 %v343, %v345
    %v347 = vrot.slane %v339, %v346
    %v349 = vunpack.c.l.s4 1983009808
    %v350 = vunpack.c.0.s8 %v349
    %v351 = vlaneseq
    %v352 = vshrl.u32 %v351, 7
    %v353 = vsub.s32 %v350, %v352
    %v354 = vrot.slane %v340, %v353
    %v355 = vcombine.low %v347, %v354
    %v356 = vcombine.low %v327, %v328
    %v357 = vcombine.low %v329, %v330
    %v359 = vunpack.c.l.s4 1983009808
    %v360 = vunpack.c.0.s8 %v359
    %v361 = vlaneseq
    %v362 = vshrl.u32 %v361, 7
    %v363 = vsub.s32 %v360, %v362
    %v364 = vrot.slane %v356, %v363
    %v366 = vunpack.c.l.s4 1983009808
    %v367 = vunpack.c.0.s8 %v366
    %v368 = vlaneseq
    %v369 = vshrl.u32 %v368, 7
    %v370 = vsub.s32 %v367, %v369
    %v371 = vrot.slane %v357, %v370
    %v372 = vcombine.low %v364, %v371
    %v375 = vsub.f32 %v210, %v355
    %v376 = vsub.f32 %v211, %v372
    %v377 = vmul.f32 %v375, %v375
    %v378 = vmul.f32 %v376, %v376
    %v381 = vcombine.high %v377, %v377
    %v383 = vunpack.c.l.s4 1983009808
    %v384 = vunpack.c.0.s8 %v383
    %v385 = vlaneseq
    %v386 = vshrl.u32 %v385, 7
    %v387 = vsub.s32 %v384, %v386
    %v388 = vrot.slane %v377, %v387
    %v390 = vunpack.c.l.s4 1983009808
    %v391 = vunpack.c.0.s8 %v390
    %v392 = vlaneseq
    %v393 = vshrl.u32 %v392, 7
    %v394 = vsub.s32 %v391, %v393
    %v395 = vrot.slane %v381, %v394
    %v396 = vcombine.high %v388, %v388
    %v397 = vcombine.high %v395, %v395
    %v398 = vcombine.high %v378, %v378
    %v400 = vunpack.c.l.s4 1983009808
    %v401 = vunpack.c.0.s8 %v400
    %v402 = vlaneseq
    %v403 = vshrl.u32 %v402, 7
    %v404 = vsub.s32 %v401, %v403
    %v405 = vrot.slane %v378, %v404
    %v407 = vunpack.c.l.s4 1983009808
    %v408 = vunpack.c.0.s8 %v407
    %v409 = vlaneseq
    %v410 = vshrl.u32 %v409, 7
    %v411 = vsub.s32 %v408, %v410
    %v412 = vrot.slane %v398, %v411
    %v413 = vcombine.high %v405, %v405
    %v414 = vcombine.high %v412, %v412
    %v423 = vsel %vm94, %v388, 0.0
    %v424 = vsel %vm94, %v396, 0.0
    %v425 = vadd.f32 %v423, %v424
    %v426 = vsel %vm94, %v395, 0.0
    %v427 = vadd.f32 %v425, %v426
    %v428 = vsel %vm94, %v397, 0.0
    %v429 = vadd.f32 %v427, %v428
    %v430 = vsel %vm94, %v405, 0.0
    %v431 = vadd.f32 %v429, %v430
    %v432 = vsel %vm94, %v413, 0.0
    %v433 = vadd.f32 %v431, %v432
    %v434 = vsel %vm94, %v412, 0.0
    %v435 = vadd.f32 %v433, %v434
    %v436 = vsel %vm94, %v414, 0.0
    %v437 = vadd.f32 %v435, %v436
    %438 = vadd.xlane.f32.xlu0 %v437
    %v439 = vpop.xlane.xlu0 %438
    %v440 = vmax.f32 %v439, 1e-30
    %v441 = vrsqrt.pop %v440
    %v444 = vunpack.c.l.s4 269488144
    %v445 = vunpack.c.0.s8 %v444
    %v446 = vlaneseq
    %v447 = vshrl.u32 %v446, 7
    %v448 = vsub.s32 %v445, %v447
    %v449 = vrot.slane %v441, %v448
    %v451 = vmul.f32 %v375, %v449
    %v452 = vmul.f32 %v376, %v449
    %453 = vst [vmem:[%s5] sm:$0xff] %v451
    %454 = vst [vmem:[%s5 + $0x8] sm:$0xff] %v452
    // Predicated region
    $region30: #{branch_1_fun.10} parent=1 // pred_check
      _
    $region31: #{branch_1_fun.10} parent=1 // pred_check_branch
      %456 = sbr.rel (0) target = $region33
    $region32: #{branch_1_fun.10} parent=1 // pred_region
      _
    $region33: #{branch_1_fun.10} parent=1 // pred_fallthru
      _
    // Predicated region
    $region34: #{branch_1_fun.10} parent=1 // pred_check
      _
    $region35: #{branch_1_fun.10} parent=1 // pred_check_branch
      %458 = sbr.rel (0) target = $region37
    $region36: #{branch_1_fun.10} parent=1 // pred_region
      _
    $region37: #{branch_1_fun.10} parent=1 // pred_fallthru
      _
    %459 = vsyncpa [#allocation3], 1
    %460 = vsyncpa [#allocation5], 1

// kernel: branch_1_fun.11
$region0: #{branch_1_fun.11}
  #allocation0 [shape = 'u32[]', space=smem, size = 0x4, offset = 0x4, fixed_abs, tag = 'smem constant byte address 0x4 - core index']
  #allocation1 [shape = 'u32[144,128]{1,0:T(1,128)}', space=vmem, size = 0x12000, scoped, tag = 'internal scratch']
  %s0 = inlined_call_operand.vmem [shape: f32[2,1024], index: 0, kind: input, shape index: {}]
  %s1 = inlined_call_operand.vmem [shape: f32[2,1024], index: 1, kind: input, shape index: {}]
  %s2 = inlined_call_operand.vmem [shape: f32[2,9], index: 2, kind: input, shape index: {}]
  %s3 = inlined_call_operand.vmem [shape: f32[2,3], index: 3, kind: input, shape index: {}]
  %s4 = inlined_call_operand.vmem [shape: f32[2,1024], index: 4, kind: input, shape index: {}]
  %s5 = inlined_call_operand.vmem [shape: f32[2,1024], index: 5, kind: input, shape index: {}]
  %s6 = inlined_call_operand.vmem [shape: f32[2,1024], index: 6, kind: input, shape index: {}]
  %s7 = inlined_call_operand.vmem [shape: f32[2,1024], index: 7, kind: input, shape index: {}]
  %s8 = inlined_call_operand.vmem [shape: f32[2,1024], index: 8, kind: input, shape index: {}]
  %s9 = inlined_call_operand.vmem [shape: f32[2,1024], index: 9, kind: input, shape index: {}]
  %s10 = inlined_call_operand.vmem [shape: f32[2,1], index: 10, kind: output, shape index: {0}]
  %s11 = inlined_call_operand.vmem [shape: f32[2,1024], index: 11, kind: output, shape index: {1}]
  %s12 = inlined_call_operand.hbm [shape: f32[2,9], index: 12, kind: output, shape index: {2}]
  %s13 = inlined_call_operand.hbm [shape: f32[2,3], index: 13, kind: output, shape index: {3}]
  %14 = xla_tuple %s10, %s11, %s12, %s13
  %s15 = sld [smem:[#allocation0]]
  $region74: #{branch_1_fun.11} parent=0
    _
  %s17 = ssub.s32 1, %s15
  %s18 = scalar_select 0, %s17, %s15
  $region1: #{branch_1_fun.11} parent=0
    #allocation2 [shape = 'u8[1024]{0}', space=vmem, size = 0x400, scoped, tag = 'output window, operand 2, single buffered']
    #allocation3 [shape = 's32[1]{0}', space=sflag, size = 0x4, scoped, tag = 'scoped memory for branch_1_fun.11']
    #allocation4 [shape = 'u8[1024]{0}', space=vmem, size = 0x400, scoped, tag = 'output window, operand 3, single buffered']
    #allocation5 [shape = 's32[1]{0}', space=sflag, size = 0x4, scoped, tag = 'scoped memory for branch_1_fun.11']
    %19 = vsyncpa [#allocation3], 0
    %20 = vsyncpa [#allocation5], 0
    // Predicated region
    $region2: #{branch_1_fun.11} parent=1 // pred_check
      _
    $region3: #{branch_1_fun.11} parent=1 // pred_check_branch
      %22 = sbr.rel (0) target = $region5
    $region4: #{branch_1_fun.11} parent=1 // pred_region
      _
    $region5: #{branch_1_fun.11} parent=1 // pred_fallthru
      _
    // Predicated region
    $region6: #{branch_1_fun.11} parent=1 // pred_check
      _
    $region7: #{branch_1_fun.11} parent=1 // pred_check_branch
      %24 = sbr.rel (0) target = $region9
    $region8: #{branch_1_fun.11} parent=1 // pred_region
      _
    $region9: #{branch_1_fun.11} parent=1 // pred_fallthru
      _
    // Predicated region
    $region10: #{branch_1_fun.11} parent=1 // pred_check
      _
    $region11: #{branch_1_fun.11} parent=1 // pred_check_branch
      %26 = sbr.rel (0) target = $region13
    $region12: #{branch_1_fun.11} parent=1 // pred_region
      _
    $region13: #{branch_1_fun.11} parent=1 // pred_fallthru
      _
    // Predicated region
    $region14: #{branch_1_fun.11} parent=1 // pred_check
      _
    $region15: #{branch_1_fun.11} parent=1 // pred_check_branch
      %28 = sbr.rel (0) target = $region17
    $region16: #{branch_1_fun.11} parent=1 // pred_region
      _
    $region17: #{branch_1_fun.11} parent=1 // pred_fallthru
      _
    // Predicated region
    $region18: #{branch_1_fun.11} parent=1 // pred_check
      _
    $region19: #{branch_1_fun.11} parent=1 // pred_check_branch
      %30 = sbr.rel (0) target = $region21
    $region20: #{branch_1_fun.11} parent=1 // pred_region
      _
    $region21: #{branch_1_fun.11} parent=1 // pred_fallthru
      _
    // Predicated region
    $region22: #{branch_1_fun.11} parent=1 // pred_check
      _
    $region23: #{branch_1_fun.11} parent=1 // pred_check_branch
      %32 = sbr.rel (0) target = $region25
    $region24: #{branch_1_fun.11} parent=1 // pred_region
      _
    $region25: #{branch_1_fun.11} parent=1 // pred_fallthru
      _
    // Predicated region
    $region26: #{branch_1_fun.11} parent=1 // pred_check
      _
    $region27: #{branch_1_fun.11} parent=1 // pred_check_branch
      %34 = sbr.rel (0) target = $region29
    $region28: #{branch_1_fun.11} parent=1 // pred_region
      _
    $region29: #{branch_1_fun.11} parent=1 // pred_fallthru
      _
    // Predicated region
    $region30: #{branch_1_fun.11} parent=1 // pred_check
      _
    $region31: #{branch_1_fun.11} parent=1 // pred_check_branch
      %36 = sbr.rel (0) target = $region33
    $region32: #{branch_1_fun.11} parent=1 // pred_region
      _
    $region33: #{branch_1_fun.11} parent=1 // pred_fallthru
      _
    // Predicated region
    $region34: #{branch_1_fun.11} parent=1 // pred_check
      _
    $region35: #{branch_1_fun.11} parent=1 // pred_check_branch
      %38 = sbr.rel (0) target = $region37
    $region36: #{branch_1_fun.11} parent=1 // pred_region
      _
    $region37: #{branch_1_fun.11} parent=1 // pred_fallthru
      _
    // Predicated region
    $region38: #{branch_1_fun.11} parent=1 // pred_check
      _
    $region39: #{branch_1_fun.11} parent=1 // pred_check_branch
      %40 = sbr.rel (0) target = $region41
    $region40: #{branch_1_fun.11} parent=1 // pred_region
      _
    $region41: #{branch_1_fun.11} parent=1 // pred_fallthru
      _
    %v41 = vld [vmem:[%s0] sm:$0xff]
    %v42 = vld [vmem:[%s0 + $0x8] sm:$0xff]
    %v43 = vld [vmem:[%s1] sm:$0xff]
    %v44 = vld [vmem:[%s1 + $0x8] sm:$0xff]
    %v45 = vld [vmem:[%s4] sm:$0xff]
    %v46 = vld [vmem:[%s4 + $0x8] sm:$0xff]
    %v47 = vld [vmem:[%s5] sm:$0xff]
    %v48 = vld [vmem:[%s5 + $0x8] sm:$0xff]
    %v49 = vld [vmem:[%s6] sm:$0xff]
    %v50 = vld [vmem:[%s6 + $0x8] sm:$0xff]
    %v51 = vmul.f32 %v41, %v45
    %v52 = vmul.f32 %v42, %v46
    %v55 = vcombine.high %v51, %v51
    %v57 = vunpack.c.l.s4 1983009808
    %v58 = vunpack.c.0.s8 %v57
    %v59 = vlaneseq
    %v60 = vshrl.u32 %v59, 7
    %v61 = vsub.s32 %v58, %v60
    %v62 = vrot.slane %v51, %v61
    %v64 = vunpack.c.l.s4 1983009808
    %v65 = vunpack.c.0.s8 %v64
    %v66 = vlaneseq
    %v67 = vshrl.u32 %v66, 7
    %v68 = vsub.s32 %v65, %v67
    %v69 = vrot.slane %v55, %v68
    %v70 = vcombine.high %v62, %v62
    %v71 = vcombine.high %v69, %v69
    %v72 = vcombine.high %v52, %v52
    %v74 = vunpack.c.l.s4 1983009808
    %v75 = vunpack.c.0.s8 %v74
    %v76 = vlaneseq
    %v77 = vshrl.u32 %v76, 7
    %v78 = vsub.s32 %v75, %v77
    %v79 = vrot.slane %v52, %v78
    %v81 = vunpack.c.l.s4 1983009808
    %v82 = vunpack.c.0.s8 %v81
    %v83 = vlaneseq
    %v84 = vshrl.u32 %v83, 7
    %v85 = vsub.s32 %v82, %v84
    %v86 = vrot.slane %v72, %v85
    %v87 = vcombine.high %v79, %v79
    %v88 = vcombine.high %v86, %v86
    %vm97 = vcmask 1041408
    %v98 = vsel %vm97, %v62, 0.0
    %v99 = vsel %vm97, %v70, 0.0
    %v100 = vadd.f32 %v98, %v99
    %v101 = vsel %vm97, %v69, 0.0
    %v102 = vadd.f32 %v100, %v101
    %v103 = vsel %vm97, %v71, 0.0
    %v104 = vadd.f32 %v102, %v103
    %v105 = vsel %vm97, %v79, 0.0
    %v106 = vadd.f32 %v104, %v105
    %v107 = vsel %vm97, %v87, 0.0
    %v108 = vadd.f32 %v106, %v107
    %v109 = vsel %vm97, %v86, 0.0
    %v110 = vadd.f32 %v108, %v109
    %v111 = vsel %vm97, %v88, 0.0
    %v112 = vadd.f32 %v110, %v111
    %113 = vadd.xlane.f32.xlu0 %v112
    %v114 = vpop.xlane.xlu0 %113
    %v115 = vmul.f32 %v41, %v47
    %v116 = vmul.f32 %v42, %v48
    %v119 = vcombine.high %v115, %v115
    %v121 = vunpack.c.l.s4 1983009808
    %v122 = vunpack.c.0.s8 %v121
    %v123 = vlaneseq
    %v124 = vshrl.u32 %v123, 7
    %v125 = vsub.s32 %v122, %v124
    %v126 = vrot.slane %v115, %v125
    %v128 = vunpack.c.l.s4 1983009808
    %v129 = vunpack.c.0.s8 %v128
    %v130 = vlaneseq
    %v131 = vshrl.u32 %v130, 7
    %v132 = vsub.s32 %v129, %v131
    %v133 = vrot.slane %v119, %v132
    %v134 = vcombine.high %v126, %v126
    %v135 = vcombine.high %v133, %v133
    %v136 = vcombine.high %v116, %v116
    %v138 = vunpack.c.l.s4 1983009808
    %v139 = vunpack.c.0.s8 %v138
    %v140 = vlaneseq
    %v141 = vshrl.u32 %v140, 7
    %v142 = vsub.s32 %v139, %v141
    %v143 = vrot.slane %v116, %v142
    %v145 = vunpack.c.l.s4 1983009808
    %v146 = vunpack.c.0.s8 %v145
    %v147 = vlaneseq
    %v148 = vshrl.u32 %v147, 7
    %v149 = vsub.s32 %v146, %v148
    %v150 = vrot.slane %v136, %v149
    %v151 = vcombine.high %v143, %v143
    %v152 = vcombine.high %v150, %v150
    %v161 = vsel %vm97, %v126, 0.0
    %v162 = vsel %vm97, %v134, 0.0
    %v163 = vadd.f32 %v161, %v162
    %v164 = vsel %vm97, %v133, 0.0
    %v165 = vadd.f32 %v163, %v164
    %v166 = vsel %vm97, %v135, 0.0
    %v167 = vadd.f32 %v165, %v166
    %v168 = vsel %vm97, %v143, 0.0
    %v169 = vadd.f32 %v167, %v168
    %v170 = vsel %vm97, %v151, 0.0
    %v171 = vadd.f32 %v169, %v170
    %v172 = vsel %vm97, %v150, 0.0
    %v173 = vadd.f32 %v171, %v172
    %v174 = vsel %vm97, %v152, 0.0
    %v175 = vadd.f32 %v173, %v174
    %176 = vadd.xlane.f32.xlu0 %v175
    %v177 = vpop.xlane.xlu0 %176
    %v178 = vmul.f32 %v41, %v49
    %v179 = vmul.f32 %v42, %v50
    %v182 = vcombine.high %v178, %v178
    %v184 = vunpack.c.l.s4 1983009808
    %v185 = vunpack.c.0.s8 %v184
    %v186 = vlaneseq
    %v187 = vshrl.u32 %v186, 7
    %v188 = vsub.s32 %v185, %v187
    %v189 = vrot.slane %v178, %v188
    %v191 = vunpack.c.l.s4 1983009808
    %v192 = vunpack.c.0.s8 %v191
    %v193 = vlaneseq
    %v194 = vshrl.u32 %v193, 7
    %v195 = vsub.s32 %v192, %v194
    %v196 = vrot.slane %v182, %v195
    %v197 = vcombine.high %v189, %v189
    %v198 = vcombine.high %v196, %v196
    %v199 = vcombine.high %v179, %v179
    %v201 = vunpack.c.l.s4 1983009808
    %v202 = vunpack.c.0.s8 %v201
    %v203 = vlaneseq
    %v204 = vshrl.u32 %v203, 7
    %v205 = vsub.s32 %v202, %v204
    %v206 = vrot.slane %v179, %v205
    %v208 = vunpack.c.l.s4 1983009808
    %v209 = vunpack.c.0.s8 %v208
    %v210 = vlaneseq
    %v211 = vshrl.u32 %v210, 7
    %v212 = vsub.s32 %v209, %v211
    %v213 = vrot.slane %v199, %v212
    %v214 = vcombine.high %v206, %v206
    %v215 = vcombine.high %v213, %v213
    %v224 = vsel %vm97, %v189, 0.0
    %v225 = vsel %vm97, %v197, 0.0
    %v226 = vadd.f32 %v224, %v225
    %v227 = vsel %vm97, %v196, 0.0
    %v228 = vadd.f32 %v226, %v227
    %v229 = vsel %vm97, %v198, 0.0
    %v230 = vadd.f32 %v228, %v229
    %v231 = vsel %vm97, %v206, 0.0
    %v232 = vadd.f32 %v230, %v231
    %v233 = vsel %vm97, %v214, 0.0
    %v234 = vadd.f32 %v232, %v233
    %v235 = vsel %vm97, %v213, 0.0
    %v236 = vadd.f32 %v234, %v235
    %v237 = vsel %vm97, %v215, 0.0
    %v238 = vadd.f32 %v236, %v237
    %239 = vadd.xlane.f32.xlu0 %v238
    %v240 = vpop.xlane.xlu0 %239
    %v241 = vmul.f32 %v41, %v43
    %v242 = vmul.f32 %v42, %v44
    %v245 = vcombine.high %v241, %v241
    %v247 = vunpack.c.l.s4 1983009808
    %v248 = vunpack.c.0.s8 %v247
    %v249 = vlaneseq
    %v250 = vshrl.u32 %v249, 7
    %v251 = vsub.s32 %v248, %v250
    %v252 = vrot.slane %v241, %v251
    %v254 = vunpack.c.l.s4 1983009808
    %v255 = vunpack.c.0.s8 %v254
    %v256 = vlaneseq
    %v257 = vshrl.u32 %v256, 7
    %v258 = vsub.s32 %v255, %v257
    %v259 = vrot.slane %v245, %v258
    %v260 = vcombine.high %v252, %v252
    %v261 = vcombine.high %v259, %v259
    %v262 = vcombine.high %v242, %v242
    %v264 = vunpack.c.l.s4 1983009808
    %v265 = vunpack.c.0.s8 %v264
    %v266 = vlaneseq
    %v267 = vshrl.u32 %v266, 7
    %v268 = vsub.s32 %v265, %v267
    %v269 = vrot.slane %v242, %v268
    %v271 = vunpack.c.l.s4 1983009808
    %v272 = vunpack.c.0.s8 %v271
    %v273 = vlaneseq
    %v274 = vshrl.u32 %v273, 7
    %v275 = vsub.s32 %v272, %v274
    %v276 = vrot.slane %v262, %v275
    %v277 = vcombine.high %v269, %v269
    %v278 = vcombine.high %v276, %v276
    %v287 = vsel %vm97, %v252, 0.0
    %v288 = vsel %vm97, %v260, 0.0
    %v289 = vadd.f32 %v287, %v288
    %v290 = vsel %vm97, %v259, 0.0
    %v291 = vadd.f32 %v289, %v290
    %v292 = vsel %vm97, %v261, 0.0
    %v293 = vadd.f32 %v291, %v292
    %v294 = vsel %vm97, %v269, 0.0
    %v295 = vadd.f32 %v293, %v294
    %v296 = vsel %vm97, %v277, 0.0
    %v297 = vadd.f32 %v295, %v296
    %v298 = vsel %vm97, %v276, 0.0
    %v299 = vadd.f32 %v297, %v298
    %v300 = vsel %vm97, %v278, 0.0
    %v301 = vadd.f32 %v299, %v300
    %302 = vadd.xlane.f32.xlu0 %v301
    %v303 = vpop.xlane.xlu0 %302
    %v304 = vld [vmem:[%s2] sm:$0x3]
    %vm305 = vcmask 66560
    %306 = vst.msk [vmem:[#allocation2] sm:$0x3] %vm305, %v304
    %v307 = vld [vmem:[%s3] sm:$0x3]
    %vm308 = vcmask 17408
    %309 = vst.msk [vmem:[#allocation4] sm:$0x3] %vm308, %v307
    %vm310 = vcmask 50224
    %311 = vst.msk [vmem:[#allocation2] sm:$0x3] %vm310, %v114
    %vm312 = vcmask 17424
    %313 = vst.msk [vmem:[#allocation2] sm:$0x3] %vm312, %v114
    %vm314 = vcmask 58424
    %315 = vst.msk [vmem:[#allocation2] sm:$0x3] %vm314, %v177
    %vm316 = vcmask 42024
    %317 = vst.msk [vmem:[#allocation2] sm:$0x3] %vm316, %v177
    %vm318 = vcmask 66624
    %319 = vst.msk [vmem:[#allocation2] sm:$0x3] %vm318, %v240
    %320 = vst.msk [vmem:[#allocation2] sm:$0x3] %vm318, %v240
    %321 = vst.msk [vmem:[#allocation4] sm:$0x3] %vm312, %v303
    %v322 = vld [vmem:[%s2] sm:$0x3]
    %v323 = vld [vmem:[%s3] sm:$0x3]
    %v324 = vrcp.pop %v322
    %v325 = vmul.f32 1.0, %v324
    %327 = vrot.lane.b32.xlu0 %v325, 1
    %v328 = vpop.permute.xlu0 %327
    %v330 = vmul.f32 %v322, %v328
    %v331 = vmul.f32 %v114, %v325
    %v332 = vmul.f32 %v323, %v325
    %334 = vrot.lane.b32.xlu0 %v330, 2
    %v335 = vpop.permute.xlu0 %334
    %v337 = vmul.f32 %v322, %v335
    %339 = vrot.lane.b32.xlu0 %v337, 1
    %v340 = vpop.permute.xlu0 %339
    %v342 = vsub.f32 %v322, %v340
    %344 = vrot.lane.b32.xlu0 %v331, 3
    %v345 = vpop.permute.xlu0 %344
    %v347 = vmul.f32 %v322, %v345
    %v348 = vsub.f32 %v177, %v347
    %350 = vrot.lane.b32.xlu0 %v332, 3
    %v351 = vpop.permute.xlu0 %350
    %v353 = vmul.f32 %v322, %v351
    %355 = vrot.lane.b32.xlu0 %v353, 126
    %v356 = vpop.permute.xlu0 %355
    %v358 = vsub.f32 %v323, %v356
    %v359 = vmul.f32 %v114, %v330
    %v360 = vsub.f32 %v177, %v359
    %v361 = vmul.f32 %v114, %v331
    %v362 = vsub.f32 %v240, %v361
    %v363 = vmul.f32 %v114, %v332
    %v364 = vsub.f32 %v303, %v363
    %v365 = vrcp.pop %v342
    %v366 = vmul.f32 1.0, %v365
    %368 = vrot.lane.b32.xlu0 %v366, 127
    %v369 = vpop.permute.xlu0 %368
    %v371 = vmul.f32 %v348, %v369
    %372 = vrot.lane.b32.xlu0 %v366, 125
    %v373 = vpop.permute.xlu0 %372
    %v375 = vmul.f32 %v358, %v373
    %377 = vrot.lane.b32.xlu0 %v371, 126
    %v378 = vpop.permute.xlu0 %377
    %v380 = vmul.f32 %v330, %v378
    %382 = vrot.lane.b32.xlu0 %v380, 127
    %v383 = vpop.permute.xlu0 %382
    %v385 = vsub.f32 %v331, %v383
    %v386 = vmul.f32 %v330, %v375
    %388 = vrot.lane.b32.xlu0 %v386, 127
    %v389 = vpop.permute.xlu0 %388
    %v391 = vsub.f32 %v332, %v389
    %v392 = vmul.f32 %v360, %v378
    %394 = vrot.lane.b32.xlu0 %v392, 127
    %v395 = vpop.permute.xlu0 %394
    %v397 = vsub.f32 %v362, %v395
    %v398 = vmul.f32 %v360, %v375
    %400 = vrot.lane.b32.xlu0 %v398, 127
    %v401 = vpop.permute.xlu0 %400
    %v403 = vsub.f32 %v364, %v401
    %v404 = vrcp.pop %v397
    %v405 = vmul.f32 1.0, %v404
    %v406 = vmul.f32 %v403, %v405
    %v407 = vmul.f32 %v385, %v406
    %v408 = vsub.f32 %v391, %v407
    %410 = vrot.lane.b32.xlu0 %v406, 3
    %v411 = vpop.permute.xlu0 %410
    %v413 = vmul.f32 %v371, %v411
    %415 = vrot.lane.b32.xlu0 %v413, 126
    %v416 = vpop.permute.xlu0 %415
    %v418 = vsub.f32 %v375, %v416
    %420 = vset.pattern.permute.xlu0 0
    %421 = vperm.xlu0 %420, %v408
    %v422 = vpop.permute.xlu0 %421
    %v426 = vcombine.high %v45, %v45
    %v428 = vunpack.c.l.s4 1983009808
    %v429 = vunpack.c.0.s8 %v428
    %v430 = vlaneseq
    %v431 = vshrl.u32 %v430, 7
    %v432 = vsub.s32 %v429, %v431
    %v433 = vrot.slane %v45, %v432
    %v435 = vunpack.c.l.s4 1983009808
    %v436 = vunpack.c.0.s8 %v435
    %v437 = vlaneseq
    %v438 = vshrl.u32 %v437, 7
    %v439 = vsub.s32 %v436, %v438
    %v440 = vrot.slane %v426, %v439
    %v441 = vcombine.high %v433, %v433
    %v442 = vcombine.high %v440, %v440
    %v443 = vcombine.high %v46, %v46
    %v445 = vunpack.c.l.s4 1983009808
    %v446 = vunpack.c.0.s8 %v445
    %v447 = vlaneseq
    %v448 = vshrl.u32 %v447, 7
    %v449 = vsub.s32 %v446, %v448
    %v450 = vrot.slane %v46, %v449
    %v452 = vunpack.c.l.s4 1983009808
    %v453 = vunpack.c.0.s8 %v452
    %v454 = vlaneseq
    %v455 = vshrl.u32 %v454, 7
    %v456 = vsub.s32 %v453, %v455
    %v457 = vrot.slane %v443, %v456
    %v458 = vcombine.high %v450, %v450
    %v459 = vcombine.high %v457, %v457
    %v468 = vmul.f32 %v422, %v433
    %v469 = vmul.f32 %v422, %v441
    %v470 = vmul.f32 %v422, %v440
    %v471 = vmul.f32 %v422, %v442
    %v472 = vmul.f32 %v422, %v450
    %v473 = vmul.f32 %v422, %v458
    %v474 = vmul.f32 %v422, %v457
    %v475 = vmul.f32 %v422, %v459
    %v476 = vld [vmem:[%s7] sm:$0xff]
    %v477 = vld [vmem:[%s7 + $0x8] sm:$0xff]
    %v480 = vcombine.high %v476, %v476
    %v482 = vunpack.c.l.s4 1983009808
    %v483 = vunpack.c.0.s8 %v482
    %v484 = vlaneseq
    %v485 = vshrl.u32 %v484, 7
    %v486 = vsub.s32 %v483, %v485
    %v487 = vrot.slane %v476, %v486
    %v489 = vunpack.c.l.s4 1983009808
    %v490 = vunpack.c.0.s8 %v489
    %v491 = vlaneseq
    %v492 = vshrl.u32 %v491, 7
    %v493 = vsub.s32 %v490, %v492
    %v494 = vrot.slane %v480, %v493
    %v495 = vcombine.high %v487, %v487
    %v496 = vcombine.high %v494, %v494
    %v497 = vcombine.high %v477, %v477
    %v499 = vunpack.c.l.s4 1983009808
    %v500 = vunpack.c.0.s8 %v499
    %v501 = vlaneseq
    %v502 = vshrl.u32 %v501, 7
    %v503 = vsub.s32 %v500, %v502
    %v504 = vrot.slane %v477, %v503
    %v506 = vunpack.c.l.s4 1983009808
    %v507 = vunpack.c.0.s8 %v506
    %v508 = vlaneseq
    %v509 = vshrl.u32 %v508, 7
    %v510 = vsub.s32 %v507, %v509
    %v511 = vrot.slane %v497, %v510
    %v512 = vcombine.high %v504, %v504
    %v513 = vcombine.high %v511, %v511
    %v522 = vmul.f32 %v422, %v487
    %v523 = vmul.f32 %v422, %v495
    %v524 = vmul.f32 %v422, %v494
    %v525 = vmul.f32 %v422, %v496
    %v526 = vmul.f32 %v422, %v504
    %v527 = vmul.f32 %v422, %v512
    %v528 = vmul.f32 %v422, %v511
    %v529 = vmul.f32 %v422, %v513
    %531 = vset.pattern.permute.xlu0 1
    %532 = vperm.xlu0 %531, %v418
    %v533 = vpop.permute.xlu0 %532
    %v537 = vcombine.high %v47, %v47
    %v539 = vunpack.c.l.s4 1983009808
    %v540 = vunpack.c.0.s8 %v539
    %v541 = vlaneseq
    %v542 = vshrl.u32 %v541, 7
    %v543 = vsub.s32 %v540, %v542
    %v544 = vrot.slane %v47, %v543
    %v546 = vunpack.c.l.s4 1983009808
    %v547 = vunpack.c.0.s8 %v546
    %v548 = vlaneseq
    %v549 = vshrl.u32 %v548, 7
    %v550 = vsub.s32 %v547, %v549
    %v551 = vrot.slane %v537, %v550
    %v552 = vcombine.high %v544, %v544
    %v553 = vcombine.high %v551, %v551
    %v554 = vcombine.high %v48, %v48
    %v556 = vunpack.c.l.s4 1983009808
    %v557 = vunpack.c.0.s8 %v556
    %v558 = vlaneseq
    %v559 = vshrl.u32 %v558, 7
    %v560 = vsub.s32 %v557, %v559
    %v561 = vrot.slane %v48, %v560
    %v563 = vunpack.c.l.s4 1983009808
    %v564 = vunpack.c.0.s8 %v563
    %v565 = vlaneseq
    %v566 = vshrl.u32 %v565, 7
    %v567 = vsub.s32 %v564, %v566
    %v568 = vrot.slane %v554, %v567
    %v569 = vcombine.high %v561, %v561
    %v570 = vcombine.high %v568, %v568
    %v579 = vmul.f32 %v533, %v544
    %v580 = vmul.f32 %v533, %v552
    %v581 = vmul.f32 %v533, %v551
    %v582 = vmul.f32 %v533, %v553
    %v583 = vmul.f32 %v533, %v561
    %v584 = vmul.f32 %v533, %v569
    %v585 = vmul.f32 %v533, %v568
    %v586 = vmul.f32 %v533, %v570
    %v587 = vadd.f32 %v468, %v579
    %v588 = vadd.f32 %v469, %v580
    %v589 = vadd.f32 %v470, %v581
    %v590 = vadd.f32 %v471, %v582
    %v591 = vadd.f32 %v472, %v583
    %v592 = vadd.f32 %v473, %v584
    %v593 = vadd.f32 %v474, %v585
    %v594 = vadd.f32 %v475, %v586
    %v595 = vld [vmem:[%s8] sm:$0xff]
    %v596 = vld [vmem:[%s8 + $0x8] sm:$0xff]
    %v599 = vcombine.high %v595, %v595
    %v601 = vunpack.c.l.s4 1983009808
    %v602 = vunpack.c.0.s8 %v601
    %v603 = vlaneseq
    %v604 = vshrl.u32 %v603, 7
    %v605 = vsub.s32 %v602, %v604
    %v606 = vrot.slane %v595, %v605
    %v608 = vunpack.c.l.s4 1983009808
    %v609 = vunpack.c.0.s8 %v608
    %v610 = vlaneseq
    %v611 = vshrl.u32 %v610, 7
    %v612 = vsub.s32 %v609, %v611
    %v613 = vrot.slane %v599, %v612
    %v614 = vcombine.high %v606, %v606
    %v615 = vcombine.high %v613, %v613
    %v616 = vcombine.high %v596, %v596
    %v618 = vunpack.c.l.s4 1983009808
    %v619 = vunpack.c.0.s8 %v618
    %v620 = vlaneseq
    %v621 = vshrl.u32 %v620, 7
    %v622 = vsub.s32 %v619, %v621
    %v623 = vrot.slane %v596, %v622
    %v625 = vunpack.c.l.s4 1983009808
    %v626 = vunpack.c.0.s8 %v625
    %v627 = vlaneseq
    %v628 = vshrl.u32 %v627, 7
    %v629 = vsub.s32 %v626, %v628
    %v630 = vrot.slane %v616, %v629
    %v631 = vcombine.high %v623, %v623
    %v632 = vcombine.high %v630, %v630
    %v641 = vmul.f32 %v533, %v606
    %v642 = vmul.f32 %v533, %v614
    %v643 = vmul.f32 %v533, %v613
    %v644 = vmul.f32 %v533, %v615
    %v645 = vmul.f32 %v533, %v623
    %v646 = vmul.f32 %v533, %v631
    %v647 = vmul.f32 %v533, %v630
    %v648 = vmul.f32 %v533, %v632
    %v649 = vadd.f32 %v522, %v641
    %v650 = vadd.f32 %v523, %v642
    %v651 = vadd.f32 %v524, %v643
    %v652 = vadd.f32 %v525, %v644
    %v653 = vadd.f32 %v526, %v645
    %v654 = vadd.f32 %v527, %v646
    %v655 = vadd.f32 %v528, %v647
    %v656 = vadd.f32 %v529, %v648
    %657 = vset.pattern.permute.xlu0 0
    %658 = vperm.xlu0 %657, %v406
    %v659 = vpop.permute.xlu0 %658
    %v663 = vcombine.high %v49, %v49
    %v665 = vunpack.c.l.s4 1983009808
    %v666 = vunpack.c.0.s8 %v665
    %v667 = vlaneseq
    %v668 = vshrl.u32 %v667, 7
    %v669 = vsub.s32 %v666, %v668
    %v670 = vrot.slane %v49, %v669
    %v672 = vunpack.c.l.s4 1983009808
    %v673 = vunpack.c.0.s8 %v672
    %v674 = vlaneseq
    %v675 = vshrl.u32 %v674, 7
    %v676 = vsub.s32 %v673, %v675
    %v677 = vrot.slane %v663, %v676
    %v678 = vcombine.high %v670, %v670
    %v679 = vcombine.high %v677, %v677
    %v680 = vcombine.high %v50, %v50
    %v682 = vunpack.c.l.s4 1983009808
    %v683 = vunpack.c.0.s8 %v682
    %v684 = vlaneseq
    %v685 = vshrl.u32 %v684, 7
    %v686 = vsub.s32 %v683, %v685
    %v687 = vrot.slane %v50, %v686
    %v689 = vunpack.c.l.s4 1983009808
    %v690 = vunpack.c.0.s8 %v689
    %v691 = vlaneseq
    %v692 = vshrl.u32 %v691, 7
    %v693 = vsub.s32 %v690, %v692
    %v694 = vrot.slane %v680, %v693
    %v695 = vcombine.high %v687, %v687
    %v696 = vcombine.high %v694, %v694
    %v705 = vmul.f32 %v659, %v670
    %v706 = vmul.f32 %v659, %v678
    %v707 = vmul.f32 %v659, %v677
    %v708 = vmul.f32 %v659, %v679
    %v709 = vmul.f32 %v659, %v687
    %v710 = vmul.f32 %v659, %v695
    %v711 = vmul.f32 %v659, %v694
    %v712 = vmul.f32 %v659, %v696
    %v713 = vadd.f32 %v587, %v705
    %v714 = vadd.f32 %v588, %v706
    %v715 = vadd.f32 %v589, %v707
    %v716 = vadd.f32 %v590, %v708
    %v717 = vadd.f32 %v591, %v709
    %v718 = vadd.f32 %v592, %v710
    %v719 = vadd.f32 %v593, %v711
    %v720 = vadd.f32 %v594, %v712
    %v721 = vld [vmem:[%s9] sm:$0xff]
    %v722 = vld [vmem:[%s9 + $0x8] sm:$0xff]
    %v725 = vcombine.high %v721, %v721
    %v727 = vunpack.c.l.s4 1983009808
    %v728 = vunpack.c.0.s8 %v727
    %v729 = vlaneseq
    %v730 = vshrl.u32 %v729, 7
    %v731 = vsub.s32 %v728, %v730
    %v732 = vrot.slane %v721, %v731
    %v734 = vunpack.c.l.s4 1983009808
    %v735 = vunpack.c.0.s8 %v734
    %v736 = vlaneseq
    %v737 = vshrl.u32 %v736, 7
    %v738 = vsub.s32 %v735, %v737
    %v739 = vrot.slane %v725, %v738
    %v740 = vcombine.high %v732, %v732
    %v741 = vcombine.high %v739, %v739
    %v742 = vcombine.high %v722, %v722
    %v744 = vunpack.c.l.s4 1983009808
    %v745 = vunpack.c.0.s8 %v744
    %v746 = vlaneseq
    %v747 = vshrl.u32 %v746, 7
    %v748 = vsub.s32 %v745, %v747
    %v749 = vrot.slane %v722, %v748
    %v751 = vunpack.c.l.s4 1983009808
    %v752 = vunpack.c.0.s8 %v751
    %v753 = vlaneseq
    %v754 = vshrl.u32 %v753, 7
    %v755 = vsub.s32 %v752, %v754
    %v756 = vrot.slane %v742, %v755
    %v757 = vcombine.high %v749, %v749
    %v758 = vcombine.high %v756, %v756
    %v767 = vmul.f32 %v659, %v732
    %v768 = vmul.f32 %v659, %v740
    %v769 = vmul.f32 %v659, %v739
    %v770 = vmul.f32 %v659, %v741
    %v771 = vmul.f32 %v659, %v749
    %v772 = vmul.f32 %v659, %v757
    %v773 = vmul.f32 %v659, %v756
    %v774 = vmul.f32 %v659, %v758
    %v775 = vadd.f32 %v649, %v767
    %v776 = vadd.f32 %v650, %v768
    %v777 = vadd.f32 %v651, %v769
    %v778 = vadd.f32 %v652, %v770
    %v779 = vadd.f32 %v653, %v771
    %v780 = vadd.f32 %v654, %v772
    %v781 = vadd.f32 %v655, %v773
    %v782 = vadd.f32 %v656, %v774
    %v785 = vcombine.high %v43, %v43
    %v787 = vunpack.c.l.s4 1983009808
    %v788 = vunpack.c.0.s8 %v787
    %v789 = vlaneseq
    %v790 = vshrl.u32 %v789, 7
    %v791 = vsub.s32 %v788, %v790
    %v792 = vrot.slane %v43, %v791
    %v794 = vunpack.c.l.s4 1983009808
    %v795 = vunpack.c.0.s8 %v794
    %v796 = vlaneseq
    %v797 = vshrl.u32 %v796, 7
    %v798 = vsub.s32 %v795, %v797
    %v799 = vrot.slane %v785, %v798
    %v800 = vcombine.high %v792, %v792
    %v801 = vcombine.high %v799, %v799
    %v802 = vcombine.high %v44, %v44
    %v804 = vunpack.c.l.s4 1983009808
    %v805 = vunpack.c.0.s8 %v804
    %v806 = vlaneseq
    %v807 = vshrl.u32 %v806, 7
    %v808 = vsub.s32 %v805, %v807
    %v809 = vrot.slane %v44, %v808
    %v811 = vunpack.c.l.s4 1983009808
    %v812 = vunpack.c.0.s8 %v811
    %v813 = vlaneseq
    %v814 = vshrl.u32 %v813, 7
    %v815 = vsub.s32 %v812, %v814
    %v816 = vrot.slane %v802, %v815
    %v817 = vcombine.high %v809, %v809
    %v818 = vcombine.high %v816, %v816
    %v827 = vsub.f32 %v713, %v792
    %v828 = vsub.f32 %v714, %v800
    %v829 = vsub.f32 %v715, %v799
    %v830 = vsub.f32 %v716, %v801
    %v831 = vsub.f32 %v717, %v809
    %v832 = vsub.f32 %v718, %v817
    %v833 = vsub.f32 %v719, %v816
    %v834 = vsub.f32 %v720, %v818
    %v835 = vmul.f32 %v827, %v827
    %v836 = vmul.f32 %v828, %v828
    %v837 = vmul.f32 %v829, %v829
    %v838 = vmul.f32 %v830, %v830
    %v839 = vmul.f32 %v831, %v831
    %v840 = vmul.f32 %v832, %v832
    %v841 = vmul.f32 %v833, %v833
    %v842 = vmul.f32 %v834, %v834
    %v843 = vsel %vm97, %v835, 0.0
    %v844 = vsel %vm97, %v836, 0.0
    %v845 = vadd.f32 %v843, %v844
    %v846 = vsel %vm97, %v837, 0.0
    %v847 = vadd.f32 %v845, %v846
    %v848 = vsel %vm97, %v838, 0.0
    %v849 = vadd.f32 %v847, %v848
    %v850 = vsel %vm97, %v839, 0.0
    %v851 = vadd.f32 %v849, %v850
    %v852 = vsel %vm97, %v840, 0.0
    %v853 = vadd.f32 %v851, %v852
    %v854 = vsel %vm97, %v841, 0.0
    %v855 = vadd.f32 %v853, %v854
    %v856 = vsel %vm97, %v842, 0.0
    %v857 = vadd.f32 %v855, %v856
    %858 = vadd.xlane.f32.xlu0 %v857
    %v859 = vpop.xlane.xlu0 %858
    %v860 = vmul.f32 %v43, %v43
    %v861 = vmul.f32 %v44, %v44
    %v864 = vcombine.high %v860, %v860
    %v866 = vunpack.c.l.s4 1983009808
    %v867 = vunpack.c.0.s8 %v866
    %v868 = vlaneseq
    %v869 = vshrl.u32 %v868, 7
    %v870 = vsub.s32 %v867, %v869
    %v871 = vrot.slane %v860, %v870
    %v873 = vunpack.c.l.s4 1983009808
    %v874 = vunpack.c.0.s8 %v873
    %v875 = vlaneseq
    %v876 = vshrl.u32 %v875, 7
    %v877 = vsub.s32 %v874, %v876
    %v878 = vrot.slane %v864, %v877
    %v879 = vcombine.high %v871, %v871
    %v880 = vcombine.high %v878, %v878
    %v881 = vcombine.high %v861, %v861
    %v883 = vunpack.c.l.s4 1983009808
    %v884 = vunpack.c.0.s8 %v883
    %v885 = vlaneseq
    %v886 = vshrl.u32 %v885, 7
    %v887 = vsub.s32 %v884, %v886
    %v888 = vrot.slane %v861, %v887
    %v890 = vunpack.c.l.s4 1983009808
    %v891 = vunpack.c.0.s8 %v890
    %v892 = vlaneseq
    %v893 = vshrl.u32 %v892, 7
    %v894 = vsub.s32 %v891, %v893
    %v895 = vrot.slane %v881, %v894
    %v896 = vcombine.high %v888, %v888
    %v897 = vcombine.high %v895, %v895
    %v906 = vsel %vm97, %v871, 0.0
    %v907 = vsel %vm97, %v879, 0.0
    %v908 = vadd.f32 %v906, %v907
    %v909 = vsel %vm97, %v878, 0.0
    %v910 = vadd.f32 %v908, %v909
    %v911 = vsel %vm97, %v880, 0.0
    %v912 = vadd.f32 %v910, %v911
    %v913 = vsel %vm97, %v888, 0.0
    %v914 = vadd.f32 %v912, %v913
    %v915 = vsel %vm97, %v896, 0.0
    %v916 = vadd.f32 %v914, %v915
    %v917 = vsel %vm97, %v895, 0.0
    %v918 = vadd.f32 %v916, %v917
    %v919 = vsel %vm97, %v897, 0.0
    %v920 = vadd.f32 %v918, %v919
    %921 = vadd.xlane.f32.xlu0 %v920
    %v922 = vpop.xlane.xlu0 %921
    %v923 = vrsqrt.pop %v859
    %v924 = vmul.f32 %v859, %v923
    %vm925 = vcmp.eq.f32.partialorder %v859, inf
    %v926 = vsel %vm925, %v859, %v924
    %vm927 = vcmp.eq.f32.partialorder %v859, 0.0
    %v928 = vand.u32 %v859, 2147483648
    %v929 = vsel %vm927, %v928, %v926
    %v930 = vrsqrt.pop %v922
    %v931 = vmul.f32 %v929, %v930
    %vm932 = vcmask 1024
    %933 = vst.msk [vmem:[%s10] sm:$0x3] %vm932, %v931
    %v934 = vsub.f32 0.0, %v775
    %v935 = vsub.f32 0.0, %v776
    %v936 = vsub.f32 0.0, %v777
    %v937 = vsub.f32 0.0, %v778
    %v938 = vsub.f32 0.0, %v779
    %v939 = vsub.f32 0.0, %v780
    %v940 = vsub.f32 0.0, %v781
    %v941 = vsub.f32 0.0, %v782
    %v950 = vcombine.low %v934, %v935
    %v951 = vcombine.low %v936, %v937
    %v953 = vunpack.c.l.s4 1983009808
    %v954 = vunpack.c.0.s8 %v953
    %v955 = vlaneseq
    %v956 = vshrl.u32 %v955, 7
    %v957 = vsub.s32 %v954, %v956
    %v958 = vrot.slane %v950, %v957
    %v960 = vunpack.c.l.s4 1983009808
    %v961 = vunpack.c.0.s8 %v960
    %v962 = vlaneseq
    %v963 = vshrl.u32 %v962, 7
    %v964 = vsub.s32 %v961, %v963
    %v965 = vrot.slane %v951, %v964
    %v966 = vcombine.low %v958, %v965
    %v967 = vcombine.low %v938, %v939
    %v968 = vcombine.low %v940, %v941
    %v970 = vunpack.c.l.s4 1983009808
    %v971 = vunpack.c.0.s8 %v970
    %v972 = vlaneseq
    %v973 = vshrl.u32 %v972, 7
    %v974 = vsub.s32 %v971, %v973
    %v975 = vrot.slane %v967, %v974
    %v977 = vunpack.c.l.s4 1983009808
    %v978 = vunpack.c.0.s8 %v977
    %v979 = vlaneseq
    %v980 = vshrl.u32 %v979, 7
    %v981 = vsub.s32 %v978, %v980
    %v982 = vrot.slane %v968, %v981
    %v983 = vcombine.low %v975, %v982
    %986 = vst [vmem:[%s11] sm:$0xff] %v966
    %987 = vst [vmem:[%s11 + $0x8] sm:$0xff] %v983
    // Predicated region
    $region42: #{branch_1_fun.11} parent=1 // pred_check
      _
    $region43: #{branch_1_fun.11} parent=1 // pred_check_branch
      %989 = sbr.rel (0) target = $region45
    $region44: #{branch_1_fun.11} parent=1 // pred_region
      _
    $region45: #{branch_1_fun.11} parent=1 // pred_fallthru
      _
    // Predicated region
    $region46: #{branch_1_fun.11} parent=1 // pred_check
      _
    $region47: #{branch_1_fun.11} parent=1 // pred_check_branch
      %991 = sbr.rel (0) target = $region49
    $region48: #{branch_1_fun.11} parent=1 // pred_region
      _
    $region49: #{branch_1_fun.11} parent=1 // pred_fallthru
      _
    // Predicated region
    $region50: #{branch_1_fun.11} parent=1 // pred_check
      _
    $region51: #{branch_1_fun.11} parent=1 // pred_check_branch
      %993 = sbr.rel (0) target = $region53
    $region52: #{branch_1_fun.11} parent=1 // pred_region
      %s995 = ssub.s32 32, 32
      %996 = vsyncadd [#allocation3], %s995
      %s998 = sshll.u32 [#allocation2], 4
      %s999 = int_to_ptr.vmem [resolvable:$true] %s998
      %1001 = dma.vmem_to_hbm [thread:$0]  %s999, 32, %s12, [#allocation3]
    $region53: #{branch_1_fun.11} parent=1 // pred_fallthru
      _
    // Predicated region
    $region54: #{branch_1_fun.11} parent=1 // pred_check
      _
    $region55: #{branch_1_fun.11} parent=1 // pred_check_branch
      %1003 = sbr.rel (0) target = $region57
    $region56: #{branch_1_fun.11} parent=1 // pred_region
      %s1005 = ssub.s32 32, 32
      %1006 = vsyncadd [#allocation5], %s1005
      %s1008 = sshll.u32 [#allocation4], 4
      %s1009 = int_to_ptr.vmem [resolvable:$true] %s1008
      %1011 = dma.vmem_to_hbm [thread:$0]  %s1009, 32, %s13, [#allocation5]
    $region57: #{branch_1_fun.11} parent=1 // pred_fallthru
      _
    // Predicated region
    $region58: #{branch_1_fun.11} parent=1 // pred_check
      _
    $region59: #{branch_1_fun.11} parent=1 // pred_check_branch
      %1013 = sbr.rel (0) target = $region61
    $region60: #{branch_1_fun.11} parent=1 // pred_region
      _
    $region61: #{branch_1_fun.11} parent=1 // pred_fallthru
      _
    // Predicated region
    $region62: #{branch_1_fun.11} parent=1 // pred_check
      _
    $region63: #{branch_1_fun.11} parent=1 // pred_check_branch
      %1015 = sbr.rel (0) target = $region65
    $region64: #{branch_1_fun.11} parent=1 // pred_region
      _
    $region65: #{branch_1_fun.11} parent=1 // pred_fallthru
      _
    // Predicated region
    $region66: #{branch_1_fun.11} parent=1 // pred_check
      _
    $region67: #{branch_1_fun.11} parent=1 // pred_check_branch
      %1017 = sbr.rel (0) target = $region69
    $region68: #{branch_1_fun.11} parent=1 // pred_region
      %1018 = dma.done [#allocation3], 32
    $region69: #{branch_1_fun.11} parent=1 // pred_fallthru
      _
    // Predicated region
    $region70: #{branch_1_fun.11} parent=1 // pred_check
      _
    $region71: #{branch_1_fun.11} parent=1 // pred_check_branch
      %1020 = sbr.rel (0) target = $region73
    $region72: #{branch_1_fun.11} parent=1 // pred_region
      %1021 = dma.done [#allocation5], 32
    $region73: #{branch_1_fun.11} parent=1 // pred_fallthru
      _
    %1022 = vsyncpa [#allocation3], 1
    %1023 = vsyncpa [#allocation5], 1

</llo_original>
